<compile_context>
chip_gen: v7x
topology: tpu7x:2x2x1
jax: 0.10.0
libtpu: 0.0.40
codegen_flags: <defaults>
</compile_context>

<pallas_src>
import jax
import jax.numpy as jnp
from jax import lax
from jax.experimental import pallas as pl
from jax.experimental.pallas import tpu as pltpu  # noqa: F401  (TPU backend module)

# ARG-equivalents (small, deterministic synthetic config)
CONTROLLER_HID = 32        # ARG.controller_hid
CONTROLLER_BATCH = 8       # ARG.controller_batch_size
NUM_BLOCKS = 3             # ARG.num_blocks
NUM_STEPS = 2 * NUM_BLOCKS - 1

HP = 128                   # hidden width padded to one full lane group
LPAD = 128                 # padded logit / one-hot lane width


def _n_valid_schedule():
    """Number of valid logits per controller step (static module structure)."""
    nv = [4]                       # step 0: forward_activation(block 0) -> 4 activations
    for blk in range(1, NUM_BLOCKS):
        nv.append(blk)             # forward_block(blk)      -> choose among `blk` blocks
        nv.append(4)               # forward_activation(blk) -> 4 activations
    return tuple(nv)


N_VALID = _n_valid_schedule()


def _controller_fused_kernel(w_ref, dec_ref, b_ref, gum_ref,
                             act_out, logp_out, ent_out):
    """All controller steps in one invocation: for each step
    embed(prev action) -> LSTMCell -> decode -> softmax/entropy -> Gumbel-max sample.
    The embedding is pre-folded into the gate weight, so one MXU dot per step
    computes all four gates from [onehot | h]."""
    B = b_ref.shape[0]
    lane = lax.broadcasted_iota(jnp.int32, (B, LPAD), 1)

    # carried state (initial_hidden / initial_cell / initial_input == 0)
    h = jnp.zeros((B, HP), jnp.float32)
    c = jnp.zeros((B, HP), jnp.float32)
    onehot = jnp.zeros((B, LPAD), jnp.bfloat16)   # zero one-hot == zero initial input

    for s in range(NUM_STEPS):                    # fully unrolled, static indices
        # ---- fused embed + LSTMCell gates: [onehot | h] @ W_step[s] + b ----
        xh = jnp.concatenate([onehot, h.astype(jnp.bfloat16)], axis=-1)   # (B, 256) bf16
        gates = jnp.dot(xh, w_ref[s],
                        preferred_element_type=jnp.float32) + b_ref[...]  # (B, 4*HP) f32
        i_g = jax.nn.sigmoid(gates[:, 0 * HP:1 * HP])
        f_g = jax.nn.sigmoid(gates[:, 1 * HP:2 * HP])
        g_g = jnp.tanh(gates[:, 2 * HP:3 * HP])
        o_g = jax.nn.sigmoid(gates[:, 3 * HP:4 * HP])
        c = f_g * c + i_g * g_g                   # padded lanes stay exactly 0
        h = o_g * jnp.tanh(c)

        # ---- decoder (Linear, no bias) -> masked logits ----
        logits = jnp.dot(h.astype(jnp.bfloat16), dec_ref[s],
                         preferred_element_type=jnp.float32)              # (B, LPAD)
        valid = lane < N_VALID[s]
        masked = jnp.where(valid, logits, jnp.float32(-1e30))   # finite mask: no 0*inf NaN

        # ---- softmax / log_softmax / entropy (exact, f32) ----
        m = jnp.max(masked, axis=-1, keepdims=True)
        e = jnp.exp(masked - m)
        ssum = jnp.sum(e, axis=-1, keepdims=True)
        logp = (masked - m) - jnp.log(ssum)
        p = e / ssum
        ent = -jnp.sum(jnp.where(valid, p * logp, 0.0), axis=-1, keepdims=True)  # (B, 1)

        # ---- categorical sample (Gumbel-max == multinomial over softmax) ----
        perturbed = masked + gum_ref[s]           # invalid lanes stay ~-1e30
        pmax = jnp.max(perturbed, axis=-1, keepdims=True)
        act = jnp.min(jnp.where(perturbed == pmax, lane, jnp.int32(LPAD)),
                      axis=-1, keepdims=True)     # (B, 1) int32, always a valid lane

        hit = lane == act
        onehot = hit.astype(jnp.bfloat16)         # carry to next step (bf16, exact 0/1)
        sel_logp = jnp.sum(jnp.where(hit, logp, 0.0), axis=-1, keepdims=True)     # (B, 1)

        # ---- tiny per-step stores (written once; no lane broadcast) ----
        act_out[s] = act
        logp_out[s] = sel_logp
        ent_out[s] = ent


@jax.jit
def _forward_impl(w_step, dec_stack, b_bcast, gumbel):
    """Single grid-less pallas_call: everything (<2 MiB) resident in VMEM."""
    B = CONTROLLER_BATCH
    acts, logps, ents = pl.pallas_call(
        _controller_fused_kernel,
        out_shape=(
            jax.ShapeDtypeStruct((NUM_STEPS, B, 1), jnp.int32),    # actions
            jax.ShapeDtypeStruct((NUM_STEPS, B, 1), jnp.float32),  # selected log-probs
            jax.ShapeDtypeStruct((NUM_STEPS, B, 1), jnp.float32),  # entropies
        ),
    )(w_step, dec_stack, b_bcast, gumbel)
    return acts[..., 0], logps[..., 0], ents[..., 0]


def init_params(key):
    """Deterministic uniform(-0.1, 0.1) init matching _reset_parameters, packed once
    into the padded / stacked / embedding-folded layout consumed by the kernel."""
    H = CONTROLLER_HID
    rng = 0.1

    def u(k, shape):
        return jax.random.uniform(k, shape, jnp.float32, -rng, rng)

    keys = iter(jax.random.split(key, 5 + 4 * (NUM_BLOCKS - 1)))

    # LSTMCell weights stored transposed: gates = x @ w_ih + h @ w_hh + (b_ih + b_hh)
    w_ih = u(next(keys), (H, 4 * H))
    w_hh = u(next(keys), (H, 4 * H))
    bias = u(next(keys), (1, 4 * H)) + u(next(keys), (1, 4 * H))

    # Pad so each gate's columns are 128-lane aligned (HP lanes per gate).
    wx_pad = jnp.zeros((HP, 4 * HP), jnp.float32)
    wh_pad = jnp.zeros((HP, 4 * HP), jnp.float32)
    b_pad = jnp.zeros((1, 4 * HP), jnp.float32)
    for k in range(4):
        wx_pad = wx_pad.at[0:H, k * HP:k * HP + H].set(w_ih[:, k * H:(k + 1) * H])
        wh_pad = wh_pad.at[0:H, k * HP:k * HP + H].set(w_hh[:, k * H:(k + 1) * H])
        b_pad = b_pad.at[:, k * HP:k * HP + H].set(bias[:, k * H:(k + 1) * H])
    b_bcast = jnp.broadcast_to(b_pad, (CONTROLLER_BATCH, 4 * HP))   # pre-broadcast bias

    def pad_dec(w):   # Linear(H, L, bias=False) stored (H, L) -> (HP, LPAD)
        return jnp.zeros((HP, LPAD), jnp.float32).at[:H, :w.shape[1]].set(w)

    def pad_enc(e):   # Embedding(R, H) table (R, H) -> (LPAD, HP), row = prev action
        return jnp.zeros((LPAD, HP), jnp.float32).at[:e.shape[0], :H].set(e)

    # step 0: forward_activation(block 0) -> embedded = raw (zero) input
    enc_steps = [jnp.zeros((LPAD, HP), jnp.float32)]
    dec_steps = [pad_dec(u(next(keys), (H, 4)))]          # decoders_activation[0]
    for blk in range(1, NUM_BLOCKS):
        enc_act = u(next(keys), (4, H))                   # encoders_activation[blk]
        enc_blk = u(next(keys), (blk, H))                 # encoders_block[blk]
        dec_act = u(next(keys), (H, 4))                   # decoders_activation[blk]
        dec_blk = u(next(keys), (H, blk))                 # decoders_block[blk]
        # forward_block(blk): embed prev activation action, decode a block index
        enc_steps.append(pad_enc(enc_act)); dec_steps.append(pad_dec(dec_blk))
        # forward_activation(blk): embed chosen block index, decode an activation
        enc_steps.append(pad_enc(enc_blk)); dec_steps.append(pad_dec(dec_act))

    # Fold the embedding into the gate matmul: W_step[s] = [[enc_pad[s] @ Wx], [Wh]]
    w_step = jnp.stack(
        [jnp.concatenate([enc @ wx_pad, wh_pad], axis=0) for enc in enc_steps])

    return {
        "w_step": w_step.astype(jnp.bfloat16),                    # (S, LPAD+HP, 4*HP)
        "dec_stack": jnp.stack(dec_steps).astype(jnp.bfloat16),   # (S, HP, LPAD)
        "b_bcast": b_bcast,                                       # (B, 4*HP) f32
        "n_valid": N_VALID,
    }


def controller_forward(params, key):
    """Reproduces ControllerLSTM.forward (the input is ignored, as in the module)."""
    # TODO(synk): torch.multinomial's RNG stream is not reproducible in JAX;
    # sampling uses Gumbel-max with JAX-generated Gumbel noise instead.
    gumbel = jax.random.gumbel(key, (NUM_STEPS, CONTROLLER_BATCH, LPAD), jnp.float32)
    acts, sel_logps, ents = _forward_impl(
        params["w_step"], params["dec_stack"], params["b_bcast"], gumbel)
    dag_ops = [acts[s] for s in range(NUM_STEPS)]
    entropy_history = [ents[s] for s in range(NUM_STEPS)]
    log_probability_history = [sel_logps[s] for s in range(NUM_STEPS)]
    assert len(dag_ops) == 2 * NUM_BLOCKS - 1
    assert len(dag_ops) == len(entropy_history) == len(log_probability_history)
    return dag_ops, entropy_history, log_probability_history


if __name__ == "__main__":
    root_key = jax.random.PRNGKey(0)
    param_key, sample_key = jax.random.split(root_key)

    params = init_params(param_key)
    dag_ops, entropies, log_probs = controller_forward(params, sample_key)

    dag_ops = [jax.block_until_ready(a) for a in dag_ops]
    entropies = [jax.block_until_ready(e) for e in entropies]
    log_probs = [jax.block_until_ready(lp) for lp in log_probs]

    # light sanity checks
    assert len(dag_ops) == 2 * NUM_BLOCKS - 1
    for s, (a, e, lp) in enumerate(zip(dag_ops, entropies, log_probs)):
        assert a.shape == (CONTROLLER_BATCH,)
        assert e.shape == (CONTROLLER_BATCH,)
        assert lp.shape == (CONTROLLER_BATCH,)
        assert bool(jnp.all((a >= 0) & (a < N_VALID[s])))
        assert bool(jnp.all(jnp.isfinite(e))) and bool(jnp.all(e >= -1e-5))
        assert bool(jnp.all(jnp.isfinite(lp))) and bool(jnp.all(lp <= 1e-5))

    print("KERNEL_OK")
</pallas_src>

<mosaic_0001>
module attributes {stable_mosaic.version = 11 : i64} {
  func.func @_controller_fused_kernel(%arg0: memref<5x256x512xbf16, #tpu.memory_space<vmem>>, %arg1: memref<5x128x128xbf16, #tpu.memory_space<vmem>>, %arg2: memref<8x512xf32, #tpu.memory_space<vmem>>, %arg3: memref<5x8x128xf32, #tpu.memory_space<vmem>>, %arg4: memref<5x8x1xi32, #tpu.memory_space<vmem>>, %arg5: memref<5x8x1xf32, #tpu.memory_space<vmem>>, %arg6: memref<5x8x1xf32, #tpu.memory_space<vmem>>) attributes {dimension_semantics = [], scalar_prefetch = 0 : i64, scratch_operands = 0 : i64, tpu.core_type = #tpu.core_type<tc>} {
    %0 = tpu.iota {dimensions = array<i32: 1>} : vector<8x128xi32>
    %cst = arith.constant 0.000000e+00 : f32
    %1 = vector.broadcast %cst : f32 to vector<8x128xf32>
    %cst_0 = arith.constant 0.000000e+00 : f32
    %2 = vector.broadcast %cst_0 : f32 to vector<8x128xf32>
    %cst_1 = arith.constant 0.000000e+00 : bf16
    %3 = vector.broadcast %cst_1 : bf16 to vector<8x128xbf16>
    %4 = arith.truncf %1 : vector<8x128xf32> to vector<8x128xbf16>
    %5 = tpu.concatenate %3, %4 in 1 : vector<8x128xbf16>, vector<8x128xbf16> -> vector<8x256xbf16>
    %c0 = arith.constant 0 : index
    %c0_2 = arith.constant 0 : index
    %c0_3 = arith.constant 0 : index
    %6 = vector.load %arg0[%c0, %c0_2, %c0_3] : memref<5x256x512xbf16, #tpu.memory_space<vmem>>, vector<1x256x512xbf16>
    %7 = vector.shape_cast %6 : vector<1x256x512xbf16> to vector<256x512xbf16>
    %cst_4 = arith.constant dense<0.000000e+00> : vector<8x512xf32>
    %8 = tpu.matmul %5, %7, %cst_4 {dimension_numbers = #tpu.dot_dimension_numbers<[1], [0], [0], [1], [0, 0, 1, 1], [], []>} : vector<8x256xbf16>, vector<256x512xbf16>, vector<8x512xf32> -> vector<8x512xf32>
    %c0_5 = arith.constant 0 : index
    %c0_6 = arith.constant 0 : index
    %9 = vector.load %arg2[%c0_5, %c0_6] : memref<8x512xf32, #tpu.memory_space<vmem>>, vector<8x512xf32>
    %10 = arith.addf %8, %9 : vector<8x512xf32>
    %11 = vector.extract_strided_slice %10 {offsets = [0, 0], sizes = [8, 128], strides = [1, 1]} : vector<8x512xf32> to vector<8x128xf32>
    %12 = arith.negf %11 : vector<8x128xf32>
    %13 = math.exp %12 : vector<8x128xf32>
    %cst_7 = arith.constant 1.000000e+00 : f32
    %14 = vector.broadcast %cst_7 : f32 to vector<8x128xf32>
    %15 = arith.addf %14, %13 : vector<8x128xf32>
    %16 = arith.divf %14, %15 : vector<8x128xf32>
    %17 = vector.extract_strided_slice %10 {offsets = [0, 128], sizes = [8, 128], strides = [1, 1]} : vector<8x512xf32> to vector<8x128xf32>
    %18 = arith.negf %17 : vector<8x128xf32>
    %19 = math.exp %18 : vector<8x128xf32>
    %cst_8 = arith.constant 1.000000e+00 : f32
    %20 = vector.broadcast %cst_8 : f32 to vector<8x128xf32>
    %21 = arith.addf %20, %19 : vector<8x128xf32>
    %22 = arith.divf %20, %21 : vector<8x128xf32>
    %23 = vector.extract_strided_slice %10 {offsets = [0, 256], sizes = [8, 128], strides = [1, 1]} : vector<8x512xf32> to vector<8x128xf32>
    %24 = math.tanh %23 : vector<8x128xf32>
    %25 = vector.extract_strided_slice %10 {offsets = [0, 384], sizes = [8, 128], strides = [1, 1]} : vector<8x512xf32> to vector<8x128xf32>
    %26 = arith.negf %25 : vector<8x128xf32>
    %27 = math.exp %26 : vector<8x128xf32>
    %cst_9 = arith.constant 1.000000e+00 : f32
    %28 = vector.broadcast %cst_9 : f32 to vector<8x128xf32>
    %29 = arith.addf %28, %27 : vector<8x128xf32>
    %30 = arith.divf %28, %29 : vector<8x128xf32>
    %31 = arith.mulf %22, %2 : vector<8x128xf32>
    %32 = arith.mulf %16, %24 : vector<8x128xf32>
    %33 = arith.addf %31, %32 : vector<8x128xf32>
    %34 = math.tanh %33 : vector<8x128xf32>
    %35 = arith.mulf %30, %34 : vector<8x128xf32>
    %36 = arith.truncf %35 : vector<8x128xf32> to vector<8x128xbf16>
    %c0_10 = arith.constant 0 : index
    %c0_11 = arith.constant 0 : index
    %c0_12 = arith.constant 0 : index
    %37 = vector.load %arg1[%c0_10, %c0_11, %c0_12] : memref<5x128x128xbf16, #tpu.memory_space<vmem>>, vector<1x128x128xbf16>
    %38 = vector.shape_cast %37 : vector<1x128x128xbf16> to vector<128x128xbf16>
    %cst_13 = arith.constant dense<0.000000e+00> : vector<8x128xf32>
    %39 = tpu.matmul %36, %38, %cst_13 {dimension_numbers = #tpu.dot_dimension_numbers<[1], [0], [0], [1], [0, 0, 1, 1], [], []>} : vector<8x128xbf16>, vector<128x128xbf16>, vector<8x128xf32> -> vector<8x128xf32>
    %c4_i32 = arith.constant 4 : i32
    %40 = vector.broadcast %c4_i32 : i32 to vector<8x128xi32>
    %41 = arith.cmpi slt, %0, %40 : vector<8x128xi32>
    %cst_14 = arith.constant -1.000000e+30 : f32
    %42 = vector.broadcast %cst_14 : f32 to vector<8x128xf32>
    %43 = arith.select %41, %39, %42 : vector<8x128xi1>, vector<8x128xf32>
    %cst_15 = arith.constant dense<0xFF800000> : vector<8xf32>
    %44 = vector.multi_reduction <maximumf>, %43, %cst_15 [1] : vector<8x128xf32> to vector<8xf32>
    %45 = vector.shape_cast %44 : vector<8xf32> to vector<8x1xf32>
    %46 = vector.broadcast %45 : vector<8x1xf32> to vector<8x128xf32>
    %47 = arith.subf %43, %46 : vector<8x128xf32>
    %48 = math.exp %47 : vector<8x128xf32>
    %cst_16 = arith.constant dense<0.000000e+00> : vector<8xf32>
    %49 = vector.multi_reduction <add>, %48, %cst_16 [1] : vector<8x128xf32> to vector<8xf32>
    %50 = vector.shape_cast %49 : vector<8xf32> to vector<8x1xf32>
    %51 = vector.broadcast %45 : vector<8x1xf32> to vector<8x128xf32>
    %52 = arith.subf %43, %51 : vector<8x128xf32>
    %53 = math.log %50 : vector<8x1xf32>
    %54 = vector.broadcast %53 : vector<8x1xf32> to vector<8x128xf32>
    %55 = arith.subf %52, %54 : vector<8x128xf32>
    %56 = vector.broadcast %50 : vector<8x1xf32> to vector<8x128xf32>
    %57 = arith.divf %48, %56 : vector<8x128xf32>
    %58 = arith.mulf %57, %55 : vector<8x128xf32>
    %cst_17 = arith.constant 0.000000e+00 : f32
    %59 = vector.broadcast %cst_17 : f32 to vector<8x128xf32>
    %60 = arith.select %41, %58, %59 : vector<8x128xi1>, vector<8x128xf32>
    %cst_18 = arith.constant dense<0.000000e+00> : vector<8xf32>
    %61 = vector.multi_reduction <add>, %60, %cst_18 [1] : vector<8x128xf32> to vector<8xf32>
    %62 = vector.shape_cast %61 : vector<8xf32> to vector<8x1xf32>
    %cst_19 = arith.constant 0.000000e+00 : f32
    %63 = vector.broadcast %cst_19 : f32 to vector<8x1xf32>
    %64 = arith.subf %63, %62 : vector<8x1xf32>
    %c0_20 = arith.constant 0 : index
    %c0_21 = arith.constant 0 : index
    %c0_22 = arith.constant 0 : index
    %65 = vector.load %arg3[%c0_20, %c0_21, %c0_22] : memref<5x8x128xf32, #tpu.memory_space<vmem>>, vector<1x8x128xf32>
    %66 = vector.shape_cast %65 : vector<1x8x128xf32> to vector<8x128xf32>
    %67 = arith.addf %43, %66 : vector<8x128xf32>
    %cst_23 = arith.constant dense<0xFF800000> : vector<8xf32>
    %68 = vector.multi_reduction <maximumf>, %67, %cst_23 [1] : vector<8x128xf32> to vector<8xf32>
    %69 = vector.shape_cast %68 : vector<8xf32> to vector<8x1xf32>
    %70 = vector.broadcast %69 : vector<8x1xf32> to vector<8x128xf32>
    %71 = arith.cmpf oeq, %67, %70 : vector<8x128xf32>
    %c128_i32 = arith.constant 128 : i32
    %72 = vector.broadcast %c128_i32 : i32 to vector<8x128xi32>
    %73 = arith.select %71, %0, %72 : vector<8x128xi1>, vector<8x128xi32>
    %cst_24 = arith.constant dense<2147483647> : vector<8xi32>
    %74 = vector.multi_reduction <minsi>, %73, %cst_24 [1] : vector<8x128xi32> to vector<8xi32>
    %75 = vector.shape_cast %74 : vector<8xi32> to vector<8x1xi32>
    %76 = vector.broadcast %75 : vector<8x1xi32> to vector<8x128xi32>
    %77 = arith.cmpi eq, %0, %76 : vector<8x128xi32>
    %78 = arith.extui %77 : vector<8x128xi1> to vector<8x128xi32>
    %79 = arith.sitofp %78 : vector<8x128xi32> to vector<8x128xf32>
    %80 = arith.truncf %79 : vector<8x128xf32> to vector<8x128xbf16>
    %cst_25 = arith.constant 0.000000e+00 : f32
    %81 = vector.broadcast %cst_25 : f32 to vector<8x128xf32>
    %82 = arith.select %77, %55, %81 : vector<8x128xi1>, vector<8x128xf32>
    %cst_26 = arith.constant dense<0.000000e+00> : vector<8xf32>
    %83 = vector.multi_reduction <add>, %82, %cst_26 [1] : vector<8x128xf32> to vector<8xf32>
    %84 = vector.shape_cast %83 : vector<8xf32> to vector<8x1xf32>
    %c0_27 = arith.constant 0 : index
    %c0_28 = arith.constant 0 : index
    %c0_29 = arith.constant 0 : index
    %85 = vector.load %arg4[%c0_27, %c0_28, %c0_29] : memref<5x8x1xi32, #tpu.memory_space<vmem>>, vector<1x8x1xi32>
    %86 = vector.shape_cast %85 : vector<1x8x1xi32> to vector<8x1xi32>
    %87 = vector.shape_cast %75 : vector<8x1xi32> to vector<1x8x1xi32>
    tpu.vector_store %arg4[%c0_27, %c0_28, %c0_29], %87 {strides = array<i32>} : memref<5x8x1xi32, #tpu.memory_space<vmem>>, vector<1x8x1xi32>,
    %c0_30 = arith.constant 0 : index
    %c0_31 = arith.constant 0 : index
    %c0_32 = arith.constant 0 : index
    %88 = vector.load %arg5[%c0_30, %c0_31, %c0_32] : memref<5x8x1xf32, #tpu.memory_space<vmem>>, vector<1x8x1xf32>
    %89 = vector.shape_cast %88 : vector<1x8x1xf32> to vector<8x1xf32>
    %90 = vector.shape_cast %84 : vector<8x1xf32> to vector<1x8x1xf32>
    tpu.vector_store %arg5[%c0_30, %c0_31, %c0_32], %90 {strides = array<i32>} : memref<5x8x1xf32, #tpu.memory_space<vmem>>, vector<1x8x1xf32>,
    %c0_33 = arith.constant 0 : index
    %c0_34 = arith.constant 0 : index
    %c0_35 = arith.constant 0 : index
    %91 = vector.load %arg6[%c0_33, %c0_34, %c0_35] : memref<5x8x1xf32, #tpu.memory_space<vmem>>, vector<1x8x1xf32>
    %92 = vector.shape_cast %91 : vector<1x8x1xf32> to vector<8x1xf32>
    %93 = vector.shape_cast %64 : vector<8x1xf32> to vector<1x8x1xf32>
    tpu.vector_store %arg6[%c0_33, %c0_34, %c0_35], %93 {strides = array<i32>} : memref<5x8x1xf32, #tpu.memory_space<vmem>>, vector<1x8x1xf32>,
    %94 = arith.truncf %35 : vector<8x128xf32> to vector<8x128xbf16>
    %95 = tpu.concatenate %80, %94 in 1 : vector<8x128xbf16>, vector<8x128xbf16> -> vector<8x256xbf16>
    %c1 = arith.constant 1 : index
    %c0_36 = arith.constant 0 : index
    %c0_37 = arith.constant 0 : index
    %96 = vector.load %arg0[%c1, %c0_36, %c0_37] : memref<5x256x512xbf16, #tpu.memory_space<vmem>>, vector<1x256x512xbf16>
    %97 = vector.shape_cast %96 : vector<1x256x512xbf16> to vector<256x512xbf16>
    %cst_38 = arith.constant dense<0.000000e+00> : vector<8x512xf32>
    %98 = tpu.matmul %95, %97, %cst_38 {dimension_numbers = #tpu.dot_dimension_numbers<[1], [0], [0], [1], [0, 0, 1, 1], [], []>} : vector<8x256xbf16>, vector<256x512xbf16>, vector<8x512xf32> -> vector<8x512xf32>
    %c0_39 = arith.constant 0 : index
    %c0_40 = arith.constant 0 : index
    %99 = vector.load %arg2[%c0_39, %c0_40] : memref<8x512xf32, #tpu.memory_space<vmem>>, vector<8x512xf32>
    %100 = arith.addf %98, %99 : vector<8x512xf32>
    %101 = vector.extract_strided_slice %100 {offsets = [0, 0], sizes = [8, 128], strides = [1, 1]} : vector<8x512xf32> to vector<8x128xf32>
    %102 = arith.negf %101 : vector<8x128xf32>
    %103 = math.exp %102 : vector<8x128xf32>
    %cst_41 = arith.constant 1.000000e+00 : f32
    %104 = vector.broadcast %cst_41 : f32 to vector<8x128xf32>
    %105 = arith.addf %104, %103 : vector<8x128xf32>
    %106 = arith.divf %104, %105 : vector<8x128xf32>
    %107 = vector.extract_strided_slice %100 {offsets = [0, 128], sizes = [8, 128], strides = [1, 1]} : vector<8x512xf32> to vector<8x128xf32>
    %108 = arith.negf %107 : vector<8x128xf32>
    %109 = math.exp %108 : vector<8x128xf32>
    %cst_42 = arith.constant 1.000000e+00 : f32
    %110 = vector.broadcast %cst_42 : f32 to vector<8x128xf32>
    %111 = arith.addf %110, %109 : vector<8x128xf32>
    %112 = arith.divf %110, %111 : vector<8x128xf32>
    %113 = vector.extract_strided_slice %100 {offsets = [0, 256], sizes = [8, 128], strides = [1, 1]} : vector<8x512xf32> to vector<8x128xf32>
    %114 = math.tanh %113 : vector<8x128xf32>
    %115 = vector.extract_strided_slice %100 {offsets = [0, 384], sizes = [8, 128], strides = [1, 1]} : vector<8x512xf32> to vector<8x128xf32>
    %116 = arith.negf %115 : vector<8x128xf32>
    %117 = math.exp %116 : vector<8x128xf32>
    %cst_43 = arith.constant 1.000000e+00 : f32
    %118 = vector.broadcast %cst_43 : f32 to vector<8x128xf32>
    %119 = arith.addf %118, %117 : vector<8x128xf32>
    %120 = arith.divf %118, %119 : vector<8x128xf32>
    %121 = arith.mulf %112, %33 : vector<8x128xf32>
    %122 = arith.mulf %106, %114 : vector<8x128xf32>
    %123 = arith.addf %121, %122 : vector<8x128xf32>
    %124 = math.tanh %123 : vector<8x128xf32>
    %125 = arith.mulf %120, %124 : vector<8x128xf32>
    %126 = arith.truncf %125 : vector<8x128xf32> to vector<8x128xbf16>
    %c1_44 = arith.constant 1 : index
    %c0_45 = arith.constant 0 : index
    %c0_46 = arith.constant 0 : index
    %127 = vector.load %arg1[%c1_44, %c0_45, %c0_46] : memref<5x128x128xbf16, #tpu.memory_space<vmem>>, vector<1x128x128xbf16>
    %128 = vector.shape_cast %127 : vector<1x128x128xbf16> to vector<128x128xbf16>
    %cst_47 = arith.constant dense<0.000000e+00> : vector<8x128xf32>
    %129 = tpu.matmul %126, %128, %cst_47 {dimension_numbers = #tpu.dot_dimension_numbers<[1], [0], [0], [1], [0, 0, 1, 1], [], []>} : vector<8x128xbf16>, vector<128x128xbf16>, vector<8x128xf32> -> vector<8x128xf32>
    %c1_i32 = arith.constant 1 : i32
    %130 = vector.broadcast %c1_i32 : i32 to vector<8x128xi32>
    %131 = arith.cmpi slt, %0, %130 : vector<8x128xi32>
    %cst_48 = arith.constant -1.000000e+30 : f32
    %132 = vector.broadcast %cst_48 : f32 to vector<8x128xf32>
    %133 = arith.select %131, %129, %132 : vector<8x128xi1>, vector<8x128xf32>
    %cst_49 = arith.constant dense<0xFF800000> : vector<8xf32>
    %134 = vector.multi_reduction <maximumf>, %133, %cst_49 [1] : vector<8x128xf32> to vector<8xf32>
    %135 = vector.shape_cast %134 : vector<8xf32> to vector<8x1xf32>
    %136 = vector.broadcast %135 : vector<8x1xf32> to vector<8x128xf32>
    %137 = arith.subf %133, %136 : vector<8x128xf32>
    %138 = math.exp %137 : vector<8x128xf32>
    %cst_50 = arith.constant dense<0.000000e+00> : vector<8xf32>
    %139 = vector.multi_reduction <add>, %138, %cst_50 [1] : vector<8x128xf32> to vector<8xf32>
    %140 = vector.shape_cast %139 : vector<8xf32> to vector<8x1xf32>
    %141 = vector.broadcast %135 : vector<8x1xf32> to vector<8x128xf32>
    %142 = arith.subf %133, %141 : vector<8x128xf32>
    %143 = math.log %140 : vector<8x1xf32>
    %144 = vector.broadcast %143 : vector<8x1xf32> to vector<8x128xf32>
    %145 = arith.subf %142, %144 : vector<8x128xf32>
    %146 = vector.broadcast %140 : vector<8x1xf32> to vector<8x128xf32>
    %147 = arith.divf %138, %146 : vector<8x128xf32>
    %148 = arith.mulf %147, %145 : vector<8x128xf32>
    %cst_51 = arith.constant 0.000000e+00 : f32
    %149 = vector.broadcast %cst_51 : f32 to vector<8x128xf32>
    %150 = arith.select %131, %148, %149 : vector<8x128xi1>, vector<8x128xf32>
    %cst_52 = arith.constant dense<0.000000e+00> : vector<8xf32>
    %151 = vector.multi_reduction <add>, %150, %cst_52 [1] : vector<8x128xf32> to vector<8xf32>
    %152 = vector.shape_cast %151 : vector<8xf32> to vector<8x1xf32>
    %cst_53 = arith.constant 0.000000e+00 : f32
    %153 = vector.broadcast %cst_53 : f32 to vector<8x1xf32>
    %154 = arith.subf %153, %152 : vector<8x1xf32>
    %c1_54 = arith.constant 1 : index
    %c0_55 = arith.constant 0 : index
    %c0_56 = arith.constant 0 : index
    %155 = vector.load %arg3[%c1_54, %c0_55, %c0_56] : memref<5x8x128xf32, #tpu.memory_space<vmem>>, vector<1x8x128xf32>
    %156 = vector.shape_cast %155 : vector<1x8x128xf32> to vector<8x128xf32>
    %157 = arith.addf %133, %156 : vector<8x128xf32>
    %cst_57 = arith.constant dense<0xFF800000> : vector<8xf32>
    %158 = vector.multi_reduction <maximumf>, %157, %cst_57 [1] : vector<8x128xf32> to vector<8xf32>
    %159 = vector.shape_cast %158 : vector<8xf32> to vector<8x1xf32>
    %160 = vector.broadcast %159 : vector<8x1xf32> to vector<8x128xf32>
    %161 = arith.cmpf oeq, %157, %160 : vector<8x128xf32>
    %c128_i32_58 = arith.constant 128 : i32
    %162 = vector.broadcast %c128_i32_58 : i32 to vector<8x128xi32>
    %163 = arith.select %161, %0, %162 : vector<8x128xi1>, vector<8x128xi32>
    %cst_59 = arith.constant dense<2147483647> : vector<8xi32>
    %164 = vector.multi_reduction <minsi>, %163, %cst_59 [1] : vector<8x128xi32> to vector<8xi32>
    %165 = vector.shape_cast %164 : vector<8xi32> to vector<8x1xi32>
    %166 = vector.broadcast %165 : vector<8x1xi32> to vector<8x128xi32>
    %167 = arith.cmpi eq, %0, %166 : vector<8x128xi32>
    %168 = arith.extui %167 : vector<8x128xi1> to vector<8x128xi32>
    %169 = arith.sitofp %168 : vector<8x128xi32> to vector<8x128xf32>
    %170 = arith.truncf %169 : vector<8x128xf32> to vector<8x128xbf16>
    %cst_60 = arith.constant 0.000000e+00 : f32
    %171 = vector.broadcast %cst_60 : f32 to vector<8x128xf32>
    %172 = arith.select %167, %145, %171 : vector<8x128xi1>, vector<8x128xf32>
    %cst_61 = arith.constant dense<0.000000e+00> : vector<8xf32>
    %173 = vector.multi_reduction <add>, %172, %cst_61 [1] : vector<8x128xf32> to vector<8xf32>
    %174 = vector.shape_cast %173 : vector<8xf32> to vector<8x1xf32>
    %c1_62 = arith.constant 1 : index
    %c0_63 = arith.constant 0 : index
    %c0_64 = arith.constant 0 : index
    %175 = vector.load %arg4[%c1_62, %c0_63, %c0_64] : memref<5x8x1xi32, #tpu.memory_space<vmem>>, vector<1x8x1xi32>
    %176 = vector.shape_cast %175 : vector<1x8x1xi32> to vector<8x1xi32>
    %177 = vector.shape_cast %165 : vector<8x1xi32> to vector<1x8x1xi32>
    tpu.vector_store %arg4[%c1_62, %c0_63, %c0_64], %177 {strides = array<i32>} : memref<5x8x1xi32, #tpu.memory_space<vmem>>, vector<1x8x1xi32>,
    %c1_65 = arith.constant 1 : index
    %c0_66 = arith.constant 0 : index
    %c0_67 = arith.constant 0 : index
    %178 = vector.load %arg5[%c1_65, %c0_66, %c0_67] : memref<5x8x1xf32, #tpu.memory_space<vmem>>, vector<1x8x1xf32>
    %179 = vector.shape_cast %178 : vector<1x8x1xf32> to vector<8x1xf32>
    %180 = vector.shape_cast %174 : vector<8x1xf32> to vector<1x8x1xf32>
    tpu.vector_store %arg5[%c1_65, %c0_66, %c0_67], %180 {strides = array<i32>} : memref<5x8x1xf32, #tpu.memory_space<vmem>>, vector<1x8x1xf32>,
    %c1_68 = arith.constant 1 : index
    %c0_69 = arith.constant 0 : index
    %c0_70 = arith.constant 0 : index
    %181 = vector.load %arg6[%c1_68, %c0_69, %c0_70] : memref<5x8x1xf32, #tpu.memory_space<vmem>>, vector<1x8x1xf32>
    %182 = vector.shape_cast %181 : vector<1x8x1xf32> to vector<8x1xf32>
    %183 = vector.shape_cast %154 : vector<8x1xf32> to vector<1x8x1xf32>
    tpu.vector_store %arg6[%c1_68, %c0_69, %c0_70], %183 {strides = array<i32>} : memref<5x8x1xf32, #tpu.memory_space<vmem>>, vector<1x8x1xf32>,
    %184 = arith.truncf %125 : vector<8x128xf32> to vector<8x128xbf16>
    %185 = tpu.concatenate %170, %184 in 1 : vector<8x128xbf16>, vector<8x128xbf16> -> vector<8x256xbf16>
    %c2 = arith.constant 2 : index
    %c0_71 = arith.constant 0 : index
    %c0_72 = arith.constant 0 : index
    %186 = vector.load %arg0[%c2, %c0_71, %c0_72] : memref<5x256x512xbf16, #tpu.memory_space<vmem>>, vector<1x256x512xbf16>
    %187 = vector.shape_cast %186 : vector<1x256x512xbf16> to vector<256x512xbf16>
    %cst_73 = arith.constant dense<0.000000e+00> : vector<8x512xf32>
    %188 = tpu.matmul %185, %187, %cst_73 {dimension_numbers = #tpu.dot_dimension_numbers<[1], [0], [0], [1], [0, 0, 1, 1], [], []>} : vector<8x256xbf16>, vector<256x512xbf16>, vector<8x512xf32> -> vector<8x512xf32>
    %c0_74 = arith.constant 0 : index
    %c0_75 = arith.constant 0 : index
    %189 = vector.load %arg2[%c0_74, %c0_75] : memref<8x512xf32, #tpu.memory_space<vmem>>, vector<8x512xf32>
    %190 = arith.addf %188, %189 : vector<8x512xf32>
    %191 = vector.extract_strided_slice %190 {offsets = [0, 0], sizes = [8, 128], strides = [1, 1]} : vector<8x512xf32> to vector<8x128xf32>
    %192 = arith.negf %191 : vector<8x128xf32>
    %193 = math.exp %192 : vector<8x128xf32>
    %cst_76 = arith.constant 1.000000e+00 : f32
    %194 = vector.broadcast %cst_76 : f32 to vector<8x128xf32>
    %195 = arith.addf %194, %193 : vector<8x128xf32>
    %196 = arith.divf %194, %195 : vector<8x128xf32>
    %197 = vector.extract_strided_slice %190 {offsets = [0, 128], sizes = [8, 128], strides = [1, 1]} : vector<8x512xf32> to vector<8x128xf32>
    %198 = arith.negf %197 : vector<8x128xf32>
    %199 = math.exp %198 : vector<8x128xf32>
    %cst_77 = arith.constant 1.000000e+00 : f32
    %200 = vector.broadcast %cst_77 : f32 to vector<8x128xf32>
    %201 = arith.addf %200, %199 : vector<8x128xf32>
    %202 = arith.divf %200, %201 : vector<8x128xf32>
    %203 = vector.extract_strided_slice %190 {offsets = [0, 256], sizes = [8, 128], strides = [1, 1]} : vector<8x512xf32> to vector<8x128xf32>
    %204 = math.tanh %203 : vector<8x128xf32>
    %205 = vector.extract_strided_slice %190 {offsets = [0, 384], sizes = [8, 128], strides = [1, 1]} : vector<8x512xf32> to vector<8x128xf32>
    %206 = arith.negf %205 : vector<8x128xf32>
    %207 = math.exp %206 : vector<8x128xf32>
    %cst_78 = arith.constant 1.000000e+00 : f32
    %208 = vector.broadcast %cst_78 : f32 to vector<8x128xf32>
    %209 = arith.addf %208, %207 : vector<8x128xf32>
    %210 = arith.divf %208, %209 : vector<8x128xf32>
    %211 = arith.mulf %202, %123 : vector<8x128xf32>
    %212 = arith.mulf %196, %204 : vector<8x128xf32>
    %213 = arith.addf %211, %212 : vector<8x128xf32>
    %214 = math.tanh %213 : vector<8x128xf32>
    %215 = arith.mulf %210, %214 : vector<8x128xf32>
    %216 = arith.truncf %215 : vector<8x128xf32> to vector<8x128xbf16>
    %c2_79 = arith.constant 2 : index
    %c0_80 = arith.constant 0 : index
    %c0_81 = arith.constant 0 : index
    %217 = vector.load %arg1[%c2_79, %c0_80, %c0_81] : memref<5x128x128xbf16, #tpu.memory_space<vmem>>, vector<1x128x128xbf16>
    %218 = vector.shape_cast %217 : vector<1x128x128xbf16> to vector<128x128xbf16>
    %cst_82 = arith.constant dense<0.000000e+00> : vector<8x128xf32>
    %219 = tpu.matmul %216, %218, %cst_82 {dimension_numbers = #tpu.dot_dimension_numbers<[1], [0], [0], [1], [0, 0, 1, 1], [], []>} : vector<8x128xbf16>, vector<128x128xbf16>, vector<8x128xf32> -> vector<8x128xf32>
    %c4_i32_83 = arith.constant 4 : i32
    %220 = vector.broadcast %c4_i32_83 : i32 to vector<8x128xi32>
    %221 = arith.cmpi slt, %0, %220 : vector<8x128xi32>
    %cst_84 = arith.constant -1.000000e+30 : f32
    %222 = vector.broadcast %cst_84 : f32 to vector<8x128xf32>
    %223 = arith.select %221, %219, %222 : vector<8x128xi1>, vector<8x128xf32>
    %cst_85 = arith.constant dense<0xFF800000> : vector<8xf32>
    %224 = vector.multi_reduction <maximumf>, %223, %cst_85 [1] : vector<8x128xf32> to vector<8xf32>
    %225 = vector.shape_cast %224 : vector<8xf32> to vector<8x1xf32>
    %226 = vector.broadcast %225 : vector<8x1xf32> to vector<8x128xf32>
    %227 = arith.subf %223, %226 : vector<8x128xf32>
    %228 = math.exp %227 : vector<8x128xf32>
    %cst_86 = arith.constant dense<0.000000e+00> : vector<8xf32>
    %229 = vector.multi_reduction <add>, %228, %cst_86 [1] : vector<8x128xf32> to vector<8xf32>
    %230 = vector.shape_cast %229 : vector<8xf32> to vector<8x1xf32>
    %231 = vector.broadcast %225 : vector<8x1xf32> to vector<8x128xf32>
    %232 = arith.subf %223, %231 : vector<8x128xf32>
    %233 = math.log %230 : vector<8x1xf32>
    %234 = vector.broadcast %233 : vector<8x1xf32> to vector<8x128xf32>
    %235 = arith.subf %232, %234 : vector<8x128xf32>
    %236 = vector.broadcast %230 : vector<8x1xf32> to vector<8x128xf32>
    %237 = arith.divf %228, %236 : vector<8x128xf32>
    %238 = arith.mulf %237, %235 : vector<8x128xf32>
    %cst_87 = arith.constant 0.000000e+00 : f32
    %239 = vector.broadcast %cst_87 : f32 to vector<8x128xf32>
    %240 = arith.select %221, %238, %239 : vector<8x128xi1>, vector<8x128xf32>
    %cst_88 = arith.constant dense<0.000000e+00> : vector<8xf32>
    %241 = vector.multi_reduction <add>, %240, %cst_88 [1] : vector<8x128xf32> to vector<8xf32>
    %242 = vector.shape_cast %241 : vector<8xf32> to vector<8x1xf32>
    %cst_89 = arith.constant 0.000000e+00 : f32
    %243 = vector.broadcast %cst_89 : f32 to vector<8x1xf32>
    %244 = arith.subf %243, %242 : vector<8x1xf32>
    %c2_90 = arith.constant 2 : index
    %c0_91 = arith.constant 0 : index
    %c0_92 = arith.constant 0 : index
    %245 = vector.load %arg3[%c2_90, %c0_91, %c0_92] : memref<5x8x128xf32, #tpu.memory_space<vmem>>, vector<1x8x128xf32>
    %246 = vector.shape_cast %245 : vector<1x8x128xf32> to vector<8x128xf32>
    %247 = arith.addf %223, %246 : vector<8x128xf32>
    %cst_93 = arith.constant dense<0xFF800000> : vector<8xf32>
    %248 = vector.multi_reduction <maximumf>, %247, %cst_93 [1] : vector<8x128xf32> to vector<8xf32>
    %249 = vector.shape_cast %248 : vector<8xf32> to vector<8x1xf32>
    %250 = vector.broadcast %249 : vector<8x1xf32> to vector<8x128xf32>
    %251 = arith.cmpf oeq, %247, %250 : vector<8x128xf32>
    %c128_i32_94 = arith.constant 128 : i32
    %252 = vector.broadcast %c128_i32_94 : i32 to vector<8x128xi32>
    %253 = arith.select %251, %0, %252 : vector<8x128xi1>, vector<8x128xi32>
    %cst_95 = arith.constant dense<2147483647> : vector<8xi32>
    %254 = vector.multi_reduction <minsi>, %253, %cst_95 [1] : vector<8x128xi32> to vector<8xi32>
    %255 = vector.shape_cast %254 : vector<8xi32> to vector<8x1xi32>
    %256 = vector.broadcast %255 : vector<8x1xi32> to vector<8x128xi32>
    %257 = arith.cmpi eq, %0, %256 : vector<8x128xi32>
    %258 = arith.extui %257 : vector<8x128xi1> to vector<8x128xi32>
    %259 = arith.sitofp %258 : vector<8x128xi32> to vector<8x128xf32>
    %260 = arith.truncf %259 : vector<8x128xf32> to vector<8x128xbf16>
    %cst_96 = arith.constant 0.000000e+00 : f32
    %261 = vector.broadcast %cst_96 : f32 to vector<8x128xf32>
    %262 = arith.select %257, %235, %261 : vector<8x128xi1>, vector<8x128xf32>
    %cst_97 = arith.constant dense<0.000000e+00> : vector<8xf32>
    %263 = vector.multi_reduction <add>, %262, %cst_97 [1] : vector<8x128xf32> to vector<8xf32>
    %264 = vector.shape_cast %263 : vector<8xf32> to vector<8x1xf32>
    %c2_98 = arith.constant 2 : index
    %c0_99 = arith.constant 0 : index
    %c0_100 = arith.constant 0 : index
    %265 = vector.load %arg4[%c2_98, %c0_99, %c0_100] : memref<5x8x1xi32, #tpu.memory_space<vmem>>, vector<1x8x1xi32>
    %266 = vector.shape_cast %265 : vector<1x8x1xi32> to vector<8x1xi32>
    %267 = vector.shape_cast %255 : vector<8x1xi32> to vector<1x8x1xi32>
    tpu.vector_store %arg4[%c2_98, %c0_99, %c0_100], %267 {strides = array<i32>} : memref<5x8x1xi32, #tpu.memory_space<vmem>>, vector<1x8x1xi32>,
    %c2_101 = arith.constant 2 : index
    %c0_102 = arith.constant 0 : index
    %c0_103 = arith.constant 0 : index
    %268 = vector.load %arg5[%c2_101, %c0_102, %c0_103] : memref<5x8x1xf32, #tpu.memory_space<vmem>>, vector<1x8x1xf32>
    %269 = vector.shape_cast %268 : vector<1x8x1xf32> to vector<8x1xf32>
    %270 = vector.shape_cast %264 : vector<8x1xf32> to vector<1x8x1xf32>
    tpu.vector_store %arg5[%c2_101, %c0_102, %c0_103], %270 {strides = array<i32>} : memref<5x8x1xf32, #tpu.memory_space<vmem>>, vector<1x8x1xf32>,
    %c2_104 = arith.constant 2 : index
    %c0_105 = arith.constant 0 : index
    %c0_106 = arith.constant 0 : index
    %271 = vector.load %arg6[%c2_104, %c0_105, %c0_106] : memref<5x8x1xf32, #tpu.memory_space<vmem>>, vector<1x8x1xf32>
    %272 = vector.shape_cast %271 : vector<1x8x1xf32> to vector<8x1xf32>
    %273 = vector.shape_cast %244 : vector<8x1xf32> to vector<1x8x1xf32>
    tpu.vector_store %arg6[%c2_104, %c0_105, %c0_106], %273 {strides = array<i32>} : memref<5x8x1xf32, #tpu.memory_space<vmem>>, vector<1x8x1xf32>,
    %274 = arith.truncf %215 : vector<8x128xf32> to vector<8x128xbf16>
    %275 = tpu.concatenate %260, %274 in 1 : vector<8x128xbf16>, vector<8x128xbf16> -> vector<8x256xbf16>
    %c3 = arith.constant 3 : index
    %c0_107 = arith.constant 0 : index
    %c0_108 = arith.constant 0 : index
    %276 = vector.load %arg0[%c3, %c0_107, %c0_108] : memref<5x256x512xbf16, #tpu.memory_space<vmem>>, vector<1x256x512xbf16>
    %277 = vector.shape_cast %276 : vector<1x256x512xbf16> to vector<256x512xbf16>
    %cst_109 = arith.constant dense<0.000000e+00> : vector<8x512xf32>
    %278 = tpu.matmul %275, %277, %cst_109 {dimension_numbers = #tpu.dot_dimension_numbers<[1], [0], [0], [1], [0, 0, 1, 1], [], []>} : vector<8x256xbf16>, vector<256x512xbf16>, vector<8x512xf32> -> vector<8x512xf32>
    %c0_110 = arith.constant 0 : index
    %c0_111 = arith.constant 0 : index
    %279 = vector.load %arg2[%c0_110, %c0_111] : memref<8x512xf32, #tpu.memory_space<vmem>>, vector<8x512xf32>
    %280 = arith.addf %278, %279 : vector<8x512xf32>
    %281 = vector.extract_strided_slice %280 {offsets = [0, 0], sizes = [8, 128], strides = [1, 1]} : vector<8x512xf32> to vector<8x128xf32>
    %282 = arith.negf %281 : vector<8x128xf32>
    %283 = math.exp %282 : vector<8x128xf32>
    %cst_112 = arith.constant 1.000000e+00 : f32
    %284 = vector.broadcast %cst_112 : f32 to vector<8x128xf32>
    %285 = arith.addf %284, %283 : vector<8x128xf32>
    %286 = arith.divf %284, %285 : vector<8x128xf32>
    %287 = vector.extract_strided_slice %280 {offsets = [0, 128], sizes = [8, 128], strides = [1, 1]} : vector<8x512xf32> to vector<8x128xf32>
    %288 = arith.negf %287 : vector<8x128xf32>
    %289 = math.exp %288 : vector<8x128xf32>
    %cst_113 = arith.constant 1.000000e+00 : f32
    %290 = vector.broadcast %cst_113 : f32 to vector<8x128xf32>
    %291 = arith.addf %290, %289 : vector<8x128xf32>
    %292 = arith.divf %290, %291 : vector<8x128xf32>
    %293 = vector.extract_strided_slice %280 {offsets = [0, 256], sizes = [8, 128], strides = [1, 1]} : vector<8x512xf32> to vector<8x128xf32>
    %294 = math.tanh %293 : vector<8x128xf32>
    %295 = vector.extract_strided_slice %280 {offsets = [0, 384], sizes = [8, 128], strides = [1, 1]} : vector<8x512xf32> to vector<8x128xf32>
    %296 = arith.negf %295 : vector<8x128xf32>
    %297 = math.exp %296 : vector<8x128xf32>
    %cst_114 = arith.constant 1.000000e+00 : f32
    %298 = vector.broadcast %cst_114 : f32 to vector<8x128xf32>
    %299 = arith.addf %298, %297 : vector<8x128xf32>
    %300 = arith.divf %298, %299 : vector<8x128xf32>
    %301 = arith.mulf %292, %213 : vector<8x128xf32>
    %302 = arith.mulf %286, %294 : vector<8x128xf32>
    %303 = arith.addf %301, %302 : vector<8x128xf32>
    %304 = math.tanh %303 : vector<8x128xf32>
    %305 = arith.mulf %300, %304 : vector<8x128xf32>
    %306 = arith.truncf %305 : vector<8x128xf32> to vector<8x128xbf16>
    %c3_115 = arith.constant 3 : index
    %c0_116 = arith.constant 0 : index
    %c0_117 = arith.constant 0 : index
    %307 = vector.load %arg1[%c3_115, %c0_116, %c0_117] : memref<5x128x128xbf16, #tpu.memory_space<vmem>>, vector<1x128x128xbf16>
    %308 = vector.shape_cast %307 : vector<1x128x128xbf16> to vector<128x128xbf16>
    %cst_118 = arith.constant dense<0.000000e+00> : vector<8x128xf32>
    %309 = tpu.matmul %306, %308, %cst_118 {dimension_numbers = #tpu.dot_dimension_numbers<[1], [0], [0], [1], [0, 0, 1, 1], [], []>} : vector<8x128xbf16>, vector<128x128xbf16>, vector<8x128xf32> -> vector<8x128xf32>
    %c2_i32 = arith.constant 2 : i32
    %310 = vector.broadcast %c2_i32 : i32 to vector<8x128xi32>
    %311 = arith.cmpi slt, %0, %310 : vector<8x128xi32>
    %cst_119 = arith.constant -1.000000e+30 : f32
    %312 = vector.broadcast %cst_119 : f32 to vector<8x128xf32>
    %313 = arith.select %311, %309, %312 : vector<8x128xi1>, vector<8x128xf32>
    %cst_120 = arith.constant dense<0xFF800000> : vector<8xf32>
    %314 = vector.multi_reduction <maximumf>, %313, %cst_120 [1] : vector<8x128xf32> to vector<8xf32>
    %315 = vector.shape_cast %314 : vector<8xf32> to vector<8x1xf32>
    %316 = vector.broadcast %315 : vector<8x1xf32> to vector<8x128xf32>
    %317 = arith.subf %313, %316 : vector<8x128xf32>
    %318 = math.exp %317 : vector<8x128xf32>
    %cst_121 = arith.constant dense<0.000000e+00> : vector<8xf32>
    %319 = vector.multi_reduction <add>, %318, %cst_121 [1] : vector<8x128xf32> to vector<8xf32>
    %320 = vector.shape_cast %319 : vector<8xf32> to vector<8x1xf32>
    %321 = vector.broadcast %315 : vector<8x1xf32> to vector<8x128xf32>
    %322 = arith.subf %313, %321 : vector<8x128xf32>
    %323 = math.log %320 : vector<8x1xf32>
    %324 = vector.broadcast %323 : vector<8x1xf32> to vector<8x128xf32>
    %325 = arith.subf %322, %324 : vector<8x128xf32>
    %326 = vector.broadcast %320 : vector<8x1xf32> to vector<8x128xf32>
    %327 = arith.divf %318, %326 : vector<8x128xf32>
    %328 = arith.mulf %327, %325 : vector<8x128xf32>
    %cst_122 = arith.constant 0.000000e+00 : f32
    %329 = vector.broadcast %cst_122 : f32 to vector<8x128xf32>
    %330 = arith.select %311, %328, %329 : vector<8x128xi1>, vector<8x128xf32>
    %cst_123 = arith.constant dense<0.000000e+00> : vector<8xf32>
    %331 = vector.multi_reduction <add>, %330, %cst_123 [1] : vector<8x128xf32> to vector<8xf32>
    %332 = vector.shape_cast %331 : vector<8xf32> to vector<8x1xf32>
    %cst_124 = arith.constant 0.000000e+00 : f32
    %333 = vector.broadcast %cst_124 : f32 to vector<8x1xf32>
    %334 = arith.subf %333, %332 : vector<8x1xf32>
    %c3_125 = arith.constant 3 : index
    %c0_126 = arith.constant 0 : index
    %c0_127 = arith.constant 0 : index
    %335 = vector.load %arg3[%c3_125, %c0_126, %c0_127] : memref<5x8x128xf32, #tpu.memory_space<vmem>>, vector<1x8x128xf32>
    %336 = vector.shape_cast %335 : vector<1x8x128xf32> to vector<8x128xf32>
    %337 = arith.addf %313, %336 : vector<8x128xf32>
    %cst_128 = arith.constant dense<0xFF800000> : vector<8xf32>
    %338 = vector.multi_reduction <maximumf>, %337, %cst_128 [1] : vector<8x128xf32> to vector<8xf32>
    %339 = vector.shape_cast %338 : vector<8xf32> to vector<8x1xf32>
    %340 = vector.broadcast %339 : vector<8x1xf32> to vector<8x128xf32>
    %341 = arith.cmpf oeq, %337, %340 : vector<8x128xf32>
    %c128_i32_129 = arith.constant 128 : i32
    %342 = vector.broadcast %c128_i32_129 : i32 to vector<8x128xi32>
    %343 = arith.select %341, %0, %342 : vector<8x128xi1>, vector<8x128xi32>
    %cst_130 = arith.constant dense<2147483647> : vector<8xi32>
    %344 = vector.multi_reduction <minsi>, %343, %cst_130 [1] : vector<8x128xi32> to vector<8xi32>
    %345 = vector.shape_cast %344 : vector<8xi32> to vector<8x1xi32>
    %346 = vector.broadcast %345 : vector<8x1xi32> to vector<8x128xi32>
    %347 = arith.cmpi eq, %0, %346 : vector<8x128xi32>
    %348 = arith.extui %347 : vector<8x128xi1> to vector<8x128xi32>
    %349 = arith.sitofp %348 : vector<8x128xi32> to vector<8x128xf32>
    %350 = arith.truncf %349 : vector<8x128xf32> to vector<8x128xbf16>
    %cst_131 = arith.constant 0.000000e+00 : f32
    %351 = vector.broadcast %cst_131 : f32 to vector<8x128xf32>
    %352 = arith.select %347, %325, %351 : vector<8x128xi1>, vector<8x128xf32>
    %cst_132 = arith.constant dense<0.000000e+00> : vector<8xf32>
    %353 = vector.multi_reduction <add>, %352, %cst_132 [1] : vector<8x128xf32> to vector<8xf32>
    %354 = vector.shape_cast %353 : vector<8xf32> to vector<8x1xf32>
    %c3_133 = arith.constant 3 : index
    %c0_134 = arith.constant 0 : index
    %c0_135 = arith.constant 0 : index
    %355 = vector.load %arg4[%c3_133, %c0_134, %c0_135] : memref<5x8x1xi32, #tpu.memory_space<vmem>>, vector<1x8x1xi32>
    %356 = vector.shape_cast %355 : vector<1x8x1xi32> to vector<8x1xi32>
    %357 = vector.shape_cast %345 : vector<8x1xi32> to vector<1x8x1xi32>
    tpu.vector_store %arg4[%c3_133, %c0_134, %c0_135], %357 {strides = array<i32>} : memref<5x8x1xi32, #tpu.memory_space<vmem>>, vector<1x8x1xi32>,
    %c3_136 = arith.constant 3 : index
    %c0_137 = arith.constant 0 : index
    %c0_138 = arith.constant 0 : index
    %358 = vector.load %arg5[%c3_136, %c0_137, %c0_138] : memref<5x8x1xf32, #tpu.memory_space<vmem>>, vector<1x8x1xf32>
    %359 = vector.shape_cast %358 : vector<1x8x1xf32> to vector<8x1xf32>
    %360 = vector.shape_cast %354 : vector<8x1xf32> to vector<1x8x1xf32>
    tpu.vector_store %arg5[%c3_136, %c0_137, %c0_138], %360 {strides = array<i32>} : memref<5x8x1xf32, #tpu.memory_space<vmem>>, vector<1x8x1xf32>,
    %c3_139 = arith.constant 3 : index
    %c0_140 = arith.constant 0 : index
    %c0_141 = arith.constant 0 : index
    %361 = vector.load %arg6[%c3_139, %c0_140, %c0_141] : memref<5x8x1xf32, #tpu.memory_space<vmem>>, vector<1x8x1xf32>
    %362 = vector.shape_cast %361 : vector<1x8x1xf32> to vector<8x1xf32>
    %363 = vector.shape_cast %334 : vector<8x1xf32> to vector<1x8x1xf32>
    tpu.vector_store %arg6[%c3_139, %c0_140, %c0_141], %363 {strides = array<i32>} : memref<5x8x1xf32, #tpu.memory_space<vmem>>, vector<1x8x1xf32>,
    %364 = arith.truncf %305 : vector<8x128xf32> to vector<8x128xbf16>
    %365 = tpu.concatenate %350, %364 in 1 : vector<8x128xbf16>, vector<8x128xbf16> -> vector<8x256xbf16>
    %c4 = arith.constant 4 : index
    %c0_142 = arith.constant 0 : index
    %c0_143 = arith.constant 0 : index
    %366 = vector.load %arg0[%c4, %c0_142, %c0_143] : memref<5x256x512xbf16, #tpu.memory_space<vmem>>, vector<1x256x512xbf16>
    %367 = vector.shape_cast %366 : vector<1x256x512xbf16> to vector<256x512xbf16>
    %cst_144 = arith.constant dense<0.000000e+00> : vector<8x512xf32>
    %368 = tpu.matmul %365, %367, %cst_144 {dimension_numbers = #tpu.dot_dimension_numbers<[1], [0], [0], [1], [0, 0, 1, 1], [], []>} : vector<8x256xbf16>, vector<256x512xbf16>, vector<8x512xf32> -> vector<8x512xf32>
    %c0_145 = arith.constant 0 : index
    %c0_146 = arith.constant 0 : index
    %369 = vector.load %arg2[%c0_145, %c0_146] : memref<8x512xf32, #tpu.memory_space<vmem>>, vector<8x512xf32>
    %370 = arith.addf %368, %369 : vector<8x512xf32>
    %371 = vector.extract_strided_slice %370 {offsets = [0, 0], sizes = [8, 128], strides = [1, 1]} : vector<8x512xf32> to vector<8x128xf32>
    %372 = arith.negf %371 : vector<8x128xf32>
    %373 = math.exp %372 : vector<8x128xf32>
    %cst_147 = arith.constant 1.000000e+00 : f32
    %374 = vector.broadcast %cst_147 : f32 to vector<8x128xf32>
    %375 = arith.addf %374, %373 : vector<8x128xf32>
    %376 = arith.divf %374, %375 : vector<8x128xf32>
    %377 = vector.extract_strided_slice %370 {offsets = [0, 128], sizes = [8, 128], strides = [1, 1]} : vector<8x512xf32> to vector<8x128xf32>
    %378 = arith.negf %377 : vector<8x128xf32>
    %379 = math.exp %378 : vector<8x128xf32>
    %cst_148 = arith.constant 1.000000e+00 : f32
    %380 = vector.broadcast %cst_148 : f32 to vector<8x128xf32>
    %381 = arith.addf %380, %379 : vector<8x128xf32>
    %382 = arith.divf %380, %381 : vector<8x128xf32>
    %383 = vector.extract_strided_slice %370 {offsets = [0, 256], sizes = [8, 128], strides = [1, 1]} : vector<8x512xf32> to vector<8x128xf32>
    %384 = math.tanh %383 : vector<8x128xf32>
    %385 = vector.extract_strided_slice %370 {offsets = [0, 384], sizes = [8, 128], strides = [1, 1]} : vector<8x512xf32> to vector<8x128xf32>
    %386 = arith.negf %385 : vector<8x128xf32>
    %387 = math.exp %386 : vector<8x128xf32>
    %cst_149 = arith.constant 1.000000e+00 : f32
    %388 = vector.broadcast %cst_149 : f32 to vector<8x128xf32>
    %389 = arith.addf %388, %387 : vector<8x128xf32>
    %390 = arith.divf %388, %389 : vector<8x128xf32>
    %391 = arith.mulf %382, %303 : vector<8x128xf32>
    %392 = arith.mulf %376, %384 : vector<8x128xf32>
    %393 = arith.addf %391, %392 : vector<8x128xf32>
    %394 = math.tanh %393 : vector<8x128xf32>
    %395 = arith.mulf %390, %394 : vector<8x128xf32>
    %396 = arith.truncf %395 : vector<8x128xf32> to vector<8x128xbf16>
    %c4_150 = arith.constant 4 : index
    %c0_151 = arith.constant 0 : index
    %c0_152 = arith.constant 0 : index
    %397 = vector.load %arg1[%c4_150, %c0_151, %c0_152] : memref<5x128x128xbf16, #tpu.memory_space<vmem>>, vector<1x128x128xbf16>
    %398 = vector.shape_cast %397 : vector<1x128x128xbf16> to vector<128x128xbf16>
    %cst_153 = arith.constant dense<0.000000e+00> : vector<8x128xf32>
    %399 = tpu.matmul %396, %398, %cst_153 {dimension_numbers = #tpu.dot_dimension_numbers<[1], [0], [0], [1], [0, 0, 1, 1], [], []>} : vector<8x128xbf16>, vector<128x128xbf16>, vector<8x128xf32> -> vector<8x128xf32>
    %c4_i32_154 = arith.constant 4 : i32
    %400 = vector.broadcast %c4_i32_154 : i32 to vector<8x128xi32>
    %401 = arith.cmpi slt, %0, %400 : vector<8x128xi32>
    %cst_155 = arith.constant -1.000000e+30 : f32
    %402 = vector.broadcast %cst_155 : f32 to vector<8x128xf32>
    %403 = arith.select %401, %399, %402 : vector<8x128xi1>, vector<8x128xf32>
    %cst_156 = arith.constant dense<0xFF800000> : vector<8xf32>
    %404 = vector.multi_reduction <maximumf>, %403, %cst_156 [1] : vector<8x128xf32> to vector<8xf32>
    %405 = vector.shape_cast %404 : vector<8xf32> to vector<8x1xf32>
    %406 = vector.broadcast %405 : vector<8x1xf32> to vector<8x128xf32>
    %407 = arith.subf %403, %406 : vector<8x128xf32>
    %408 = math.exp %407 : vector<8x128xf32>
    %cst_157 = arith.constant dense<0.000000e+00> : vector<8xf32>
    %409 = vector.multi_reduction <add>, %408, %cst_157 [1] : vector<8x128xf32> to vector<8xf32>
    %410 = vector.shape_cast %409 : vector<8xf32> to vector<8x1xf32>
    %411 = vector.broadcast %405 : vector<8x1xf32> to vector<8x128xf32>
    %412 = arith.subf %403, %411 : vector<8x128xf32>
    %413 = math.log %410 : vector<8x1xf32>
    %414 = vector.broadcast %413 : vector<8x1xf32> to vector<8x128xf32>
    %415 = arith.subf %412, %414 : vector<8x128xf32>
    %416 = vector.broadcast %410 : vector<8x1xf32> to vector<8x128xf32>
    %417 = arith.divf %408, %416 : vector<8x128xf32>
    %418 = arith.mulf %417, %415 : vector<8x128xf32>
    %cst_158 = arith.constant 0.000000e+00 : f32
    %419 = vector.broadcast %cst_158 : f32 to vector<8x128xf32>
    %420 = arith.select %401, %418, %419 : vector<8x128xi1>, vector<8x128xf32>
    %cst_159 = arith.constant dense<0.000000e+00> : vector<8xf32>
    %421 = vector.multi_reduction <add>, %420, %cst_159 [1] : vector<8x128xf32> to vector<8xf32>
    %422 = vector.shape_cast %421 : vector<8xf32> to vector<8x1xf32>
    %cst_160 = arith.constant 0.000000e+00 : f32
    %423 = vector.broadcast %cst_160 : f32 to vector<8x1xf32>
    %424 = arith.subf %423, %422 : vector<8x1xf32>
    %c4_161 = arith.constant 4 : index
    %c0_162 = arith.constant 0 : index
    %c0_163 = arith.constant 0 : index
    %425 = vector.load %arg3[%c4_161, %c0_162, %c0_163] : memref<5x8x128xf32, #tpu.memory_space<vmem>>, vector<1x8x128xf32>
    %426 = vector.shape_cast %425 : vector<1x8x128xf32> to vector<8x128xf32>
    %427 = arith.addf %403, %426 : vector<8x128xf32>
    %cst_164 = arith.constant dense<0xFF800000> : vector<8xf32>
    %428 = vector.multi_reduction <maximumf>, %427, %cst_164 [1] : vector<8x128xf32> to vector<8xf32>
    %429 = vector.shape_cast %428 : vector<8xf32> to vector<8x1xf32>
    %430 = vector.broadcast %429 : vector<8x1xf32> to vector<8x128xf32>
    %431 = arith.cmpf oeq, %427, %430 : vector<8x128xf32>
    %c128_i32_165 = arith.constant 128 : i32
    %432 = vector.broadcast %c128_i32_165 : i32 to vector<8x128xi32>
    %433 = arith.select %431, %0, %432 : vector<8x128xi1>, vector<8x128xi32>
    %cst_166 = arith.constant dense<2147483647> : vector<8xi32>
    %434 = vector.multi_reduction <minsi>, %433, %cst_166 [1] : vector<8x128xi32> to vector<8xi32>
    %435 = vector.shape_cast %434 : vector<8xi32> to vector<8x1xi32>
    %436 = vector.broadcast %435 : vector<8x1xi32> to vector<8x128xi32>
    %437 = arith.cmpi eq, %0, %436 : vector<8x128xi32>
    %cst_167 = arith.constant 0.000000e+00 : f32
    %438 = vector.broadcast %cst_167 : f32 to vector<8x128xf32>
    %439 = arith.select %437, %415, %438 : vector<8x128xi1>, vector<8x128xf32>
    %cst_168 = arith.constant dense<0.000000e+00> : vector<8xf32>
    %440 = vector.multi_reduction <add>, %439, %cst_168 [1] : vector<8x128xf32> to vector<8xf32>
    %441 = vector.shape_cast %440 : vector<8xf32> to vector<8x1xf32>
    %c4_169 = arith.constant 4 : index
    %c0_170 = arith.constant 0 : index
    %c0_171 = arith.constant 0 : index
    %442 = vector.load %arg4[%c4_169, %c0_170, %c0_171] : memref<5x8x1xi32, #tpu.memory_space<vmem>>, vector<1x8x1xi32>
    %443 = vector.shape_cast %442 : vector<1x8x1xi32> to vector<8x1xi32>
    %444 = vector.shape_cast %435 : vector<8x1xi32> to vector<1x8x1xi32>
    tpu.vector_store %arg4[%c4_169, %c0_170, %c0_171], %444 {strides = array<i32>} : memref<5x8x1xi32, #tpu.memory_space<vmem>>, vector<1x8x1xi32>,
    %c4_172 = arith.constant 4 : index
    %c0_173 = arith.constant 0 : index
    %c0_174 = arith.constant 0 : index
    %445 = vector.load %arg5[%c4_172, %c0_173, %c0_174] : memref<5x8x1xf32, #tpu.memory_space<vmem>>, vector<1x8x1xf32>
    %446 = vector.shape_cast %445 : vector<1x8x1xf32> to vector<8x1xf32>
    %447 = vector.shape_cast %441 : vector<8x1xf32> to vector<1x8x1xf32>
    tpu.vector_store %arg5[%c4_172, %c0_173, %c0_174], %447 {strides = array<i32>} : memref<5x8x1xf32, #tpu.memory_space<vmem>>, vector<1x8x1xf32>,
    %c4_175 = arith.constant 4 : index
    %c0_176 = arith.constant 0 : index
    %c0_177 = arith.constant 0 : index
    %448 = vector.load %arg6[%c4_175, %c0_176, %c0_177] : memref<5x8x1xf32, #tpu.memory_space<vmem>>, vector<1x8x1xf32>
    %449 = vector.shape_cast %448 : vector<1x8x1xf32> to vector<8x1xf32>
    %450 = vector.shape_cast %424 : vector<8x1xf32> to vector<1x8x1xf32>
    tpu.vector_store %arg6[%c4_175, %c0_176, %c0_177], %450 {strides = array<i32>} : memref<5x8x1xf32, #tpu.memory_space<vmem>>, vector<1x8x1xf32>,
    return
  }
}

</mosaic_0001>

<llo_original>
// kernel: _forward_impl.1
$region0: #{_forward_impl.1}
  #allocation0 [shape = 'u32[]', space=smem, size = 0x4, offset = 0x4, fixed_abs, tag = 'smem constant byte address 0x4 - core index']
  #allocation1 [shape = 'u32[144,128]{1,0:T(1,128)}', space=vmem, size = 0x12000, scoped, tag = 'internal scratch']
  %s0 = inlined_call_operand.hbm [shape: bf16[5,256,512], index: 0, kind: input, shape index: {}]
  %s1 = inlined_call_operand.hbm [shape: bf16[5,128,128], index: 1, kind: input, shape index: {}]
  %s2 = inlined_call_operand.hbm [shape: f32[8,512], index: 2, kind: input, shape index: {}]
  %s3 = inlined_call_operand.hbm [shape: f32[5,8,128], index: 3, kind: input, shape index: {}]
  %s4 = inlined_call_operand.vmem [shape: s32[5,8,1], index: 4, kind: output, shape index: {0}]
  %s5 = inlined_call_operand.vmem [shape: f32[5,8,1], index: 5, kind: output, shape index: {1}]
  %s6 = inlined_call_operand.vmem [shape: f32[5,8,1], index: 6, kind: output, shape index: {2}]
  %7 = xla_tuple %s4, %s5, %s6
  %s8 = sld [smem:[#allocation0]]
  $region58: #{_forward_impl.1} parent=0
    _
  %s10 = ssub.s32 1, %s8
  %s11 = scalar_select 0, %s10, %s8
  $region1: #{_forward_impl.1} parent=0
    #allocation2 [shape = 'u8[1310720]{0}', space=vmem, size = 0x140000, scoped, tag = 'input window, operand 0, single buffered']
    #allocation3 [shape = 's32[1]{0}', space=sflag, size = 0x4, scoped, tag = 'scoped memory for _forward_impl.1']
    #allocation4 [shape = 'u8[163840]{0}', space=vmem, size = 0x28000, scoped, tag = 'input window, operand 1, single buffered']
    #allocation5 [shape = 's32[1]{0}', space=sflag, size = 0x4, scoped, tag = 'scoped memory for _forward_impl.1']
    #allocation6 [shape = 'u8[16384]{0}', space=vmem, size = 0x4000, scoped, tag = 'input window, operand 2, single buffered']
    #allocation7 [shape = 'u8[20480]{0}', space=vmem, size = 0x5000, scoped, tag = 'input window, operand 3, single buffered']
    #allocation8 [shape = 's32[1]{0}', space=sflag, size = 0x4, scoped, tag = 'scoped memory for _forward_impl.1']
    %12 = vsyncpa [#allocation3], 0
    %13 = vsyncpa [#allocation5], 0
    %14 = vsyncpa [#allocation8], 0
    // Predicated region
    $region2: #{_forward_impl.1} parent=1 // pred_check
      _
    $region3: #{_forward_impl.1} parent=1 // pred_check_branch
      %16 = sbr.rel (0) target = $region5
    $region4: #{_forward_impl.1} parent=1 // pred_region
      %s18 = ssub.s32 40960, 40960
      %19 = vsyncadd [#allocation3], %s18
      %s20 = sshll.u32 [#allocation2], 4
      %s21 = int_to_ptr.vmem [resolvable:$true] %s20
      %26 = dma.hbm_to_vmem [thread:$0]  %s0, 40960, %s21, [#allocation3], 256, 256, 16
    $region5: #{_forward_impl.1} parent=1 // pred_fallthru
      _
    // Predicated region
    $region6: #{_forward_impl.1} parent=1 // pred_check
      _
    $region7: #{_forward_impl.1} parent=1 // pred_check_branch
      %28 = sbr.rel (0) target = $region9
    $region8: #{_forward_impl.1} parent=1 // pred_region
      %s30 = ssub.s32 5120, 5120
      %31 = vsyncadd [#allocation5], %s30
      %s32 = sshll.u32 [#allocation4], 4
      %s33 = int_to_ptr.vmem [resolvable:$true] %s32
      %38 = dma.hbm_to_vmem [thread:$0]  %s1, 5120, %s33, [#allocation5], 64, 64, 4
    $region9: #{_forward_impl.1} parent=1 // pred_fallthru
      _
    // Predicated region
    $region10: #{_forward_impl.1} parent=1 // pred_check
      _
    $region11: #{_forward_impl.1} parent=1 // pred_check_branch
      %40 = sbr.rel (0) target = $region13
    $region12: #{_forward_impl.1} parent=1 // pred_region
      %s42 = ssub.s32 512, 512
      %43 = vsyncadd [#allocation5], %s42
      %s45 = sshll.u32 [#allocation6], 4
      %s46 = int_to_ptr.vmem [resolvable:$true] %s45
      %48 = dma.hbm_to_vmem [thread:$0]  %s2, 512, %s46, [#allocation5]
    $region13: #{_forward_impl.1} parent=1 // pred_fallthru
      _
    // Predicated region
    $region14: #{_forward_impl.1} parent=1 // pred_check
      _
    $region15: #{_forward_impl.1} parent=1 // pred_check_branch
      %50 = sbr.rel (0) target = $region17
    $region16: #{_forward_impl.1} parent=1 // pred_region
      %s52 = ssub.s32 640, 640
      %53 = vsyncadd [#allocation8], %s52
      %s54 = sshll.u32 [#allocation7], 4
      %s55 = int_to_ptr.vmem [resolvable:$true] %s54
      %60 = dma.hbm_to_vmem [thread:$0]  %s3, 640, %s55, [#allocation8], 128, 128, 8
    $region17: #{_forward_impl.1} parent=1 // pred_fallthru
      _
    // Predicated region
    $region18: #{_forward_impl.1} parent=1 // pred_check
      _
    $region19: #{_forward_impl.1} parent=1 // pred_check_branch
      %62 = sbr.rel (0) target = $region21
    $region20: #{_forward_impl.1} parent=1 // pred_region
      %63 = dma.done [#allocation3], 40960
    $region21: #{_forward_impl.1} parent=1 // pred_fallthru
      _
    // Predicated region
    $region22: #{_forward_impl.1} parent=1 // pred_check
      _
    $region23: #{_forward_impl.1} parent=1 // pred_check_branch
      %65 = sbr.rel (0) target = $region25
    $region24: #{_forward_impl.1} parent=1 // pred_region
      %66 = dma.done [#allocation5], 5120
    $region25: #{_forward_impl.1} parent=1 // pred_fallthru
      _
    // Predicated region
    $region26: #{_forward_impl.1} parent=1 // pred_check
      _
    $region27: #{_forward_impl.1} parent=1 // pred_check_branch
      %68 = sbr.rel (0) target = $region29
    $region28: #{_forward_impl.1} parent=1 // pred_region
      %69 = dma.done [#allocation5], 512
    $region29: #{_forward_impl.1} parent=1 // pred_fallthru
      _
    // Predicated region
    $region30: #{_forward_impl.1} parent=1 // pred_check
      _
    $region31: #{_forward_impl.1} parent=1 // pred_check_branch
      %71 = sbr.rel (0) target = $region33
    $region32: #{_forward_impl.1} parent=1 // pred_region
      %72 = dma.done [#allocation8], 640
    $region33: #{_forward_impl.1} parent=1 // pred_fallthru
      _
    %v74 = vlaneseq
    %v75 = vand.u32 %v74, 127
    %v76 = vld [vmem:[#allocation2] sm:$0xff]
    %v77 = vld [vmem:[#allocation2 + $0x8] sm:$0xff]
    %v78 = vld [vmem:[#allocation2 + $0x10] sm:$0xff]
    %v79 = vld [vmem:[#allocation2 + $0x18] sm:$0xff]
    %v80 = vld [vmem:[#allocation2 + $0x20] sm:$0xff]
    %v81 = vld [vmem:[#allocation2 + $0x28] sm:$0xff]
    %v82 = vld [vmem:[#allocation2 + $0x30] sm:$0xff]
    %v83 = vld [vmem:[#allocation2 + $0x38] sm:$0xff]
    %v84 = vld [vmem:[#allocation2 + $0x40] sm:$0xff]
    %v85 = vld [vmem:[#allocation2 + $0x48] sm:$0xff]
    %v86 = vld [vmem:[#allocation2 + $0x50] sm:$0xff]
    %v87 = vld [vmem:[#allocation2 + $0x58] sm:$0xff]
    %v88 = vld [vmem:[#allocation2 + $0x60] sm:$0xff]
    %v89 = vld [vmem:[#allocation2 + $0x68] sm:$0xff]
    %v90 = vld [vmem:[#allocation2 + $0x70] sm:$0xff]
    %v91 = vld [vmem:[#allocation2 + $0x78] sm:$0xff]
    %v92 = vld [vmem:[#allocation2 + $0x80] sm:$0xff]
    %v93 = vld [vmem:[#allocation2 + $0x88] sm:$0xff]
    %v94 = vld [vmem:[#allocation2 + $0x90] sm:$0xff]
    %v95 = vld [vmem:[#allocation2 + $0x98] sm:$0xff]
    %v96 = vld [vmem:[#allocation2 + $0xa0] sm:$0xff]
    %v97 = vld [vmem:[#allocation2 + $0xa8] sm:$0xff]
    %v98 = vld [vmem:[#allocation2 + $0xb0] sm:$0xff]
    %v99 = vld [vmem:[#allocation2 + $0xb8] sm:$0xff]
    %v100 = vld [vmem:[#allocation2 + $0xc0] sm:$0xff]
    %v101 = vld [vmem:[#allocation2 + $0xc8] sm:$0xff]
    %v102 = vld [vmem:[#allocation2 + $0xd0] sm:$0xff]
    %v103 = vld [vmem:[#allocation2 + $0xd8] sm:$0xff]
    %v104 = vld [vmem:[#allocation2 + $0xe0] sm:$0xff]
    %v105 = vld [vmem:[#allocation2 + $0xe8] sm:$0xff]
    %v106 = vld [vmem:[#allocation2 + $0xf0] sm:$0xff]
    %v107 = vld [vmem:[#allocation2 + $0xf8] sm:$0xff]
    %v108 = vld [vmem:[#allocation2 + $0x100] sm:$0xff]
    %v109 = vld [vmem:[#allocation2 + $0x108] sm:$0xff]
    %v110 = vld [vmem:[#allocation2 + $0x110] sm:$0xff]
    %v111 = vld [vmem:[#allocation2 + $0x118] sm:$0xff]
    %v112 = vld [vmem:[#allocation2 + $0x120] sm:$0xff]
    %v113 = vld [vmem:[#allocation2 + $0x128] sm:$0xff]
    %v114 = vld [vmem:[#allocation2 + $0x130] sm:$0xff]
    %v115 = vld [vmem:[#allocation2 + $0x138] sm:$0xff]
    %v116 = vld [vmem:[#allocation2 + $0x140] sm:$0xff]
    %v117 = vld [vmem:[#allocation2 + $0x148] sm:$0xff]
    %v118 = vld [vmem:[#allocation2 + $0x150] sm:$0xff]
    %v119 = vld [vmem:[#allocation2 + $0x158] sm:$0xff]
    %v120 = vld [vmem:[#allocation2 + $0x160] sm:$0xff]
    %v121 = vld [vmem:[#allocation2 + $0x168] sm:$0xff]
    %v122 = vld [vmem:[#allocation2 + $0x170] sm:$0xff]
    %v123 = vld [vmem:[#allocation2 + $0x178] sm:$0xff]
    %v124 = vld [vmem:[#allocation2 + $0x180] sm:$0xff]
    %v125 = vld [vmem:[#allocation2 + $0x188] sm:$0xff]
    %v126 = vld [vmem:[#allocation2 + $0x190] sm:$0xff]
    %v127 = vld [vmem:[#allocation2 + $0x198] sm:$0xff]
    %v128 = vld [vmem:[#allocation2 + $0x1a0] sm:$0xff]
    %v129 = vld [vmem:[#allocation2 + $0x1a8] sm:$0xff]
    %v130 = vld [vmem:[#allocation2 + $0x1b0] sm:$0xff]
    %v131 = vld [vmem:[#allocation2 + $0x1b8] sm:$0xff]
    %v132 = vld [vmem:[#allocation2 + $0x1c0] sm:$0xff]
    %v133 = vld [vmem:[#allocation2 + $0x1c8] sm:$0xff]
    %v134 = vld [vmem:[#allocation2 + $0x1d0] sm:$0xff]
    %v135 = vld [vmem:[#allocation2 + $0x1d8] sm:$0xff]
    %v136 = vld [vmem:[#allocation2 + $0x1e0] sm:$0xff]
    %v137 = vld [vmem:[#allocation2 + $0x1e8] sm:$0xff]
    %v138 = vld [vmem:[#allocation2 + $0x1f0] sm:$0xff]
    %v139 = vld [vmem:[#allocation2 + $0x1f8] sm:$0xff]
    %v140 = vld [vmem:[#allocation6] sm:$0xff]
    %v141 = vld [vmem:[#allocation6 + $0x8] sm:$0xff]
    %v142 = vld [vmem:[#allocation6 + $0x10] sm:$0xff]
    %v143 = vld [vmem:[#allocation6 + $0x18] sm:$0xff]
    %v208 = vunpack.c.l.b16 %v76
    %v209 = vunpack.c.h.b16 %v76
    %v210 = vunpack.c.l.b16 %v77
    %v211 = vunpack.c.h.b16 %v77
    %v212 = vunpack.c.l.b16 %v78
    %v213 = vunpack.c.h.b16 %v78
    %v214 = vunpack.c.l.b16 %v79
    %v215 = vunpack.c.h.b16 %v79
    %v216 = vunpack.c.l.b16 %v80
    %v217 = vunpack.c.h.b16 %v80
    %v218 = vunpack.c.l.b16 %v81
    %v219 = vunpack.c.h.b16 %v81
    %v220 = vunpack.c.l.b16 %v82
    %v221 = vunpack.c.h.b16 %v82
    %v222 = vunpack.c.l.b16 %v83
    %v223 = vunpack.c.h.b16 %v83
    %v224 = vunpack.c.l.b16 %v84
    %v225 = vunpack.c.h.b16 %v84
    %v226 = vunpack.c.l.b16 %v85
    %v227 = vunpack.c.h.b16 %v85
    %v228 = vunpack.c.l.b16 %v86
    %v229 = vunpack.c.h.b16 %v86
    %v230 = vunpack.c.l.b16 %v87
    %v231 = vunpack.c.h.b16 %v87
    %v232 = vunpack.c.l.b16 %v88
    %v233 = vunpack.c.h.b16 %v88
    %v234 = vunpack.c.l.b16 %v89
    %v235 = vunpack.c.h.b16 %v89
    %v236 = vunpack.c.l.b16 %v90
    %v237 = vunpack.c.h.b16 %v90
    %v238 = vunpack.c.l.b16 %v91
    %v239 = vunpack.c.h.b16 %v91
    %v240 = vunpack.c.l.b16 %v92
    %v241 = vunpack.c.h.b16 %v92
    %v242 = vunpack.c.l.b16 %v93
    %v243 = vunpack.c.h.b16 %v93
    %v244 = vunpack.c.l.b16 %v94
    %v245 = vunpack.c.h.b16 %v94
    %v246 = vunpack.c.l.b16 %v95
    %v247 = vunpack.c.h.b16 %v95
    %v248 = vunpack.c.l.b16 %v96
    %v249 = vunpack.c.h.b16 %v96
    %v250 = vunpack.c.l.b16 %v97
    %v251 = vunpack.c.h.b16 %v97
    %v252 = vunpack.c.l.b16 %v98
    %v253 = vunpack.c.h.b16 %v98
    %v254 = vunpack.c.l.b16 %v99
    %v255 = vunpack.c.h.b16 %v99
    %v256 = vunpack.c.l.b16 %v100
    %v257 = vunpack.c.h.b16 %v100
    %v258 = vunpack.c.l.b16 %v101
    %v259 = vunpack.c.h.b16 %v101
    %v260 = vunpack.c.l.b16 %v102
    %v261 = vunpack.c.h.b16 %v102
    %v262 = vunpack.c.l.b16 %v103
    %v263 = vunpack.c.h.b16 %v103
    %v264 = vunpack.c.l.b16 %v104
    %v265 = vunpack.c.h.b16 %v104
    %v266 = vunpack.c.l.b16 %v105
    %v267 = vunpack.c.h.b16 %v105
    %v268 = vunpack.c.l.b16 %v106
    %v269 = vunpack.c.h.b16 %v106
    %v270 = vunpack.c.l.b16 %v107
    %v271 = vunpack.c.h.b16 %v107
    %v272 = vunpack.c.l.b16 %v108
    %v273 = vunpack.c.h.b16 %v108
    %v274 = vunpack.c.l.b16 %v109
    %v275 = vunpack.c.h.b16 %v109
    %v276 = vunpack.c.l.b16 %v110
    %v277 = vunpack.c.h.b16 %v110
    %v278 = vunpack.c.l.b16 %v111
    %v279 = vunpack.c.h.b16 %v111
    %v280 = vunpack.c.l.b16 %v112
    %v281 = vunpack.c.h.b16 %v112
    %v282 = vunpack.c.l.b16 %v113
    %v283 = vunpack.c.h.b16 %v113
    %v284 = vunpack.c.l.b16 %v114
    %v285 = vunpack.c.h.b16 %v114
    %v286 = vunpack.c.l.b16 %v115
    %v287 = vunpack.c.h.b16 %v115
    %v288 = vunpack.c.l.b16 %v116
    %v289 = vunpack.c.h.b16 %v116
    %v290 = vunpack.c.l.b16 %v117
    %v291 = vunpack.c.h.b16 %v117
    %v292 = vunpack.c.l.b16 %v118
    %v293 = vunpack.c.h.b16 %v118
    %v294 = vunpack.c.l.b16 %v119
    %v295 = vunpack.c.h.b16 %v119
    %v296 = vunpack.c.l.b16 %v120
    %v297 = vunpack.c.h.b16 %v120
    %v298 = vunpack.c.l.b16 %v121
    %v299 = vunpack.c.h.b16 %v121
    %v300 = vunpack.c.l.b16 %v122
    %v301 = vunpack.c.h.b16 %v122
    %v302 = vunpack.c.l.b16 %v123
    %v303 = vunpack.c.h.b16 %v123
    %v304 = vunpack.c.l.b16 %v124
    %v305 = vunpack.c.h.b16 %v124
    %v306 = vunpack.c.l.b16 %v125
    %v307 = vunpack.c.h.b16 %v125
    %v308 = vunpack.c.l.b16 %v126
    %v309 = vunpack.c.h.b16 %v126
    %v310 = vunpack.c.l.b16 %v127
    %v311 = vunpack.c.h.b16 %v127
    %v312 = vunpack.c.l.b16 %v128
    %v313 = vunpack.c.h.b16 %v128
    %v314 = vunpack.c.l.b16 %v129
    %v315 = vunpack.c.h.b16 %v129
    %v316 = vunpack.c.l.b16 %v130
    %v317 = vunpack.c.h.b16 %v130
    %v318 = vunpack.c.l.b16 %v131
    %v319 = vunpack.c.h.b16 %v131
    %v320 = vunpack.c.l.b16 %v132
    %v321 = vunpack.c.h.b16 %v132
    %v322 = vunpack.c.l.b16 %v133
    %v323 = vunpack.c.h.b16 %v133
    %v324 = vunpack.c.l.b16 %v134
    %v325 = vunpack.c.h.b16 %v134
    %v326 = vunpack.c.l.b16 %v135
    %v327 = vunpack.c.h.b16 %v135
    %v328 = vunpack.c.l.b16 %v136
    %v329 = vunpack.c.h.b16 %v136
    %v330 = vunpack.c.l.b16 %v137
    %v331 = vunpack.c.h.b16 %v137
    %v332 = vunpack.c.l.b16 %v138
    %v333 = vunpack.c.h.b16 %v138
    %v334 = vunpack.c.l.b16 %v139
    %v335 = vunpack.c.h.b16 %v139
    %v336 = vpack.c.b16 %v212, %v208
    %v337 = vpack.c.b16 %v213, %v209
    %v338 = vpack.c.b16 %v214, %v210
    %v339 = vpack.c.b16 %v215, %v211
    %v340 = vpack.c.b16 %v220, %v216
    %v341 = vpack.c.b16 %v221, %v217
    %v342 = vpack.c.b16 %v222, %v218
    %v343 = vpack.c.b16 %v223, %v219
    %v344 = vpack.c.b16 %v228, %v224
    %v345 = vpack.c.b16 %v229, %v225
    %v346 = vpack.c.b16 %v230, %v226
    %v347 = vpack.c.b16 %v231, %v227
    %v348 = vpack.c.b16 %v236, %v232
    %v349 = vpack.c.b16 %v237, %v233
    %v350 = vpack.c.b16 %v238, %v234
    %v351 = vpack.c.b16 %v239, %v235
    %v352 = vpack.c.b16 %v244, %v240
    %v353 = vpack.c.b16 %v245, %v241
    %v354 = vpack.c.b16 %v246, %v242
    %v355 = vpack.c.b16 %v247, %v243
    %v356 = vpack.c.b16 %v252, %v248
    %v357 = vpack.c.b16 %v253, %v249
    %v358 = vpack.c.b16 %v254, %v250
    %v359 = vpack.c.b16 %v255, %v251
    %v360 = vpack.c.b16 %v260, %v256
    %v361 = vpack.c.b16 %v261, %v257
    %v362 = vpack.c.b16 %v262, %v258
    %v363 = vpack.c.b16 %v263, %v259
    %v364 = vpack.c.b16 %v268, %v264
    %v365 = vpack.c.b16 %v269, %v265
    %v366 = vpack.c.b16 %v270, %v266
    %v367 = vpack.c.b16 %v271, %v267
    %v368 = vpack.c.b16 %v276, %v272
    %v369 = vpack.c.b16 %v277, %v273
    %v370 = vpack.c.b16 %v278, %v274
    %v371 = vpack.c.b16 %v279, %v275
    %v372 = vpack.c.b16 %v284, %v280
    %v373 = vpack.c.b16 %v285, %v281
    %v374 = vpack.c.b16 %v286, %v282
    %v375 = vpack.c.b16 %v287, %v283
    %v376 = vpack.c.b16 %v292, %v288
    %v377 = vpack.c.b16 %v293, %v289
    %v378 = vpack.c.b16 %v294, %v290
    %v379 = vpack.c.b16 %v295, %v291
    %v380 = vpack.c.b16 %v300, %v296
    %v381 = vpack.c.b16 %v301, %v297
    %v382 = vpack.c.b16 %v302, %v298
    %v383 = vpack.c.b16 %v303, %v299
    %v384 = vpack.c.b16 %v308, %v304
    %v385 = vpack.c.b16 %v309, %v305
    %v386 = vpack.c.b16 %v310, %v306
    %v387 = vpack.c.b16 %v311, %v307
    %v388 = vpack.c.b16 %v316, %v312
    %v389 = vpack.c.b16 %v317, %v313
    %v390 = vpack.c.b16 %v318, %v314
    %v391 = vpack.c.b16 %v319, %v315
    %v392 = vpack.c.b16 %v324, %v320
    %v393 = vpack.c.b16 %v325, %v321
    %v394 = vpack.c.b16 %v326, %v322
    %v395 = vpack.c.b16 %v327, %v323
    %v396 = vpack.c.b16 %v332, %v328
    %v397 = vpack.c.b16 %v333, %v329
    %v398 = vpack.c.b16 %v334, %v330
    %v399 = vpack.c.b16 %v335, %v331
    %464 = vmatprep.subr.bf16.mxu0 %v337
    %465 = vmatpush1.bf16.msra.mxu0 %v336
    %466 = vmatprep.subr.bf16.mxu0 %v341
    %467 = vmatpush1.bf16.msra.mxu0 %v340
    %468 = vmatprep.subr.bf16.mxu0 %v345
    %469 = vmatpush1.bf16.msra.mxu0 %v344
    %470 = vmatprep.subr.bf16.mxu0 %v349
    %471 = vmatpush1.bf16.msra.mxu0 %v348
    %472 = vmatprep.subr.bf16.mxu0 %v353
    %473 = vmatpush1.bf16.msra.mxu0 %v352
    %474 = vmatprep.subr.bf16.mxu0 %v357
    %475 = vmatpush1.bf16.msra.mxu0 %v356
    %476 = vmatprep.subr.bf16.mxu0 %v361
    %477 = vmatpush1.bf16.msra.mxu0 %v360
    %478 = vmatprep.subr.bf16.mxu0 %v365
    %479 = vmatpush1.bf16.msra.mxu0 %v364
    %480 = vmatprep.subr.bf16.mxu0 %v369
    %481 = vmatpush1.bf16.msra.mxu0 %v368
    %482 = vmatprep.subr.bf16.mxu0 %v373
    %483 = vmatpush1.bf16.msra.mxu0 %v372
    %484 = vmatprep.subr.bf16.mxu0 %v377
    %485 = vmatpush1.bf16.msra.mxu0 %v376
    %486 = vmatprep.subr.bf16.mxu0 %v381
    %487 = vmatpush1.bf16.msra.mxu0 %v380
    %488 = vmatprep.subr.bf16.mxu0 %v385
    %489 = vmatpush1.bf16.msra.mxu0 %v384
    %490 = vmatprep.subr.bf16.mxu0 %v389
    %491 = vmatpush1.bf16.msra.mxu0 %v388
    %492 = vmatprep.subr.bf16.mxu0 %v393
    %493 = vmatpush1.bf16.msra.mxu0 %v392
    %494 = vmatprep.subr.bf16.mxu0 %v397
    %495 = vmatpush1.bf16.msra.mxu0 %v396
    %496 = vmatprep.mubr.bf16.mxu0 0
    %497 = vmatmul.mubr.bf16.gmra.mrb[0].mxu0 0
    %v498 = vpop.f32.mrb[0].mxu0
    %v499 = vadd.f32 %v140, %v498
    %v500 = vpop.f32.mrb[0].mxu0
    %v501 = vadd.f32 %v141, %v500
    %v502 = vpop.f32.mrb[0].mxu0
    %v503 = vpop.f32.mrb[0].mxu0
    %504 = vdwg.mxu0
    %505 = vmatprep.subr.bf16.mxu0 %v339
    %506 = vmatpush1.bf16.msra.mxu0 %v338
    %507 = vmatprep.subr.bf16.mxu0 %v343
    %508 = vmatpush1.bf16.msra.mxu0 %v342
    %509 = vmatprep.subr.bf16.mxu0 %v347
    %510 = vmatpush1.bf16.msra.mxu0 %v346
    %511 = vmatprep.subr.bf16.mxu0 %v351
    %512 = vmatpush1.bf16.msra.mxu0 %v350
    %513 = vmatprep.subr.bf16.mxu0 %v355
    %514 = vmatpush1.bf16.msra.mxu0 %v354
    %515 = vmatprep.subr.bf16.mxu0 %v359
    %516 = vmatpush1.bf16.msra.mxu0 %v358
    %517 = vmatprep.subr.bf16.mxu0 %v363
    %518 = vmatpush1.bf16.msra.mxu0 %v362
    %519 = vmatprep.subr.bf16.mxu0 %v367
    %520 = vmatpush1.bf16.msra.mxu0 %v366
    %521 = vmatprep.subr.bf16.mxu0 %v371
    %522 = vmatpush1.bf16.msra.mxu0 %v370
    %523 = vmatprep.subr.bf16.mxu0 %v375
    %524 = vmatpush1.bf16.msra.mxu0 %v374
    %525 = vmatprep.subr.bf16.mxu0 %v379
    %526 = vmatpush1.bf16.msra.mxu0 %v378
    %527 = vmatprep.subr.bf16.mxu0 %v383
    %528 = vmatpush1.bf16.msra.mxu0 %v382
    %529 = vmatprep.subr.bf16.mxu0 %v387
    %530 = vmatpush1.bf16.msra.mxu0 %v386
    %531 = vmatprep.subr.bf16.mxu0 %v391
    %532 = vmatpush1.bf16.msra.mxu0 %v390
    %533 = vmatprep.subr.bf16.mxu0 %v395
    %534 = vmatpush1.bf16.msra.mxu0 %v394
    %535 = vmatprep.subr.bf16.mxu0 %v399
    %536 = vmatpush1.bf16.msra.mxu0 %v398
    %537 = vmatprep.mubr.bf16.mxu0 0
    %538 = vmatmul.mubr.bf16.gmra.mrb[0].mxu0 0
    %v539 = vpop.f32.mrb[0].mxu0
    %v540 = vadd.f32 %v142, %v539
    %v541 = vpop.f32.mrb[0].mxu0
    %v542 = vadd.f32 %v143, %v541
    %v543 = vpop.f32.mrb[0].mxu0
    %v544 = vpop.f32.mrb[0].mxu0
    %545 = vdwg.mxu0
    %v546 = vxor.u32 %v499, 2147483648
    %v547 = vmul.f32 %v546, 1.442695
    %v548 = vpow.pop %v547
    %v549 = vadd.f32 %v548, 1.0
    %v550 = vrcp.pop %v549
    %v551 = vmul.f32 1.0, %v550
    %v552 = vxor.u32 %v501, 2147483648
    %v553 = vmul.f32 %v552, 1.442695
    %v554 = vpow.pop %v553
    %v555 = vadd.f32 %v554, 1.0
    %v556 = vrcp.pop %v555
    %v557 = vmul.f32 1.0, %v556
    %v558 = vtanh.pop %v540
    %v559 = vxor.u32 %v542, 2147483648
    %v560 = vmul.f32 %v559, 1.442695
    %v561 = vpow.pop %v560
    %v562 = vadd.f32 %v561, 1.0
    %v563 = vrcp.pop %v562
    %v564 = vmul.f32 1.0, %v563
    %v565 = vmul.f32 %v557, 0.0
    %v566 = vmul.f32 %v551, %v558
    %v567 = vadd.f32 %v565, %v566
    %v568 = vtanh.pop %v567
    %v569 = vmul.f32 %v564, %v568
    %v570 = vpack.c.bf16 %v569, %v569
    %v571 = vld [vmem:[#allocation4] sm:$0xf]
    %v572 = vld [vmem:[#allocation4 + $0x4] sm:$0xf]
    %v573 = vld [vmem:[#allocation4 + $0x8] sm:$0xf]
    %v574 = vld [vmem:[#allocation4 + $0xc] sm:$0xf]
    %v575 = vld [vmem:[#allocation4 + $0x10] sm:$0xf]
    %v576 = vld [vmem:[#allocation4 + $0x14] sm:$0xf]
    %v577 = vld [vmem:[#allocation4 + $0x18] sm:$0xf]
    %v578 = vld [vmem:[#allocation4 + $0x1c] sm:$0xf]
    %v579 = vld [vmem:[#allocation4 + $0x20] sm:$0xf]
    %v580 = vld [vmem:[#allocation4 + $0x24] sm:$0xf]
    %v581 = vld [vmem:[#allocation4 + $0x28] sm:$0xf]
    %v582 = vld [vmem:[#allocation4 + $0x2c] sm:$0xf]
    %v583 = vld [vmem:[#allocation4 + $0x30] sm:$0xf]
    %v584 = vld [vmem:[#allocation4 + $0x34] sm:$0xf]
    %v585 = vld [vmem:[#allocation4 + $0x38] sm:$0xf]
    %v586 = vld [vmem:[#allocation4 + $0x3c] sm:$0xf]
    %v603 = vunpack.c.l.b16 %v571
    %v604 = vunpack.c.l.b16 %v572
    %v605 = vunpack.c.l.b16 %v573
    %v606 = vunpack.c.l.b16 %v574
    %v607 = vunpack.c.l.b16 %v575
    %v608 = vunpack.c.l.b16 %v576
    %v609 = vunpack.c.l.b16 %v577
    %v610 = vunpack.c.l.b16 %v578
    %v611 = vunpack.c.l.b16 %v579
    %v612 = vunpack.c.l.b16 %v580
    %v613 = vunpack.c.l.b16 %v581
    %v614 = vunpack.c.l.b16 %v582
    %v615 = vunpack.c.l.b16 %v583
    %v616 = vunpack.c.l.b16 %v584
    %v617 = vunpack.c.l.b16 %v585
    %v618 = vunpack.c.l.b16 %v586
    %v619 = vpack.c.b16 %v604, %v603
    %v620 = vpack.c.b16 %v606, %v605
    %v621 = vpack.c.b16 %v608, %v607
    %v622 = vpack.c.b16 %v610, %v609
    %v623 = vpack.c.b16 %v612, %v611
    %v624 = vpack.c.b16 %v614, %v613
    %v625 = vpack.c.b16 %v616, %v615
    %v626 = vpack.c.b16 %v618, %v617
    %635 = vmatprep.subr.bf16.mxu0 0
    %636 = vmatpush1.bf16.msra.mxu0 %v619
    %637 = vmatprep.subr.bf16.mxu0 0
    %638 = vmatpush1.bf16.msra.mxu0 %v620
    %639 = vmatprep.subr.bf16.mxu0 0
    %640 = vmatpush1.bf16.msra.mxu0 %v621
    %641 = vmatprep.subr.bf16.mxu0 0
    %642 = vmatpush1.bf16.msra.mxu0 %v622
    %643 = vmatprep.subr.bf16.mxu0 0
    %644 = vmatpush1.bf16.msra.mxu0 %v623
    %645 = vmatprep.subr.bf16.mxu0 0
    %646 = vmatpush1.bf16.msra.mxu0 %v624
    %647 = vmatprep.subr.bf16.mxu0 0
    %648 = vmatpush1.bf16.msra.mxu0 %v625
    %649 = vmatprep.subr.bf16.mxu0 0
    %650 = vmatpush1.bf16.msra.mxu0 %v626
    %651 = vmatprep.subr.bf16.mxu0 0
    %652 = vmatpush1.bf16.msra.mxu0 0
    %653 = vmatprep.subr.bf16.mxu0 0
    %654 = vmatpush1.bf16.msra.mxu0 0
    %655 = vmatprep.subr.bf16.mxu0 0
    %656 = vmatpush1.bf16.msra.mxu0 0
    %657 = vmatprep.subr.bf16.mxu0 0
    %658 = vmatpush1.bf16.msra.mxu0 0
    %659 = vmatprep.subr.bf16.mxu0 0
    %660 = vmatpush1.bf16.msra.mxu0 0
    %661 = vmatprep.subr.bf16.mxu0 0
    %662 = vmatpush1.bf16.msra.mxu0 0
    %663 = vmatprep.subr.bf16.mxu0 0
    %664 = vmatpush1.bf16.msra.mxu0 0
    %665 = vmatprep.subr.bf16.mxu0 0
    %666 = vmatpush1.bf16.msra.mxu0 0
    %667 = vmatprep.mubr.bf16.mxu0 0
    %668 = vmatmul.mubr.bf16.gmra.mrb[0].mxu0 %v570
    %v669 = vpop.f32.mrb[0].mxu0
    %v670 = vadd.f32 0.0, %v669
    %v671 = vpop.f32.mrb[0].mxu0
    %v672 = vpop.f32.mrb[0].mxu0
    %v673 = vpop.f32.mrb[0].mxu0
    %674 = vdwg.mxu0
    %vm675 = vcmp.lt.s32.totalorder %v75, 4
    %v676 = vsel %vm675, %v670, -1e+30
    %677 = vmax.xlane.f32.xlu0 %v676
    %v678 = vpop.xlane.xlu0 %677
    %v679 = vsub.f32 %v676, %v678
    %v680 = vmul.f32 %v679, 1.442695
    %v681 = vpow.pop %v680
    %682 = vadd.xlane.f32.xlu0 %v681
    %v683 = vpop.xlane.xlu0 %682
    %v684 = vlog2.pop %v683
    %v685 = vmul.f32 %v684, 0.6931472
    %v686 = vsub.f32 %v679, %v685
    %v687 = vrcp.pop %v683
    %v688 = vmul.f32 %v681, %v687
    %v689 = vmul.f32 %v688, %v686
    %v690 = vsel %vm675, %v689, 0.0
    %691 = vadd.xlane.f32.xlu0 %v690
    %v692 = vpop.xlane.xlu0 %691
    %v693 = vsub.f32 0.0, %v692
    %v694 = vld [vmem:[#allocation7] sm:$0xff]
    %v695 = vadd.f32 %v676, %v694
    %696 = vmax.xlane.f32.xlu0 %v695
    %v697 = vpop.xlane.xlu0 %696
    %vm698 = vcmp.eq.f32.partialorder %v695, %v697
    %v699 = vsel %vm698, %v75, 128
    %v700 = vand.u32 %v699, 65535
    %v701 = vshra.s32 %v699, 16
    %v702 = vcvt.s32.f32 %v700
    %v703 = vcvt.s32.f32 %v701
    %704 = vmin.xlane.f32.xlu0 %v703
    %v705 = vpop.xlane.xlu0 %704
    %vm706 = vcmp.eq.f32.partialorder %v703, %v705
    %v707 = vsel %vm706, %v702, inf
    %708 = vmin.xlane.f32.xlu0 %v707
    %v709 = vpop.xlane.xlu0 %708
    %v710 = vcvt.f32.s32 %v709
    %v711 = vcvt.f32.s32 %v705
    %v712 = vshll.u32 %v711, 16
    %v713 = vadd.s32 %v712, %v710
    %vm714 = vcmp.eq.s32.totalorder %v75, %v713
    %v715 = vsel %vm714, 1, 0
    %v716 = vcvt.s32.f32 %v715
    %v717 = vpack.c.bf16 %v716, %v716
    %v718 = vsel %vm714, %v686, 0.0
    %719 = vadd.xlane.f32.xlu0 %v718
    %v720 = vpop.xlane.xlu0 %719
    %vm721 = vcmask 7168
    %722 = vst.msk [vmem:[%s4] sm:$0xff] %vm721, %v713
    %723 = vst.msk [vmem:[%s5] sm:$0xff] %vm721, %v720
    %724 = vst.msk [vmem:[%s6] sm:$0xff] %vm721, %v693
    %s725 = scalar_lea.vmem [#allocation2], 512
    %v726 = vld [vmem:[%s725] sm:$0xff]
    %v727 = vld [vmem:[%s725 + $0x8] sm:$0xff]
    %v728 = vld [vmem:[%s725 + $0x10] sm:$0xff]
    %v729 = vld [vmem:[%s725 + $0x18] sm:$0xff]
    %v730 = vld [vmem:[%s725 + $0x20] sm:$0xff]
    %v731 = vld [vmem:[%s725 + $0x28] sm:$0xff]
    %v732 = vld [vmem:[%s725 + $0x30] sm:$0xff]
    %v733 = vld [vmem:[%s725 + $0x38] sm:$0xff]
    %v734 = vld [vmem:[%s725 + $0x40] sm:$0xff]
    %v735 = vld [vmem:[%s725 + $0x48] sm:$0xff]
    %v736 = vld [vmem:[%s725 + $0x50] sm:$0xff]
    %v737 = vld [vmem:[%s725 + $0x58] sm:$0xff]
    %v738 = vld [vmem:[%s725 + $0x60] sm:$0xff]
    %v739 = vld [vmem:[%s725 + $0x68] sm:$0xff]
    %v740 = vld [vmem:[%s725 + $0x70] sm:$0xff]
    %v741 = vld [vmem:[%s725 + $0x78] sm:$0xff]
    %v742 = vld [vmem:[%s725 + $0x80] sm:$0xff]
    %v743 = vld [vmem:[%s725 + $0x88] sm:$0xff]
    %v744 = vld [vmem:[%s725 + $0x90] sm:$0xff]
    %v745 = vld [vmem:[%s725 + $0x98] sm:$0xff]
    %v746 = vld [vmem:[%s725 + $0xa0] sm:$0xff]
    %v747 = vld [vmem:[%s725 + $0xa8] sm:$0xff]
    %v748 = vld [vmem:[%s725 + $0xb0] sm:$0xff]
    %v749 = vld [vmem:[%s725 + $0xb8] sm:$0xff]
    %v750 = vld [vmem:[%s725 + $0xc0] sm:$0xff]
    %v751 = vld [vmem:[%s725 + $0xc8] sm:$0xff]
    %v752 = vld [vmem:[%s725 + $0xd0] sm:$0xff]
    %v753 = vld [vmem:[%s725 + $0xd8] sm:$0xff]
    %v754 = vld [vmem:[%s725 + $0xe0] sm:$0xff]
    %v755 = vld [vmem:[%s725 + $0xe8] sm:$0xff]
    %v756 = vld [vmem:[%s725 + $0xf0] sm:$0xff]
    %v757 = vld [vmem:[%s725 + $0xf8] sm:$0xff]
    %v758 = vld [vmem:[%s725 + $0x100] sm:$0xff]
    %v759 = vld [vmem:[%s725 + $0x108] sm:$0xff]
    %v760 = vld [vmem:[%s725 + $0x110] sm:$0xff]
    %v761 = vld [vmem:[%s725 + $0x118] sm:$0xff]
    %v762 = vld [vmem:[%s725 + $0x120] sm:$0xff]
    %v763 = vld [vmem:[%s725 + $0x128] sm:$0xff]
    %v764 = vld [vmem:[%s725 + $0x130] sm:$0xff]
    %v765 = vld [vmem:[%s725 + $0x138] sm:$0xff]
    %v766 = vld [vmem:[%s725 + $0x140] sm:$0xff]
    %v767 = vld [vmem:[%s725 + $0x148] sm:$0xff]
    %v768 = vld [vmem:[%s725 + $0x150] sm:$0xff]
    %v769 = vld [vmem:[%s725 + $0x158] sm:$0xff]
    %v770 = vld [vmem:[%s725 + $0x160] sm:$0xff]
    %v771 = vld [vmem:[%s725 + $0x168] sm:$0xff]
    %v772 = vld [vmem:[%s725 + $0x170] sm:$0xff]
    %v773 = vld [vmem:[%s725 + $0x178] sm:$0xff]
    %v774 = vld [vmem:[%s725 + $0x180] sm:$0xff]
    %v775 = vld [vmem:[%s725 + $0x188] sm:$0xff]
    %v776 = vld [vmem:[%s725 + $0x190] sm:$0xff]
    %v777 = vld [vmem:[%s725 + $0x198] sm:$0xff]
    %v778 = vld [vmem:[%s725 + $0x1a0] sm:$0xff]
    %v779 = vld [vmem:[%s725 + $0x1a8] sm:$0xff]
    %v780 = vld [vmem:[%s725 + $0x1b0] sm:$0xff]
    %v781 = vld [vmem:[%s725 + $0x1b8] sm:$0xff]
    %v782 = vld [vmem:[%s725 + $0x1c0] sm:$0xff]
    %v783 = vld [vmem:[%s725 + $0x1c8] sm:$0xff]
    %v784 = vld [vmem:[%s725 + $0x1d0] sm:$0xff]
    %v785 = vld [vmem:[%s725 + $0x1d8] sm:$0xff]
    %v786 = vld [vmem:[%s725 + $0x1e0] sm:$0xff]
    %v787 = vld [vmem:[%s725 + $0x1e8] sm:$0xff]
    %v788 = vld [vmem:[%s725 + $0x1f0] sm:$0xff]
    %v789 = vld [vmem:[%s725 + $0x1f8] sm:$0xff]
    %v790 = vld [vmem:[#allocation6] sm:$0xff]
    %v791 = vld [vmem:[#allocation6 + $0x8] sm:$0xff]
    %v792 = vld [vmem:[#allocation6 + $0x10] sm:$0xff]
    %v793 = vld [vmem:[#allocation6 + $0x18] sm:$0xff]
    %v858 = vunpack.c.l.b16 %v726
    %v859 = vunpack.c.h.b16 %v726
    %v860 = vunpack.c.l.b16 %v727
    %v861 = vunpack.c.h.b16 %v727
    %v862 = vunpack.c.l.b16 %v728
    %v863 = vunpack.c.h.b16 %v728
    %v864 = vunpack.c.l.b16 %v729
    %v865 = vunpack.c.h.b16 %v729
    %v866 = vunpack.c.l.b16 %v730
    %v867 = vunpack.c.h.b16 %v730
    %v868 = vunpack.c.l.b16 %v731
    %v869 = vunpack.c.h.b16 %v731
    %v870 = vunpack.c.l.b16 %v732
    %v871 = vunpack.c.h.b16 %v732
    %v872 = vunpack.c.l.b16 %v733
    %v873 = vunpack.c.h.b16 %v733
    %v874 = vunpack.c.l.b16 %v734
    %v875 = vunpack.c.h.b16 %v734
    %v876 = vunpack.c.l.b16 %v735
    %v877 = vunpack.c.h.b16 %v735
    %v878 = vunpack.c.l.b16 %v736
    %v879 = vunpack.c.h.b16 %v736
    %v880 = vunpack.c.l.b16 %v737
    %v881 = vunpack.c.h.b16 %v737
    %v882 = vunpack.c.l.b16 %v738
    %v883 = vunpack.c.h.b16 %v738
    %v884 = vunpack.c.l.b16 %v739
    %v885 = vunpack.c.h.b16 %v739
    %v886 = vunpack.c.l.b16 %v740
    %v887 = vunpack.c.h.b16 %v740
    %v888 = vunpack.c.l.b16 %v741
    %v889 = vunpack.c.h.b16 %v741
    %v890 = vunpack.c.l.b16 %v742
    %v891 = vunpack.c.h.b16 %v742
    %v892 = vunpack.c.l.b16 %v743
    %v893 = vunpack.c.h.b16 %v743
    %v894 = vunpack.c.l.b16 %v744
    %v895 = vunpack.c.h.b16 %v744
    %v896 = vunpack.c.l.b16 %v745
    %v897 = vunpack.c.h.b16 %v745
    %v898 = vunpack.c.l.b16 %v746
    %v899 = vunpack.c.h.b16 %v746
    %v900 = vunpack.c.l.b16 %v747
    %v901 = vunpack.c.h.b16 %v747
    %v902 = vunpack.c.l.b16 %v748
    %v903 = vunpack.c.h.b16 %v748
    %v904 = vunpack.c.l.b16 %v749
    %v905 = vunpack.c.h.b16 %v749
    %v906 = vunpack.c.l.b16 %v750
    %v907 = vunpack.c.h.b16 %v750
    %v908 = vunpack.c.l.b16 %v751
    %v909 = vunpack.c.h.b16 %v751
    %v910 = vunpack.c.l.b16 %v752
    %v911 = vunpack.c.h.b16 %v752
    %v912 = vunpack.c.l.b16 %v753
    %v913 = vunpack.c.h.b16 %v753
    %v914 = vunpack.c.l.b16 %v754
    %v915 = vunpack.c.h.b16 %v754
    %v916 = vunpack.c.l.b16 %v755
    %v917 = vunpack.c.h.b16 %v755
    %v918 = vunpack.c.l.b16 %v756
    %v919 = vunpack.c.h.b16 %v756
    %v920 = vunpack.c.l.b16 %v757
    %v921 = vunpack.c.h.b16 %v757
    %v922 = vunpack.c.l.b16 %v758
    %v923 = vunpack.c.h.b16 %v758
    %v924 = vunpack.c.l.b16 %v759
    %v925 = vunpack.c.h.b16 %v759
    %v926 = vunpack.c.l.b16 %v760
    %v927 = vunpack.c.h.b16 %v760
    %v928 = vunpack.c.l.b16 %v761
    %v929 = vunpack.c.h.b16 %v761
    %v930 = vunpack.c.l.b16 %v762
    %v931 = vunpack.c.h.b16 %v762
    %v932 = vunpack.c.l.b16 %v763
    %v933 = vunpack.c.h.b16 %v763
    %v934 = vunpack.c.l.b16 %v764
    %v935 = vunpack.c.h.b16 %v764
    %v936 = vunpack.c.l.b16 %v765
    %v937 = vunpack.c.h.b16 %v765
    %v938 = vunpack.c.l.b16 %v766
    %v939 = vunpack.c.h.b16 %v766
    %v940 = vunpack.c.l.b16 %v767
    %v941 = vunpack.c.h.b16 %v767
    %v942 = vunpack.c.l.b16 %v768
    %v943 = vunpack.c.h.b16 %v768
    %v944 = vunpack.c.l.b16 %v769
    %v945 = vunpack.c.h.b16 %v769
    %v946 = vunpack.c.l.b16 %v770
    %v947 = vunpack.c.h.b16 %v770
    %v948 = vunpack.c.l.b16 %v771
    %v949 = vunpack.c.h.b16 %v771
    %v950 = vunpack.c.l.b16 %v772
    %v951 = vunpack.c.h.b16 %v772
    %v952 = vunpack.c.l.b16 %v773
    %v953 = vunpack.c.h.b16 %v773
    %v954 = vunpack.c.l.b16 %v774
    %v955 = vunpack.c.h.b16 %v774
    %v956 = vunpack.c.l.b16 %v775
    %v957 = vunpack.c.h.b16 %v775
    %v958 = vunpack.c.l.b16 %v776
    %v959 = vunpack.c.h.b16 %v776
    %v960 = vunpack.c.l.b16 %v777
    %v961 = vunpack.c.h.b16 %v777
    %v962 = vunpack.c.l.b16 %v778
    %v963 = vunpack.c.h.b16 %v778
    %v964 = vunpack.c.l.b16 %v779
    %v965 = vunpack.c.h.b16 %v779
    %v966 = vunpack.c.l.b16 %v780
    %v967 = vunpack.c.h.b16 %v780
    %v968 = vunpack.c.l.b16 %v781
    %v969 = vunpack.c.h.b16 %v781
    %v970 = vunpack.c.l.b16 %v782
    %v971 = vunpack.c.h.b16 %v782
    %v972 = vunpack.c.l.b16 %v783
    %v973 = vunpack.c.h.b16 %v783
    %v974 = vunpack.c.l.b16 %v784
    %v975 = vunpack.c.h.b16 %v784
    %v976 = vunpack.c.l.b16 %v785
    %v977 = vunpack.c.h.b16 %v785
    %v978 = vunpack.c.l.b16 %v786
    %v979 = vunpack.c.h.b16 %v786
    %v980 = vunpack.c.l.b16 %v787
    %v981 = vunpack.c.h.b16 %v787
    %v982 = vunpack.c.l.b16 %v788
    %v983 = vunpack.c.h.b16 %v788
    %v984 = vunpack.c.l.b16 %v789
    %v985 = vunpack.c.h.b16 %v789
    %v986 = vpack.c.b16 %v862, %v858
    %v987 = vpack.c.b16 %v863, %v859
    %v988 = vpack.c.b16 %v864, %v860
    %v989 = vpack.c.b16 %v865, %v861
    %v990 = vpack.c.b16 %v870, %v866
    %v991 = vpack.c.b16 %v871, %v867
    %v992 = vpack.c.b16 %v872, %v868
    %v993 = vpack.c.b16 %v873, %v869
    %v994 = vpack.c.b16 %v878, %v874
    %v995 = vpack.c.b16 %v879, %v875
    %v996 = vpack.c.b16 %v880, %v876
    %v997 = vpack.c.b16 %v881, %v877
    %v998 = vpack.c.b16 %v886, %v882
    %v999 = vpack.c.b16 %v887, %v883
    %v1000 = vpack.c.b16 %v888, %v884
    %v1001 = vpack.c.b16 %v889, %v885
    %v1002 = vpack.c.b16 %v894, %v890
    %v1003 = vpack.c.b16 %v895, %v891
    %v1004 = vpack.c.b16 %v896, %v892
    %v1005 = vpack.c.b16 %v897, %v893
    %v1006 = vpack.c.b16 %v902, %v898
    %v1007 = vpack.c.b16 %v903, %v899
    %v1008 = vpack.c.b16 %v904, %v900
    %v1009 = vpack.c.b16 %v905, %v901
    %v1010 = vpack.c.b16 %v910, %v906
    %v1011 = vpack.c.b16 %v911, %v907
    %v1012 = vpack.c.b16 %v912, %v908
    %v1013 = vpack.c.b16 %v913, %v909
    %v1014 = vpack.c.b16 %v918, %v914
    %v1015 = vpack.c.b16 %v919, %v915
    %v1016 = vpack.c.b16 %v920, %v916
    %v1017 = vpack.c.b16 %v921, %v917
    %v1018 = vpack.c.b16 %v926, %v922
    %v1019 = vpack.c.b16 %v927, %v923
    %v1020 = vpack.c.b16 %v928, %v924
    %v1021 = vpack.c.b16 %v929, %v925
    %v1022 = vpack.c.b16 %v934, %v930
    %v1023 = vpack.c.b16 %v935, %v931
    %v1024 = vpack.c.b16 %v936, %v932
    %v1025 = vpack.c.b16 %v937, %v933
    %v1026 = vpack.c.b16 %v942, %v938
    %v1027 = vpack.c.b16 %v943, %v939
    %v1028 = vpack.c.b16 %v944, %v940
    %v1029 = vpack.c.b16 %v945, %v941
    %v1030 = vpack.c.b16 %v950, %v946
    %v1031 = vpack.c.b16 %v951, %v947
    %v1032 = vpack.c.b16 %v952, %v948
    %v1033 = vpack.c.b16 %v953, %v949
    %v1034 = vpack.c.b16 %v958, %v954
    %v1035 = vpack.c.b16 %v959, %v955
    %v1036 = vpack.c.b16 %v960, %v956
    %v1037 = vpack.c.b16 %v961, %v957
    %v1038 = vpack.c.b16 %v966, %v962
    %v1039 = vpack.c.b16 %v967, %v963
    %v1040 = vpack.c.b16 %v968, %v964
    %v1041 = vpack.c.b16 %v969, %v965
    %v1042 = vpack.c.b16 %v974, %v970
    %v1043 = vpack.c.b16 %v975, %v971
    %v1044 = vpack.c.b16 %v976, %v972
    %v1045 = vpack.c.b16 %v977, %v973
    %v1046 = vpack.c.b16 %v982, %v978
    %v1047 = vpack.c.b16 %v983, %v979
    %v1048 = vpack.c.b16 %v984, %v980
    %v1049 = vpack.c.b16 %v985, %v981
    %1114 = vmatprep.subr.bf16.mxu0 %v987
    %1115 = vmatpush1.bf16.msra.mxu0 %v986
    %1116 = vmatprep.subr.bf16.mxu0 %v991
    %1117 = vmatpush1.bf16.msra.mxu0 %v990
    %1118 = vmatprep.subr.bf16.mxu0 %v995
    %1119 = vmatpush1.bf16.msra.mxu0 %v994
    %1120 = vmatprep.subr.bf16.mxu0 %v999
    %1121 = vmatpush1.bf16.msra.mxu0 %v998
    %1122 = vmatprep.subr.bf16.mxu0 %v1003
    %1123 = vmatpush1.bf16.msra.mxu0 %v1002
    %1124 = vmatprep.subr.bf16.mxu0 %v1007
    %1125 = vmatpush1.bf16.msra.mxu0 %v1006
    %1126 = vmatprep.subr.bf16.mxu0 %v1011
    %1127 = vmatpush1.bf16.msra.mxu0 %v1010
    %1128 = vmatprep.subr.bf16.mxu0 %v1015
    %1129 = vmatpush1.bf16.msra.mxu0 %v1014
    %1130 = vmatprep.subr.bf16.mxu0 %v1019
    %1131 = vmatpush1.bf16.msra.mxu0 %v1018
    %1132 = vmatprep.subr.bf16.mxu0 %v1023
    %1133 = vmatpush1.bf16.msra.mxu0 %v1022
    %1134 = vmatprep.subr.bf16.mxu0 %v1027
    %1135 = vmatpush1.bf16.msra.mxu0 %v1026
    %1136 = vmatprep.subr.bf16.mxu0 %v1031
    %1137 = vmatpush1.bf16.msra.mxu0 %v1030
    %1138 = vmatprep.subr.bf16.mxu0 %v1035
    %1139 = vmatpush1.bf16.msra.mxu0 %v1034
    %1140 = vmatprep.subr.bf16.mxu0 %v1039
    %1141 = vmatpush1.bf16.msra.mxu0 %v1038
    %1142 = vmatprep.subr.bf16.mxu0 %v1043
    %1143 = vmatpush1.bf16.msra.mxu0 %v1042
    %1144 = vmatprep.subr.bf16.mxu0 %v1047
    %1145 = vmatpush1.bf16.msra.mxu0 %v1046
    %1146 = vmatprep.mubr.bf16.mxu0 %v570
    %1147 = vmatmul.mubr.bf16.gmra.mrb[0].mxu0 %v717
    %v1148 = vpop.f32.mrb[0].mxu0
    %v1149 = vadd.f32 %v790, %v1148
    %v1150 = vpop.f32.mrb[0].mxu0
    %v1151 = vadd.f32 %v791, %v1150
    %v1152 = vpop.f32.mrb[0].mxu0
    %v1153 = vpop.f32.mrb[0].mxu0
    %1154 = vdwg.mxu0
    %1155 = vmatprep.subr.bf16.mxu0 %v989
    %1156 = vmatpush1.bf16.msra.mxu0 %v988
    %1157 = vmatprep.subr.bf16.mxu0 %v993
    %1158 = vmatpush1.bf16.msra.mxu0 %v992
    %1159 = vmatprep.subr.bf16.mxu0 %v997
    %1160 = vmatpush1.bf16.msra.mxu0 %v996
    %1161 = vmatprep.subr.bf16.mxu0 %v1001
    %1162 = vmatpush1.bf16.msra.mxu0 %v1000
    %1163 = vmatprep.subr.bf16.mxu0 %v1005
    %1164 = vmatpush1.bf16.msra.mxu0 %v1004
    %1165 = vmatprep.subr.bf16.mxu0 %v1009
    %1166 = vmatpush1.bf16.msra.mxu0 %v1008
    %1167 = vmatprep.subr.bf16.mxu0 %v1013
    %1168 = vmatpush1.bf16.msra.mxu0 %v1012
    %1169 = vmatprep.subr.bf16.mxu0 %v1017
    %1170 = vmatpush1.bf16.msra.mxu0 %v1016
    %1171 = vmatprep.subr.bf16.mxu0 %v1021
    %1172 = vmatpush1.bf16.msra.mxu0 %v1020
    %1173 = vmatprep.subr.bf16.mxu0 %v1025
    %1174 = vmatpush1.bf16.msra.mxu0 %v1024
    %1175 = vmatprep.subr.bf16.mxu0 %v1029
    %1176 = vmatpush1.bf16.msra.mxu0 %v1028
    %1177 = vmatprep.subr.bf16.mxu0 %v1033
    %1178 = vmatpush1.bf16.msra.mxu0 %v1032
    %1179 = vmatprep.subr.bf16.mxu0 %v1037
    %1180 = vmatpush1.bf16.msra.mxu0 %v1036
    %1181 = vmatprep.subr.bf16.mxu0 %v1041
    %1182 = vmatpush1.bf16.msra.mxu0 %v1040
    %1183 = vmatprep.subr.bf16.mxu0 %v1045
    %1184 = vmatpush1.bf16.msra.mxu0 %v1044
    %1185 = vmatprep.subr.bf16.mxu0 %v1049
    %1186 = vmatpush1.bf16.msra.mxu0 %v1048
    %1187 = vmatprep.mubr.bf16.mxu0 %v570
    %1188 = vmatmul.mubr.bf16.gmra.mrb[0].mxu0 %v717
    %v1189 = vpop.f32.mrb[0].mxu0
    %v1190 = vadd.f32 %v792, %v1189
    %v1191 = vpop.f32.mrb[0].mxu0
    %v1192 = vadd.f32 %v793, %v1191
    %v1193 = vpop.f32.mrb[0].mxu0
    %v1194 = vpop.f32.mrb[0].mxu0
    %1195 = vdwg.mxu0
    %v1196 = vxor.u32 %v1149, 2147483648
    %v1197 = vmul.f32 %v1196, 1.442695
    %v1198 = vpow.pop %v1197
    %v1199 = vadd.f32 %v1198, 1.0
    %v1200 = vrcp.pop %v1199
    %v1201 = vmul.f32 1.0, %v1200
    %v1202 = vxor.u32 %v1151, 2147483648
    %v1203 = vmul.f32 %v1202, 1.442695
    %v1204 = vpow.pop %v1203
    %v1205 = vadd.f32 %v1204, 1.0
    %v1206 = vrcp.pop %v1205
    %v1207 = vmul.f32 1.0, %v1206
    %v1208 = vtanh.pop %v1190
    %v1209 = vxor.u32 %v1192, 2147483648
    %v1210 = vmul.f32 %v1209, 1.442695
    %v1211 = vpow.pop %v1210
    %v1212 = vadd.f32 %v1211, 1.0
    %v1213 = vrcp.pop %v1212
    %v1214 = vmul.f32 1.0, %v1213
    %v1215 = vmul.f32 %v1207, %v567
    %v1216 = vmul.f32 %v1201, %v1208
    %v1217 = vadd.f32 %v1215, %v1216
    %v1218 = vtanh.pop %v1217
    %v1219 = vmul.f32 %v1214, %v1218
    %v1220 = vpack.c.bf16 %v1219, %v1219
    %s1221 = scalar_lea.vmem [#allocation4], 64
    %v1222 = vld [vmem:[%s1221] sm:$0xf]
    %v1223 = vld [vmem:[%s1221 + $0x4] sm:$0xf]
    %v1224 = vld [vmem:[%s1221 + $0x8] sm:$0xf]
    %v1225 = vld [vmem:[%s1221 + $0xc] sm:$0xf]
    %v1226 = vld [vmem:[%s1221 + $0x10] sm:$0xf]
    %v1227 = vld [vmem:[%s1221 + $0x14] sm:$0xf]
    %v1228 = vld [vmem:[%s1221 + $0x18] sm:$0xf]
    %v1229 = vld [vmem:[%s1221 + $0x1c] sm:$0xf]
    %v1230 = vld [vmem:[%s1221 + $0x20] sm:$0xf]
    %v1231 = vld [vmem:[%s1221 + $0x24] sm:$0xf]
    %v1232 = vld [vmem:[%s1221 + $0x28] sm:$0xf]
    %v1233 = vld [vmem:[%s1221 + $0x2c] sm:$0xf]
    %v1234 = vld [vmem:[%s1221 + $0x30] sm:$0xf]
    %v1235 = vld [vmem:[%s1221 + $0x34] sm:$0xf]
    %v1236 = vld [vmem:[%s1221 + $0x38] sm:$0xf]
    %v1237 = vld [vmem:[%s1221 + $0x3c] sm:$0xf]
    %v1254 = vunpack.c.l.b16 %v1222
    %v1255 = vunpack.c.l.b16 %v1223
    %v1256 = vunpack.c.l.b16 %v1224
    %v1257 = vunpack.c.l.b16 %v1225
    %v1258 = vunpack.c.l.b16 %v1226
    %v1259 = vunpack.c.l.b16 %v1227
    %v1260 = vunpack.c.l.b16 %v1228
    %v1261 = vunpack.c.l.b16 %v1229
    %v1262 = vunpack.c.l.b16 %v1230
    %v1263 = vunpack.c.l.b16 %v1231
    %v1264 = vunpack.c.l.b16 %v1232
    %v1265 = vunpack.c.l.b16 %v1233
    %v1266 = vunpack.c.l.b16 %v1234
    %v1267 = vunpack.c.l.b16 %v1235
    %v1268 = vunpack.c.l.b16 %v1236
    %v1269 = vunpack.c.l.b16 %v1237
    %v1270 = vpack.c.b16 %v1255, %v1254
    %v1271 = vpack.c.b16 %v1257, %v1256
    %v1272 = vpack.c.b16 %v1259, %v1258
    %v1273 = vpack.c.b16 %v1261, %v1260
    %v1274 = vpack.c.b16 %v1263, %v1262
    %v1275 = vpack.c.b16 %v1265, %v1264
    %v1276 = vpack.c.b16 %v1267, %v1266
    %v1277 = vpack.c.b16 %v1269, %v1268
    %1286 = vmatprep.subr.bf16.mxu0 0
    %1287 = vmatpush1.bf16.msra.mxu0 %v1270
    %1288 = vmatprep.subr.bf16.mxu0 0
    %1289 = vmatpush1.bf16.msra.mxu0 %v1271
    %1290 = vmatprep.subr.bf16.mxu0 0
    %1291 = vmatpush1.bf16.msra.mxu0 %v1272
    %1292 = vmatprep.subr.bf16.mxu0 0
    %1293 = vmatpush1.bf16.msra.mxu0 %v1273
    %1294 = vmatprep.subr.bf16.mxu0 0
    %1295 = vmatpush1.bf16.msra.mxu0 %v1274
    %1296 = vmatprep.subr.bf16.mxu0 0
    %1297 = vmatpush1.bf16.msra.mxu0 %v1275
    %1298 = vmatprep.subr.bf16.mxu0 0
    %1299 = vmatpush1.bf16.msra.mxu0 %v1276
    %1300 = vmatprep.subr.bf16.mxu0 0
    %1301 = vmatpush1.bf16.msra.mxu0 %v1277
    %1302 = vmatprep.subr.bf16.mxu0 0
    %1303 = vmatpush1.bf16.msra.mxu0 0
    %1304 = vmatprep.subr.bf16.mxu0 0
    %1305 = vmatpush1.bf16.msra.mxu0 0
    %1306 = vmatprep.subr.bf16.mxu0 0
    %1307 = vmatpush1.bf16.msra.mxu0 0
    %1308 = vmatprep.subr.bf16.mxu0 0
    %1309 = vmatpush1.bf16.msra.mxu0 0
    %1310 = vmatprep.subr.bf16.mxu0 0
    %1311 = vmatpush1.bf16.msra.mxu0 0
    %1312 = vmatprep.subr.bf16.mxu0 0
    %1313 = vmatpush1.bf16.msra.mxu0 0
    %1314 = vmatprep.subr.bf16.mxu0 0
    %1315 = vmatpush1.bf16.msra.mxu0 0
    %1316 = vmatprep.subr.bf16.mxu0 0
    %1317 = vmatpush1.bf16.msra.mxu0 0
    %1318 = vmatprep.mubr.bf16.mxu0 0
    %1319 = vmatmul.mubr.bf16.gmra.mrb[0].mxu0 %v1220
    %v1320 = vpop.f32.mrb[0].mxu0
    %v1321 = vadd.f32 0.0, %v1320
    %v1322 = vpop.f32.mrb[0].mxu0
    %v1323 = vpop.f32.mrb[0].mxu0
    %v1324 = vpop.f32.mrb[0].mxu0
    %1325 = vdwg.mxu0
    %vm1326 = vcmp.lt.s32.totalorder %v75, 1
    %v1327 = vsel %vm1326, %v1321, -1e+30
    %1328 = vmax.xlane.f32.xlu0 %v1327
    %v1329 = vpop.xlane.xlu0 %1328
    %v1330 = vsub.f32 %v1327, %v1329
    %v1331 = vmul.f32 %v1330, 1.442695
    %v1332 = vpow.pop %v1331
    %1333 = vadd.xlane.f32.xlu0 %v1332
    %v1334 = vpop.xlane.xlu0 %1333
    %v1335 = vlog2.pop %v1334
    %v1336 = vmul.f32 %v1335, 0.6931472
    %v1337 = vsub.f32 %v1330, %v1336
    %v1338 = vrcp.pop %v1334
    %v1339 = vmul.f32 %v1332, %v1338
    %v1340 = vmul.f32 %v1339, %v1337
    %v1341 = vsel %vm1326, %v1340, 0.0
    %1342 = vadd.xlane.f32.xlu0 %v1341
    %v1343 = vpop.xlane.xlu0 %1342
    %v1344 = vsub.f32 0.0, %v1343
    %s1345 = scalar_lea.vmem [#allocation7], 8
    %v1346 = vld [vmem:[%s1345] sm:$0xff]
    %v1347 = vadd.f32 %v1327, %v1346
    %1348 = vmax.xlane.f32.xlu0 %v1347
    %v1349 = vpop.xlane.xlu0 %1348
    %vm1350 = vcmp.eq.f32.partialorder %v1347, %v1349
    %v1351 = vsel %vm1350, %v75, 128
    %v1352 = vand.u32 %v1351, 65535
    %v1353 = vshra.s32 %v1351, 16
    %v1354 = vcvt.s32.f32 %v1352
    %v1355 = vcvt.s32.f32 %v1353
    %1356 = vmin.xlane.f32.xlu0 %v1355
    %v1357 = vpop.xlane.xlu0 %1356
    %vm1358 = vcmp.eq.f32.partialorder %v1355, %v1357
    %v1359 = vsel %vm1358, %v1354, inf
    %1360 = vmin.xlane.f32.xlu0 %v1359
    %v1361 = vpop.xlane.xlu0 %1360
    %v1362 = vcvt.f32.s32 %v1361
    %v1363 = vcvt.f32.s32 %v1357
    %v1364 = vshll.u32 %v1363, 16
    %v1365 = vadd.s32 %v1364, %v1362
    %vm1366 = vcmp.eq.s32.totalorder %v75, %v1365
    %v1367 = vsel %vm1366, 1, 0
    %v1368 = vcvt.s32.f32 %v1367
    %v1369 = vpack.c.bf16 %v1368, %v1368
    %v1370 = vsel %vm1366, %v1337, 0.0
    %1371 = vadd.xlane.f32.xlu0 %v1370
    %v1372 = vpop.xlane.xlu0 %1371
    %s1373 = scalar_lea.vmem %s4, 8
    %1374 = vst.msk [vmem:[%s1373] sm:$0xff] %vm721, %v1365
    %s1375 = scalar_lea.vmem %s5, 8
    %1376 = vst.msk [vmem:[%s1375] sm:$0xff] %vm721, %v1372
    %s1377 = scalar_lea.vmem %s6, 8
    %1378 = vst.msk [vmem:[%s1377] sm:$0xff] %vm721, %v1344
    %s1379 = scalar_lea.vmem [#allocation2], 1024
    %v1380 = vld [vmem:[%s1379] sm:$0xff]
    %v1381 = vld [vmem:[%s1379 + $0x8] sm:$0xff]
    %v1382 = vld [vmem:[%s1379 + $0x10] sm:$0xff]
    %v1383 = vld [vmem:[%s1379 + $0x18] sm:$0xff]
    %v1384 = vld [vmem:[%s1379 + $0x20] sm:$0xff]
    %v1385 = vld [vmem:[%s1379 + $0x28] sm:$0xff]
    %v1386 = vld [vmem:[%s1379 + $0x30] sm:$0xff]
    %v1387 = vld [vmem:[%s1379 + $0x38] sm:$0xff]
    %v1388 = vld [vmem:[%s1379 + $0x40] sm:$0xff]
    %v1389 = vld [vmem:[%s1379 + $0x48] sm:$0xff]
    %v1390 = vld [vmem:[%s1379 + $0x50] sm:$0xff]
    %v1391 = vld [vmem:[%s1379 + $0x58] sm:$0xff]
    %v1392 = vld [vmem:[%s1379 + $0x60] sm:$0xff]
    %v1393 = vld [vmem:[%s1379 + $0x68] sm:$0xff]
    %v1394 = vld [vmem:[%s1379 + $0x70] sm:$0xff]
    %v1395 = vld [vmem:[%s1379 + $0x78] sm:$0xff]
    %v1396 = vld [vmem:[%s1379 + $0x80] sm:$0xff]
    %v1397 = vld [vmem:[%s1379 + $0x88] sm:$0xff]
    %v1398 = vld [vmem:[%s1379 + $0x90] sm:$0xff]
    %v1399 = vld [vmem:[%s1379 + $0x98] sm:$0xff]
    %v1400 = vld [vmem:[%s1379 + $0xa0] sm:$0xff]
    %v1401 = vld [vmem:[%s1379 + $0xa8] sm:$0xff]
    %v1402 = vld [vmem:[%s1379 + $0xb0] sm:$0xff]
    %v1403 = vld [vmem:[%s1379 + $0xb8] sm:$0xff]
    %v1404 = vld [vmem:[%s1379 + $0xc0] sm:$0xff]
    %v1405 = vld [vmem:[%s1379 + $0xc8] sm:$0xff]
    %v1406 = vld [vmem:[%s1379 + $0xd0] sm:$0xff]
    %v1407 = vld [vmem:[%s1379 + $0xd8] sm:$0xff]
    %v1408 = vld [vmem:[%s1379 + $0xe0] sm:$0xff]
    %v1409 = vld [vmem:[%s1379 + $0xe8] sm:$0xff]
    %v1410 = vld [vmem:[%s1379 + $0xf0] sm:$0xff]
    %v1411 = vld [vmem:[%s1379 + $0xf8] sm:$0xff]
    %v1412 = vld [vmem:[%s1379 + $0x100] sm:$0xff]
    %v1413 = vld [vmem:[%s1379 + $0x108] sm:$0xff]
    %v1414 = vld [vmem:[%s1379 + $0x110] sm:$0xff]
    %v1415 = vld [vmem:[%s1379 + $0x118] sm:$0xff]
    %v1416 = vld [vmem:[%s1379 + $0x120] sm:$0xff]
    %v1417 = vld [vmem:[%s1379 + $0x128] sm:$0xff]
    %v1418 = vld [vmem:[%s1379 + $0x130] sm:$0xff]
    %v1419 = vld [vmem:[%s1379 + $0x138] sm:$0xff]
    %v1420 = vld [vmem:[%s1379 + $0x140] sm:$0xff]
    %v1421 = vld [vmem:[%s1379 + $0x148] sm:$0xff]
    %v1422 = vld [vmem:[%s1379 + $0x150] sm:$0xff]
    %v1423 = vld [vmem:[%s1379 + $0x158] sm:$0xff]
    %v1424 = vld [vmem:[%s1379 + $0x160] sm:$0xff]
    %v1425 = vld [vmem:[%s1379 + $0x168] sm:$0xff]
    %v1426 = vld [vmem:[%s1379 + $0x170] sm:$0xff]
    %v1427 = vld [vmem:[%s1379 + $0x178] sm:$0xff]
    %v1428 = vld [vmem:[%s1379 + $0x180] sm:$0xff]
    %v1429 = vld [vmem:[%s1379 + $0x188] sm:$0xff]
    %v1430 = vld [vmem:[%s1379 + $0x190] sm:$0xff]
    %v1431 = vld [vmem:[%s1379 + $0x198] sm:$0xff]
    %v1432 = vld [vmem:[%s1379 + $0x1a0] sm:$0xff]
    %v1433 = vld [vmem:[%s1379 + $0x1a8] sm:$0xff]
    %v1434 = vld [vmem:[%s1379 + $0x1b0] sm:$0xff]
    %v1435 = vld [vmem:[%s1379 + $0x1b8] sm:$0xff]
    %v1436 = vld [vmem:[%s1379 + $0x1c0] sm:$0xff]
    %v1437 = vld [vmem:[%s1379 + $0x1c8] sm:$0xff]
    %v1438 = vld [vmem:[%s1379 + $0x1d0] sm:$0xff]
    %v1439 = vld [vmem:[%s1379 + $0x1d8] sm:$0xff]
    %v1440 = vld [vmem:[%s1379 + $0x1e0] sm:$0xff]
    %v1441 = vld [vmem:[%s1379 + $0x1e8] sm:$0xff]
    %v1442 = vld [vmem:[%s1379 + $0x1f0] sm:$0xff]
    %v1443 = vld [vmem:[%s1379 + $0x1f8] sm:$0xff]
    %v1444 = vld [vmem:[#allocation6] sm:$0xff]
    %v1445 = vld [vmem:[#allocation6 + $0x8] sm:$0xff]
    %v1446 = vld [vmem:[#allocation6 + $0x10] sm:$0xff]
    %v1447 = vld [vmem:[#allocation6 + $0x18] sm:$0xff]
    %v1512 = vunpack.c.l.b16 %v1380
    %v1513 = vunpack.c.h.b16 %v1380
    %v1514 = vunpack.c.l.b16 %v1381
    %v1515 = vunpack.c.h.b16 %v1381
    %v1516 = vunpack.c.l.b16 %v1382
    %v1517 = vunpack.c.h.b16 %v1382
    %v1518 = vunpack.c.l.b16 %v1383
    %v1519 = vunpack.c.h.b16 %v1383
    %v1520 = vunpack.c.l.b16 %v1384
    %v1521 = vunpack.c.h.b16 %v1384
    %v1522 = vunpack.c.l.b16 %v1385
    %v1523 = vunpack.c.h.b16 %v1385
    %v1524 = vunpack.c.l.b16 %v1386
    %v1525 = vunpack.c.h.b16 %v1386
    %v1526 = vunpack.c.l.b16 %v1387
    %v1527 = vunpack.c.h.b16 %v1387
    %v1528 = vunpack.c.l.b16 %v1388
    %v1529 = vunpack.c.h.b16 %v1388
    %v1530 = vunpack.c.l.b16 %v1389
    %v1531 = vunpack.c.h.b16 %v1389
    %v1532 = vunpack.c.l.b16 %v1390
    %v1533 = vunpack.c.h.b16 %v1390
    %v1534 = vunpack.c.l.b16 %v1391
    %v1535 = vunpack.c.h.b16 %v1391
    %v1536 = vunpack.c.l.b16 %v1392
    %v1537 = vunpack.c.h.b16 %v1392
    %v1538 = vunpack.c.l.b16 %v1393
    %v1539 = vunpack.c.h.b16 %v1393
    %v1540 = vunpack.c.l.b16 %v1394
    %v1541 = vunpack.c.h.b16 %v1394
    %v1542 = vunpack.c.l.b16 %v1395
    %v1543 = vunpack.c.h.b16 %v1395
    %v1544 = vunpack.c.l.b16 %v1396
    %v1545 = vunpack.c.h.b16 %v1396
    %v1546 = vunpack.c.l.b16 %v1397
    %v1547 = vunpack.c.h.b16 %v1397
    %v1548 = vunpack.c.l.b16 %v1398
    %v1549 = vunpack.c.h.b16 %v1398
    %v1550 = vunpack.c.l.b16 %v1399
    %v1551 = vunpack.c.h.b16 %v1399
    %v1552 = vunpack.c.l.b16 %v1400
    %v1553 = vunpack.c.h.b16 %v1400
    %v1554 = vunpack.c.l.b16 %v1401
    %v1555 = vunpack.c.h.b16 %v1401
    %v1556 = vunpack.c.l.b16 %v1402
    %v1557 = vunpack.c.h.b16 %v1402
    %v1558 = vunpack.c.l.b16 %v1403
    %v1559 = vunpack.c.h.b16 %v1403
    %v1560 = vunpack.c.l.b16 %v1404
    %v1561 = vunpack.c.h.b16 %v1404
    %v1562 = vunpack.c.l.b16 %v1405
    %v1563 = vunpack.c.h.b16 %v1405
    %v1564 = vunpack.c.l.b16 %v1406
    %v1565 = vunpack.c.h.b16 %v1406
    %v1566 = vunpack.c.l.b16 %v1407
    %v1567 = vunpack.c.h.b16 %v1407
    %v1568 = vunpack.c.l.b16 %v1408
    %v1569 = vunpack.c.h.b16 %v1408
    %v1570 = vunpack.c.l.b16 %v1409
    %v1571 = vunpack.c.h.b16 %v1409
    %v1572 = vunpack.c.l.b16 %v1410
    %v1573 = vunpack.c.h.b16 %v1410
    %v1574 = vunpack.c.l.b16 %v1411
    %v1575 = vunpack.c.h.b16 %v1411
    %v1576 = vunpack.c.l.b16 %v1412
    %v1577 = vunpack.c.h.b16 %v1412
    %v1578 = vunpack.c.l.b16 %v1413
    %v1579 = vunpack.c.h.b16 %v1413
    %v1580 = vunpack.c.l.b16 %v1414
    %v1581 = vunpack.c.h.b16 %v1414
    %v1582 = vunpack.c.l.b16 %v1415
    %v1583 = vunpack.c.h.b16 %v1415
    %v1584 = vunpack.c.l.b16 %v1416
    %v1585 = vunpack.c.h.b16 %v1416
    %v1586 = vunpack.c.l.b16 %v1417
    %v1587 = vunpack.c.h.b16 %v1417
    %v1588 = vunpack.c.l.b16 %v1418
    %v1589 = vunpack.c.h.b16 %v1418
    %v1590 = vunpack.c.l.b16 %v1419
    %v1591 = vunpack.c.h.b16 %v1419
    %v1592 = vunpack.c.l.b16 %v1420
    %v1593 = vunpack.c.h.b16 %v1420
    %v1594 = vunpack.c.l.b16 %v1421
    %v1595 = vunpack.c.h.b16 %v1421
    %v1596 = vunpack.c.l.b16 %v1422
    %v1597 = vunpack.c.h.b16 %v1422
    %v1598 = vunpack.c.l.b16 %v1423
    %v1599 = vunpack.c.h.b16 %v1423
    %v1600 = vunpack.c.l.b16 %v1424
    %v1601 = vunpack.c.h.b16 %v1424
    %v1602 = vunpack.c.l.b16 %v1425
    %v1603 = vunpack.c.h.b16 %v1425
    %v1604 = vunpack.c.l.b16 %v1426
    %v1605 = vunpack.c.h.b16 %v1426
    %v1606 = vunpack.c.l.b16 %v1427
    %v1607 = vunpack.c.h.b16 %v1427
    %v1608 = vunpack.c.l.b16 %v1428
    %v1609 = vunpack.c.h.b16 %v1428
    %v1610 = vunpack.c.l.b16 %v1429
    %v1611 = vunpack.c.h.b16 %v1429
    %v1612 = vunpack.c.l.b16 %v1430
    %v1613 = vunpack.c.h.b16 %v1430
    %v1614 = vunpack.c.l.b16 %v1431
    %v1615 = vunpack.c.h.b16 %v1431
    %v1616 = vunpack.c.l.b16 %v1432
    %v1617 = vunpack.c.h.b16 %v1432
    %v1618 = vunpack.c.l.b16 %v1433
    %v1619 = vunpack.c.h.b16 %v1433
    %v1620 = vunpack.c.l.b16 %v1434
    %v1621 = vunpack.c.h.b16 %v1434
    %v1622 = vunpack.c.l.b16 %v1435
    %v1623 = vunpack.c.h.b16 %v1435
    %v1624 = vunpack.c.l.b16 %v1436
    %v1625 = vunpack.c.h.b16 %v1436
    %v1626 = vunpack.c.l.b16 %v1437
    %v1627 = vunpack.c.h.b16 %v1437
    %v1628 = vunpack.c.l.b16 %v1438
    %v1629 = vunpack.c.h.b16 %v1438
    %v1630 = vunpack.c.l.b16 %v1439
    %v1631 = vunpack.c.h.b16 %v1439
    %v1632 = vunpack.c.l.b16 %v1440
    %v1633 = vunpack.c.h.b16 %v1440
    %v1634 = vunpack.c.l.b16 %v1441
    %v1635 = vunpack.c.h.b16 %v1441
    %v1636 = vunpack.c.l.b16 %v1442
    %v1637 = vunpack.c.h.b16 %v1442
    %v1638 = vunpack.c.l.b16 %v1443
    %v1639 = vunpack.c.h.b16 %v1443
    %v1640 = vpack.c.b16 %v1516, %v1512
    %v1641 = vpack.c.b16 %v1517, %v1513
    %v1642 = vpack.c.b16 %v1518, %v1514
    %v1643 = vpack.c.b16 %v1519, %v1515
    %v1644 = vpack.c.b16 %v1524, %v1520
    %v1645 = vpack.c.b16 %v1525, %v1521
    %v1646 = vpack.c.b16 %v1526, %v1522
    %v1647 = vpack.c.b16 %v1527, %v1523
    %v1648 = vpack.c.b16 %v1532, %v1528
    %v1649 = vpack.c.b16 %v1533, %v1529
    %v1650 = vpack.c.b16 %v1534, %v1530
    %v1651 = vpack.c.b16 %v1535, %v1531
    %v1652 = vpack.c.b16 %v1540, %v1536
    %v1653 = vpack.c.b16 %v1541, %v1537
    %v1654 = vpack.c.b16 %v1542, %v1538
    %v1655 = vpack.c.b16 %v1543, %v1539
    %v1656 = vpack.c.b16 %v1548, %v1544
    %v1657 = vpack.c.b16 %v1549, %v1545
    %v1658 = vpack.c.b16 %v1550, %v1546
    %v1659 = vpack.c.b16 %v1551, %v1547
    %v1660 = vpack.c.b16 %v1556, %v1552
    %v1661 = vpack.c.b16 %v1557, %v1553
    %v1662 = vpack.c.b16 %v1558, %v1554
    %v1663 = vpack.c.b16 %v1559, %v1555
    %v1664 = vpack.c.b16 %v1564, %v1560
    %v1665 = vpack.c.b16 %v1565, %v1561
    %v1666 = vpack.c.b16 %v1566, %v1562
    %v1667 = vpack.c.b16 %v1567, %v1563
    %v1668 = vpack.c.b16 %v1572, %v1568
    %v1669 = vpack.c.b16 %v1573, %v1569
    %v1670 = vpack.c.b16 %v1574, %v1570
    %v1671 = vpack.c.b16 %v1575, %v1571
    %v1672 = vpack.c.b16 %v1580, %v1576
    %v1673 = vpack.c.b16 %v1581, %v1577
    %v1674 = vpack.c.b16 %v1582, %v1578
    %v1675 = vpack.c.b16 %v1583, %v1579
    %v1676 = vpack.c.b16 %v1588, %v1584
    %v1677 = vpack.c.b16 %v1589, %v1585
    %v1678 = vpack.c.b16 %v1590, %v1586
    %v1679 = vpack.c.b16 %v1591, %v1587
    %v1680 = vpack.c.b16 %v1596, %v1592
    %v1681 = vpack.c.b16 %v1597, %v1593
    %v1682 = vpack.c.b16 %v1598, %v1594
    %v1683 = vpack.c.b16 %v1599, %v1595
    %v1684 = vpack.c.b16 %v1604, %v1600
    %v1685 = vpack.c.b16 %v1605, %v1601
    %v1686 = vpack.c.b16 %v1606, %v1602
    %v1687 = vpack.c.b16 %v1607, %v1603
    %v1688 = vpack.c.b16 %v1612, %v1608
    %v1689 = vpack.c.b16 %v1613, %v1609
    %v1690 = vpack.c.b16 %v1614, %v1610
    %v1691 = vpack.c.b16 %v1615, %v1611
    %v1692 = vpack.c.b16 %v1620, %v1616
    %v1693 = vpack.c.b16 %v1621, %v1617
    %v1694 = vpack.c.b16 %v1622, %v1618
    %v1695 = vpack.c.b16 %v1623, %v1619
    %v1696 = vpack.c.b16 %v1628, %v1624
    %v1697 = vpack.c.b16 %v1629, %v1625
    %v1698 = vpack.c.b16 %v1630, %v1626
    %v1699 = vpack.c.b16 %v1631, %v1627
    %v1700 = vpack.c.b16 %v1636, %v1632
    %v1701 = vpack.c.b16 %v1637, %v1633
    %v1702 = vpack.c.b16 %v1638, %v1634
    %v1703 = vpack.c.b16 %v1639, %v1635
    %1768 = vmatprep.subr.bf16.mxu0 %v1641
    %1769 = vmatpush1.bf16.msra.mxu0 %v1640
    %1770 = vmatprep.subr.bf16.mxu0 %v1645
    %1771 = vmatpush1.bf16.msra.mxu0 %v1644
    %1772 = vmatprep.subr.bf16.mxu0 %v1649
    %1773 = vmatpush1.bf16.msra.mxu0 %v1648
    %1774 = vmatprep.subr.bf16.mxu0 %v1653
    %1775 = vmatpush1.bf16.msra.mxu0 %v1652
    %1776 = vmatprep.subr.bf16.mxu0 %v1657
    %1777 = vmatpush1.bf16.msra.mxu0 %v1656
    %1778 = vmatprep.subr.bf16.mxu0 %v1661
    %1779 = vmatpush1.bf16.msra.mxu0 %v1660
    %1780 = vmatprep.subr.bf16.mxu0 %v1665
    %1781 = vmatpush1.bf16.msra.mxu0 %v1664
    %1782 = vmatprep.subr.bf16.mxu0 %v1669
    %1783 = vmatpush1.bf16.msra.mxu0 %v1668
    %1784 = vmatprep.subr.bf16.mxu0 %v1673
    %1785 = vmatpush1.bf16.msra.mxu0 %v1672
    %1786 = vmatprep.subr.bf16.mxu0 %v1677
    %1787 = vmatpush1.bf16.msra.mxu0 %v1676
    %1788 = vmatprep.subr.bf16.mxu0 %v1681
    %1789 = vmatpush1.bf16.msra.mxu0 %v1680
    %1790 = vmatprep.subr.bf16.mxu0 %v1685
    %1791 = vmatpush1.bf16.msra.mxu0 %v1684
    %1792 = vmatprep.subr.bf16.mxu0 %v1689
    %1793 = vmatpush1.bf16.msra.mxu0 %v1688
    %1794 = vmatprep.subr.bf16.mxu0 %v1693
    %1795 = vmatpush1.bf16.msra.mxu0 %v1692
    %1796 = vmatprep.subr.bf16.mxu0 %v1697
    %1797 = vmatpush1.bf16.msra.mxu0 %v1696
    %1798 = vmatprep.subr.bf16.mxu0 %v1701
    %1799 = vmatpush1.bf16.msra.mxu0 %v1700
    %1800 = vmatprep.mubr.bf16.mxu0 %v1220
    %1801 = vmatmul.mubr.bf16.gmra.mrb[0].mxu0 %v1369
    %v1802 = vpop.f32.mrb[0].mxu0
    %v1803 = vadd.f32 %v1444, %v1802
    %v1804 = vpop.f32.mrb[0].mxu0
    %v1805 = vadd.f32 %v1445, %v1804
    %v1806 = vpop.f32.mrb[0].mxu0
    %v1807 = vpop.f32.mrb[0].mxu0
    %1808 = vdwg.mxu0
    %1809 = vmatprep.subr.bf16.mxu0 %v1643
    %1810 = vmatpush1.bf16.msra.mxu0 %v1642
    %1811 = vmatprep.subr.bf16.mxu0 %v1647
    %1812 = vmatpush1.bf16.msra.mxu0 %v1646
    %1813 = vmatprep.subr.bf16.mxu0 %v1651
    %1814 = vmatpush1.bf16.msra.mxu0 %v1650
    %1815 = vmatprep.subr.bf16.mxu0 %v1655
    %1816 = vmatpush1.bf16.msra.mxu0 %v1654
    %1817 = vmatprep.subr.bf16.mxu0 %v1659
    %1818 = vmatpush1.bf16.msra.mxu0 %v1658
    %1819 = vmatprep.subr.bf16.mxu0 %v1663
    %1820 = vmatpush1.bf16.msra.mxu0 %v1662
    %1821 = vmatprep.subr.bf16.mxu0 %v1667
    %1822 = vmatpush1.bf16.msra.mxu0 %v1666
    %1823 = vmatprep.subr.bf16.mxu0 %v1671
    %1824 = vmatpush1.bf16.msra.mxu0 %v1670
    %1825 = vmatprep.subr.bf16.mxu0 %v1675
    %1826 = vmatpush1.bf16.msra.mxu0 %v1674
    %1827 = vmatprep.subr.bf16.mxu0 %v1679
    %1828 = vmatpush1.bf16.msra.mxu0 %v1678
    %1829 = vmatprep.subr.bf16.mxu0 %v1683
    %1830 = vmatpush1.bf16.msra.mxu0 %v1682
    %1831 = vmatprep.subr.bf16.mxu0 %v1687
    %1832 = vmatpush1.bf16.msra.mxu0 %v1686
    %1833 = vmatprep.subr.bf16.mxu0 %v1691
    %1834 = vmatpush1.bf16.msra.mxu0 %v1690
    %1835 = vmatprep.subr.bf16.mxu0 %v1695
    %1836 = vmatpush1.bf16.msra.mxu0 %v1694
    %1837 = vmatprep.subr.bf16.mxu0 %v1699
    %1838 = vmatpush1.bf16.msra.mxu0 %v1698
    %1839 = vmatprep.subr.bf16.mxu0 %v1703
    %1840 = vmatpush1.bf16.msra.mxu0 %v1702
    %1841 = vmatprep.mubr.bf16.mxu0 %v1220
    %1842 = vmatmul.mubr.bf16.gmra.mrb[0].mxu0 %v1369
    %v1843 = vpop.f32.mrb[0].mxu0
    %v1844 = vadd.f32 %v1446, %v1843
    %v1845 = vpop.f32.mrb[0].mxu0
    %v1846 = vadd.f32 %v1447, %v1845
    %v1847 = vpop.f32.mrb[0].mxu0
    %v1848 = vpop.f32.mrb[0].mxu0
    %1849 = vdwg.mxu0
    %v1850 = vxor.u32 %v1803, 2147483648
    %v1851 = vmul.f32 %v1850, 1.442695
    %v1852 = vpow.pop %v1851
    %v1853 = vadd.f32 %v1852, 1.0
    %v1854 = vrcp.pop %v1853
    %v1855 = vmul.f32 1.0, %v1854
    %v1856 = vxor.u32 %v1805, 2147483648
    %v1857 = vmul.f32 %v1856, 1.442695
    %v1858 = vpow.pop %v1857
    %v1859 = vadd.f32 %v1858, 1.0
    %v1860 = vrcp.pop %v1859
    %v1861 = vmul.f32 1.0, %v1860
    %v1862 = vtanh.pop %v1844
    %v1863 = vxor.u32 %v1846, 2147483648
    %v1864 = vmul.f32 %v1863, 1.442695
    %v1865 = vpow.pop %v1864
    %v1866 = vadd.f32 %v1865, 1.0
    %v1867 = vrcp.pop %v1866
    %v1868 = vmul.f32 1.0, %v1867
    %v1869 = vmul.f32 %v1861, %v1217
    %v1870 = vmul.f32 %v1855, %v1862
    %v1871 = vadd.f32 %v1869, %v1870
    %v1872 = vtanh.pop %v1871
    %v1873 = vmul.f32 %v1868, %v1872
    %v1874 = vpack.c.bf16 %v1873, %v1873
    %s1875 = scalar_lea.vmem [#allocation4], 128
    %v1876 = vld [vmem:[%s1875] sm:$0xf]
    %v1877 = vld [vmem:[%s1875 + $0x4] sm:$0xf]
    %v1878 = vld [vmem:[%s1875 + $0x8] sm:$0xf]
    %v1879 = vld [vmem:[%s1875 + $0xc] sm:$0xf]
    %v1880 = vld [vmem:[%s1875 + $0x10] sm:$0xf]
    %v1881 = vld [vmem:[%s1875 + $0x14] sm:$0xf]
    %v1882 = vld [vmem:[%s1875 + $0x18] sm:$0xf]
    %v1883 = vld [vmem:[%s1875 + $0x1c] sm:$0xf]
    %v1884 = vld [vmem:[%s1875 + $0x20] sm:$0xf]
    %v1885 = vld [vmem:[%s1875 + $0x24] sm:$0xf]
    %v1886 = vld [vmem:[%s1875 + $0x28] sm:$0xf]
    %v1887 = vld [vmem:[%s1875 + $0x2c] sm:$0xf]
    %v1888 = vld [vmem:[%s1875 + $0x30] sm:$0xf]
    %v1889 = vld [vmem:[%s1875 + $0x34] sm:$0xf]
    %v1890 = vld [vmem:[%s1875 + $0x38] sm:$0xf]
    %v1891 = vld [vmem:[%s1875 + $0x3c] sm:$0xf]
    %v1908 = vunpack.c.l.b16 %v1876
    %v1909 = vunpack.c.l.b16 %v1877
    %v1910 = vunpack.c.l.b16 %v1878
    %v1911 = vunpack.c.l.b16 %v1879
    %v1912 = vunpack.c.l.b16 %v1880
    %v1913 = vunpack.c.l.b16 %v1881
    %v1914 = vunpack.c.l.b16 %v1882
    %v1915 = vunpack.c.l.b16 %v1883
    %v1916 = vunpack.c.l.b16 %v1884
    %v1917 = vunpack.c.l.b16 %v1885
    %v1918 = vunpack.c.l.b16 %v1886
    %v1919 = vunpack.c.l.b16 %v1887
    %v1920 = vunpack.c.l.b16 %v1888
    %v1921 = vunpack.c.l.b16 %v1889
    %v1922 = vunpack.c.l.b16 %v1890
    %v1923 = vunpack.c.l.b16 %v1891
    %v1924 = vpack.c.b16 %v1909, %v1908
    %v1925 = vpack.c.b16 %v1911, %v1910
    %v1926 = vpack.c.b16 %v1913, %v1912
    %v1927 = vpack.c.b16 %v1915, %v1914
    %v1928 = vpack.c.b16 %v1917, %v1916
    %v1929 = vpack.c.b16 %v1919, %v1918
    %v1930 = vpack.c.b16 %v1921, %v1920
    %v1931 = vpack.c.b16 %v1923, %v1922
    %1940 = vmatprep.subr.bf16.mxu0 0
    %1941 = vmatpush1.bf16.msra.mxu0 %v1924
    %1942 = vmatprep.subr.bf16.mxu0 0
    %1943 = vmatpush1.bf16.msra.mxu0 %v1925
    %1944 = vmatprep.subr.bf16.mxu0 0
    %1945 = vmatpush1.bf16.msra.mxu0 %v1926
    %1946 = vmatprep.subr.bf16.mxu0 0
    %1947 = vmatpush1.bf16.msra.mxu0 %v1927
    %1948 = vmatprep.subr.bf16.mxu0 0
    %1949 = vmatpush1.bf16.msra.mxu0 %v1928
    %1950 = vmatprep.subr.bf16.mxu0 0
    %1951 = vmatpush1.bf16.msra.mxu0 %v1929
    %1952 = vmatprep.subr.bf16.mxu0 0
    %1953 = vmatpush1.bf16.msra.mxu0 %v1930
    %1954 = vmatprep.subr.bf16.mxu0 0
    %1955 = vmatpush1.bf16.msra.mxu0 %v1931
    %1956 = vmatprep.subr.bf16.mxu0 0
    %1957 = vmatpush1.bf16.msra.mxu0 0
    %1958 = vmatprep.subr.bf16.mxu0 0
    %1959 = vmatpush1.bf16.msra.mxu0 0
    %1960 = vmatprep.subr.bf16.mxu0 0
    %1961 = vmatpush1.bf16.msra.mxu0 0
    %1962 = vmatprep.subr.bf16.mxu0 0
    %1963 = vmatpush1.bf16.msra.mxu0 0
    %1964 = vmatprep.subr.bf16.mxu0 0
    %1965 = vmatpush1.bf16.msra.mxu0 0
    %1966 = vmatprep.subr.bf16.mxu0 0
    %1967 = vmatpush1.bf16.msra.mxu0 0
    %1968 = vmatprep.subr.bf16.mxu0 0
    %1969 = vmatpush1.bf16.msra.mxu0 0
    %1970 = vmatprep.subr.bf16.mxu0 0
    %1971 = vmatpush1.bf16.msra.mxu0 0
    %1972 = vmatprep.mubr.bf16.mxu0 0
    %1973 = vmatmul.mubr.bf16.gmra.mrb[0].mxu0 %v1874
    %v1974 = vpop.f32.mrb[0].mxu0
    %v1975 = vadd.f32 0.0, %v1974
    %v1976 = vpop.f32.mrb[0].mxu0
    %v1977 = vpop.f32.mrb[0].mxu0
    %v1978 = vpop.f32.mrb[0].mxu0
    %1979 = vdwg.mxu0
    %v1980 = vsel %vm675, %v1975, -1e+30
    %1981 = vmax.xlane.f32.xlu0 %v1980
    %v1982 = vpop.xlane.xlu0 %1981
    %v1983 = vsub.f32 %v1980, %v1982
    %v1984 = vmul.f32 %v1983, 1.442695
    %v1985 = vpow.pop %v1984
    %1986 = vadd.xlane.f32.xlu0 %v1985
    %v1987 = vpop.xlane.xlu0 %1986
    %v1988 = vlog2.pop %v1987
    %v1989 = vmul.f32 %v1988, 0.6931472
    %v1990 = vsub.f32 %v1983, %v1989
    %v1991 = vrcp.pop %v1987
    %v1992 = vmul.f32 %v1985, %v1991
    %v1993 = vmul.f32 %v1992, %v1990
    %v1994 = vsel %vm675, %v1993, 0.0
    %1995 = vadd.xlane.f32.xlu0 %v1994
    %v1996 = vpop.xlane.xlu0 %1995
    %v1997 = vsub.f32 0.0, %v1996
    %s1998 = scalar_lea.vmem [#allocation7], 16
    %v1999 = vld [vmem:[%s1998] sm:$0xff]
    %v2000 = vadd.f32 %v1980, %v1999
    %2001 = vmax.xlane.f32.xlu0 %v2000
    %v2002 = vpop.xlane.xlu0 %2001
    %vm2003 = vcmp.eq.f32.partialorder %v2000, %v2002
    %v2004 = vsel %vm2003, %v75, 128
    %v2005 = vand.u32 %v2004, 65535
    %v2006 = vshra.s32 %v2004, 16
    %v2007 = vcvt.s32.f32 %v2005
    %v2008 = vcvt.s32.f32 %v2006
    %2009 = vmin.xlane.f32.xlu0 %v2008
    %v2010 = vpop.xlane.xlu0 %2009
    %vm2011 = vcmp.eq.f32.partialorder %v2008, %v2010
    %v2012 = vsel %vm2011, %v2007, inf
    %2013 = vmin.xlane.f32.xlu0 %v2012
    %v2014 = vpop.xlane.xlu0 %2013
    %v2015 = vcvt.f32.s32 %v2014
    %v2016 = vcvt.f32.s32 %v2010
    %v2017 = vshll.u32 %v2016, 16
    %v2018 = vadd.s32 %v2017, %v2015
    %vm2019 = vcmp.eq.s32.totalorder %v75, %v2018
    %v2020 = vsel %vm2019, 1, 0
    %v2021 = vcvt.s32.f32 %v2020
    %v2022 = vpack.c.bf16 %v2021, %v2021
    %v2023 = vsel %vm2019, %v1990, 0.0
    %2024 = vadd.xlane.f32.xlu0 %v2023
    %v2025 = vpop.xlane.xlu0 %2024
    %s2026 = scalar_lea.vmem %s4, 16
    %2027 = vst.msk [vmem:[%s2026] sm:$0xff] %vm721, %v2018
    %s2028 = scalar_lea.vmem %s5, 16
    %2029 = vst.msk [vmem:[%s2028] sm:$0xff] %vm721, %v2025
    %s2030 = scalar_lea.vmem %s6, 16
    %2031 = vst.msk [vmem:[%s2030] sm:$0xff] %vm721, %v1997
    %s2032 = scalar_lea.vmem [#allocation2], 1536
    %v2033 = vld [vmem:[%s2032] sm:$0xff]
    %v2034 = vld [vmem:[%s2032 + $0x8] sm:$0xff]
    %v2035 = vld [vmem:[%s2032 + $0x10] sm:$0xff]
    %v2036 = vld [vmem:[%s2032 + $0x18] sm:$0xff]
    %v2037 = vld [vmem:[%s2032 + $0x20] sm:$0xff]
    %v2038 = vld [vmem:[%s2032 + $0x28] sm:$0xff]
    %v2039 = vld [vmem:[%s2032 + $0x30] sm:$0xff]
    %v2040 = vld [vmem:[%s2032 + $0x38] sm:$0xff]
    %v2041 = vld [vmem:[%s2032 + $0x40] sm:$0xff]
    %v2042 = vld [vmem:[%s2032 + $0x48] sm:$0xff]
    %v2043 = vld [vmem:[%s2032 + $0x50] sm:$0xff]
    %v2044 = vld [vmem:[%s2032 + $0x58] sm:$0xff]
    %v2045 = vld [vmem:[%s2032 + $0x60] sm:$0xff]
    %v2046 = vld [vmem:[%s2032 + $0x68] sm:$0xff]
    %v2047 = vld [vmem:[%s2032 + $0x70] sm:$0xff]
    %v2048 = vld [vmem:[%s2032 + $0x78] sm:$0xff]
    %v2049 = vld [vmem:[%s2032 + $0x80] sm:$0xff]
    %v2050 = vld [vmem:[%s2032 + $0x88] sm:$0xff]
    %v2051 = vld [vmem:[%s2032 + $0x90] sm:$0xff]
    %v2052 = vld [vmem:[%s2032 + $0x98] sm:$0xff]
    %v2053 = vld [vmem:[%s2032 + $0xa0] sm:$0xff]
    %v2054 = vld [vmem:[%s2032 + $0xa8] sm:$0xff]
    %v2055 = vld [vmem:[%s2032 + $0xb0] sm:$0xff]
    %v2056 = vld [vmem:[%s2032 + $0xb8] sm:$0xff]
    %v2057 = vld [vmem:[%s2032 + $0xc0] sm:$0xff]
    %v2058 = vld [vmem:[%s2032 + $0xc8] sm:$0xff]
    %v2059 = vld [vmem:[%s2032 + $0xd0] sm:$0xff]
    %v2060 = vld [vmem:[%s2032 + $0xd8] sm:$0xff]
    %v2061 = vld [vmem:[%s2032 + $0xe0] sm:$0xff]
    %v2062 = vld [vmem:[%s2032 + $0xe8] sm:$0xff]
    %v2063 = vld [vmem:[%s2032 + $0xf0] sm:$0xff]
    %v2064 = vld [vmem:[%s2032 + $0xf8] sm:$0xff]
    %v2065 = vld [vmem:[%s2032 + $0x100] sm:$0xff]
    %v2066 = vld [vmem:[%s2032 + $0x108] sm:$0xff]
    %v2067 = vld [vmem:[%s2032 + $0x110] sm:$0xff]
    %v2068 = vld [vmem:[%s2032 + $0x118] sm:$0xff]
    %v2069 = vld [vmem:[%s2032 + $0x120] sm:$0xff]
    %v2070 = vld [vmem:[%s2032 + $0x128] sm:$0xff]
    %v2071 = vld [vmem:[%s2032 + $0x130] sm:$0xff]
    %v2072 = vld [vmem:[%s2032 + $0x138] sm:$0xff]
    %v2073 = vld [vmem:[%s2032 + $0x140] sm:$0xff]
    %v2074 = vld [vmem:[%s2032 + $0x148] sm:$0xff]
    %v2075 = vld [vmem:[%s2032 + $0x150] sm:$0xff]
    %v2076 = vld [vmem:[%s2032 + $0x158] sm:$0xff]
    %v2077 = vld [vmem:[%s2032 + $0x160] sm:$0xff]
    %v2078 = vld [vmem:[%s2032 + $0x168] sm:$0xff]
    %v2079 = vld [vmem:[%s2032 + $0x170] sm:$0xff]
    %v2080 = vld [vmem:[%s2032 + $0x178] sm:$0xff]
    %v2081 = vld [vmem:[%s2032 + $0x180] sm:$0xff]
    %v2082 = vld [vmem:[%s2032 + $0x188] sm:$0xff]
    %v2083 = vld [vmem:[%s2032 + $0x190] sm:$0xff]
    %v2084 = vld [vmem:[%s2032 + $0x198] sm:$0xff]
    %v2085 = vld [vmem:[%s2032 + $0x1a0] sm:$0xff]
    %v2086 = vld [vmem:[%s2032 + $0x1a8] sm:$0xff]
    %v2087 = vld [vmem:[%s2032 + $0x1b0] sm:$0xff]
    %v2088 = vld [vmem:[%s2032 + $0x1b8] sm:$0xff]
    %v2089 = vld [vmem:[%s2032 + $0x1c0] sm:$0xff]
    %v2090 = vld [vmem:[%s2032 + $0x1c8] sm:$0xff]
    %v2091 = vld [vmem:[%s2032 + $0x1d0] sm:$0xff]
    %v2092 = vld [vmem:[%s2032 + $0x1d8] sm:$0xff]
    %v2093 = vld [vmem:[%s2032 + $0x1e0] sm:$0xff]
    %v2094 = vld [vmem:[%s2032 + $0x1e8] sm:$0xff]
    %v2095 = vld [vmem:[%s2032 + $0x1f0] sm:$0xff]
    %v2096 = vld [vmem:[%s2032 + $0x1f8] sm:$0xff]
    %v2097 = vld [vmem:[#allocation6] sm:$0xff]
    %v2098 = vld [vmem:[#allocation6 + $0x8] sm:$0xff]
    %v2099 = vld [vmem:[#allocation6 + $0x10] sm:$0xff]
    %v2100 = vld [vmem:[#allocation6 + $0x18] sm:$0xff]
    %v2165 = vunpack.c.l.b16 %v2033
    %v2166 = vunpack.c.h.b16 %v2033
    %v2167 = vunpack.c.l.b16 %v2034
    %v2168 = vunpack.c.h.b16 %v2034
    %v2169 = vunpack.c.l.b16 %v2035
    %v2170 = vunpack.c.h.b16 %v2035
    %v2171 = vunpack.c.l.b16 %v2036
    %v2172 = vunpack.c.h.b16 %v2036
    %v2173 = vunpack.c.l.b16 %v2037
    %v2174 = vunpack.c.h.b16 %v2037
    %v2175 = vunpack.c.l.b16 %v2038
    %v2176 = vunpack.c.h.b16 %v2038
    %v2177 = vunpack.c.l.b16 %v2039
    %v2178 = vunpack.c.h.b16 %v2039
    %v2179 = vunpack.c.l.b16 %v2040
    %v2180 = vunpack.c.h.b16 %v2040
    %v2181 = vunpack.c.l.b16 %v2041
    %v2182 = vunpack.c.h.b16 %v2041
    %v2183 = vunpack.c.l.b16 %v2042
    %v2184 = vunpack.c.h.b16 %v2042
    %v2185 = vunpack.c.l.b16 %v2043
    %v2186 = vunpack.c.h.b16 %v2043
    %v2187 = vunpack.c.l.b16 %v2044
    %v2188 = vunpack.c.h.b16 %v2044
    %v2189 = vunpack.c.l.b16 %v2045
    %v2190 = vunpack.c.h.b16 %v2045
    %v2191 = vunpack.c.l.b16 %v2046
    %v2192 = vunpack.c.h.b16 %v2046
    %v2193 = vunpack.c.l.b16 %v2047
    %v2194 = vunpack.c.h.b16 %v2047
    %v2195 = vunpack.c.l.b16 %v2048
    %v2196 = vunpack.c.h.b16 %v2048
    %v2197 = vunpack.c.l.b16 %v2049
    %v2198 = vunpack.c.h.b16 %v2049
    %v2199 = vunpack.c.l.b16 %v2050
    %v2200 = vunpack.c.h.b16 %v2050
    %v2201 = vunpack.c.l.b16 %v2051
    %v2202 = vunpack.c.h.b16 %v2051
    %v2203 = vunpack.c.l.b16 %v2052
    %v2204 = vunpack.c.h.b16 %v2052
    %v2205 = vunpack.c.l.b16 %v2053
    %v2206 = vunpack.c.h.b16 %v2053
    %v2207 = vunpack.c.l.b16 %v2054
    %v2208 = vunpack.c.h.b16 %v2054
    %v2209 = vunpack.c.l.b16 %v2055
    %v2210 = vunpack.c.h.b16 %v2055
    %v2211 = vunpack.c.l.b16 %v2056
    %v2212 = vunpack.c.h.b16 %v2056
    %v2213 = vunpack.c.l.b16 %v2057
    %v2214 = vunpack.c.h.b16 %v2057
    %v2215 = vunpack.c.l.b16 %v2058
    %v2216 = vunpack.c.h.b16 %v2058
    %v2217 = vunpack.c.l.b16 %v2059
    %v2218 = vunpack.c.h.b16 %v2059
    %v2219 = vunpack.c.l.b16 %v2060
    %v2220 = vunpack.c.h.b16 %v2060
    %v2221 = vunpack.c.l.b16 %v2061
    %v2222 = vunpack.c.h.b16 %v2061
    %v2223 = vunpack.c.l.b16 %v2062
    %v2224 = vunpack.c.h.b16 %v2062
    %v2225 = vunpack.c.l.b16 %v2063
    %v2226 = vunpack.c.h.b16 %v2063
    %v2227 = vunpack.c.l.b16 %v2064
    %v2228 = vunpack.c.h.b16 %v2064
    %v2229 = vunpack.c.l.b16 %v2065
    %v2230 = vunpack.c.h.b16 %v2065
    %v2231 = vunpack.c.l.b16 %v2066
    %v2232 = vunpack.c.h.b16 %v2066
    %v2233 = vunpack.c.l.b16 %v2067
    %v2234 = vunpack.c.h.b16 %v2067
    %v2235 = vunpack.c.l.b16 %v2068
    %v2236 = vunpack.c.h.b16 %v2068
    %v2237 = vunpack.c.l.b16 %v2069
    %v2238 = vunpack.c.h.b16 %v2069
    %v2239 = vunpack.c.l.b16 %v2070
    %v2240 = vunpack.c.h.b16 %v2070
    %v2241 = vunpack.c.l.b16 %v2071
    %v2242 = vunpack.c.h.b16 %v2071
    %v2243 = vunpack.c.l.b16 %v2072
    %v2244 = vunpack.c.h.b16 %v2072
    %v2245 = vunpack.c.l.b16 %v2073
    %v2246 = vunpack.c.h.b16 %v2073
    %v2247 = vunpack.c.l.b16 %v2074
    %v2248 = vunpack.c.h.b16 %v2074
    %v2249 = vunpack.c.l.b16 %v2075
    %v2250 = vunpack.c.h.b16 %v2075
    %v2251 = vunpack.c.l.b16 %v2076
    %v2252 = vunpack.c.h.b16 %v2076
    %v2253 = vunpack.c.l.b16 %v2077
    %v2254 = vunpack.c.h.b16 %v2077
    %v2255 = vunpack.c.l.b16 %v2078
    %v2256 = vunpack.c.h.b16 %v2078
    %v2257 = vunpack.c.l.b16 %v2079
    %v2258 = vunpack.c.h.b16 %v2079
    %v2259 = vunpack.c.l.b16 %v2080
    %v2260 = vunpack.c.h.b16 %v2080
    %v2261 = vunpack.c.l.b16 %v2081
    %v2262 = vunpack.c.h.b16 %v2081
    %v2263 = vunpack.c.l.b16 %v2082
    %v2264 = vunpack.c.h.b16 %v2082
    %v2265 = vunpack.c.l.b16 %v2083
    %v2266 = vunpack.c.h.b16 %v2083
    %v2267 = vunpack.c.l.b16 %v2084
    %v2268 = vunpack.c.h.b16 %v2084
    %v2269 = vunpack.c.l.b16 %v2085
    %v2270 = vunpack.c.h.b16 %v2085
    %v2271 = vunpack.c.l.b16 %v2086
    %v2272 = vunpack.c.h.b16 %v2086
    %v2273 = vunpack.c.l.b16 %v2087
    %v2274 = vunpack.c.h.b16 %v2087
    %v2275 = vunpack.c.l.b16 %v2088
    %v2276 = vunpack.c.h.b16 %v2088
    %v2277 = vunpack.c.l.b16 %v2089
    %v2278 = vunpack.c.h.b16 %v2089
    %v2279 = vunpack.c.l.b16 %v2090
    %v2280 = vunpack.c.h.b16 %v2090
    %v2281 = vunpack.c.l.b16 %v2091
    %v2282 = vunpack.c.h.b16 %v2091
    %v2283 = vunpack.c.l.b16 %v2092
    %v2284 = vunpack.c.h.b16 %v2092
    %v2285 = vunpack.c.l.b16 %v2093
    %v2286 = vunpack.c.h.b16 %v2093
    %v2287 = vunpack.c.l.b16 %v2094
    %v2288 = vunpack.c.h.b16 %v2094
    %v2289 = vunpack.c.l.b16 %v2095
    %v2290 = vunpack.c.h.b16 %v2095
    %v2291 = vunpack.c.l.b16 %v2096
    %v2292 = vunpack.c.h.b16 %v2096
    %v2293 = vpack.c.b16 %v2169, %v2165
    %v2294 = vpack.c.b16 %v2170, %v2166
    %v2295 = vpack.c.b16 %v2171, %v2167
    %v2296 = vpack.c.b16 %v2172, %v2168
    %v2297 = vpack.c.b16 %v2177, %v2173
    %v2298 = vpack.c.b16 %v2178, %v2174
    %v2299 = vpack.c.b16 %v2179, %v2175
    %v2300 = vpack.c.b16 %v2180, %v2176
    %v2301 = vpack.c.b16 %v2185, %v2181
    %v2302 = vpack.c.b16 %v2186, %v2182
    %v2303 = vpack.c.b16 %v2187, %v2183
    %v2304 = vpack.c.b16 %v2188, %v2184
    %v2305 = vpack.c.b16 %v2193, %v2189
    %v2306 = vpack.c.b16 %v2194, %v2190
    %v2307 = vpack.c.b16 %v2195, %v2191
    %v2308 = vpack.c.b16 %v2196, %v2192
    %v2309 = vpack.c.b16 %v2201, %v2197
    %v2310 = vpack.c.b16 %v2202, %v2198
    %v2311 = vpack.c.b16 %v2203, %v2199
    %v2312 = vpack.c.b16 %v2204, %v2200
    %v2313 = vpack.c.b16 %v2209, %v2205
    %v2314 = vpack.c.b16 %v2210, %v2206
    %v2315 = vpack.c.b16 %v2211, %v2207
    %v2316 = vpack.c.b16 %v2212, %v2208
    %v2317 = vpack.c.b16 %v2217, %v2213
    %v2318 = vpack.c.b16 %v2218, %v2214
    %v2319 = vpack.c.b16 %v2219, %v2215
    %v2320 = vpack.c.b16 %v2220, %v2216
    %v2321 = vpack.c.b16 %v2225, %v2221
    %v2322 = vpack.c.b16 %v2226, %v2222
    %v2323 = vpack.c.b16 %v2227, %v2223
    %v2324 = vpack.c.b16 %v2228, %v2224
    %v2325 = vpack.c.b16 %v2233, %v2229
    %v2326 = vpack.c.b16 %v2234, %v2230
    %v2327 = vpack.c.b16 %v2235, %v2231
    %v2328 = vpack.c.b16 %v2236, %v2232
    %v2329 = vpack.c.b16 %v2241, %v2237
    %v2330 = vpack.c.b16 %v2242, %v2238
    %v2331 = vpack.c.b16 %v2243, %v2239
    %v2332 = vpack.c.b16 %v2244, %v2240
    %v2333 = vpack.c.b16 %v2249, %v2245
    %v2334 = vpack.c.b16 %v2250, %v2246
    %v2335 = vpack.c.b16 %v2251, %v2247
    %v2336 = vpack.c.b16 %v2252, %v2248
    %v2337 = vpack.c.b16 %v2257, %v2253
    %v2338 = vpack.c.b16 %v2258, %v2254
    %v2339 = vpack.c.b16 %v2259, %v2255
    %v2340 = vpack.c.b16 %v2260, %v2256
    %v2341 = vpack.c.b16 %v2265, %v2261
    %v2342 = vpack.c.b16 %v2266, %v2262
    %v2343 = vpack.c.b16 %v2267, %v2263
    %v2344 = vpack.c.b16 %v2268, %v2264
    %v2345 = vpack.c.b16 %v2273, %v2269
    %v2346 = vpack.c.b16 %v2274, %v2270
    %v2347 = vpack.c.b16 %v2275, %v2271
    %v2348 = vpack.c.b16 %v2276, %v2272
    %v2349 = vpack.c.b16 %v2281, %v2277
    %v2350 = vpack.c.b16 %v2282, %v2278
    %v2351 = vpack.c.b16 %v2283, %v2279
    %v2352 = vpack.c.b16 %v2284, %v2280
    %v2353 = vpack.c.b16 %v2289, %v2285
    %v2354 = vpack.c.b16 %v2290, %v2286
    %v2355 = vpack.c.b16 %v2291, %v2287
    %v2356 = vpack.c.b16 %v2292, %v2288
    %2421 = vmatprep.subr.bf16.mxu0 %v2294
    %2422 = vmatpush1.bf16.msra.mxu0 %v2293
    %2423 = vmatprep.subr.bf16.mxu0 %v2298
    %2424 = vmatpush1.bf16.msra.mxu0 %v2297
    %2425 = vmatprep.subr.bf16.mxu0 %v2302
    %2426 = vmatpush1.bf16.msra.mxu0 %v2301
    %2427 = vmatprep.subr.bf16.mxu0 %v2306
    %2428 = vmatpush1.bf16.msra.mxu0 %v2305
    %2429 = vmatprep.subr.bf16.mxu0 %v2310
    %2430 = vmatpush1.bf16.msra.mxu0 %v2309
    %2431 = vmatprep.subr.bf16.mxu0 %v2314
    %2432 = vmatpush1.bf16.msra.mxu0 %v2313
    %2433 = vmatprep.subr.bf16.mxu0 %v2318
    %2434 = vmatpush1.bf16.msra.mxu0 %v2317
    %2435 = vmatprep.subr.bf16.mxu0 %v2322
    %2436 = vmatpush1.bf16.msra.mxu0 %v2321
    %2437 = vmatprep.subr.bf16.mxu0 %v2326
    %2438 = vmatpush1.bf16.msra.mxu0 %v2325
    %2439 = vmatprep.subr.bf16.mxu0 %v2330
    %2440 = vmatpush1.bf16.msra.mxu0 %v2329
    %2441 = vmatprep.subr.bf16.mxu0 %v2334
    %2442 = vmatpush1.bf16.msra.mxu0 %v2333
    %2443 = vmatprep.subr.bf16.mxu0 %v2338
    %2444 = vmatpush1.bf16.msra.mxu0 %v2337
    %2445 = vmatprep.subr.bf16.mxu0 %v2342
    %2446 = vmatpush1.bf16.msra.mxu0 %v2341
    %2447 = vmatprep.subr.bf16.mxu0 %v2346
    %2448 = vmatpush1.bf16.msra.mxu0 %v2345
    %2449 = vmatprep.subr.bf16.mxu0 %v2350
    %2450 = vmatpush1.bf16.msra.mxu0 %v2349
    %2451 = vmatprep.subr.bf16.mxu0 %v2354
    %2452 = vmatpush1.bf16.msra.mxu0 %v2353
    %2453 = vmatprep.mubr.bf16.mxu0 %v1874
    %2454 = vmatmul.mubr.bf16.gmra.mrb[0].mxu0 %v2022
    %v2455 = vpop.f32.mrb[0].mxu0
    %v2456 = vadd.f32 %v2097, %v2455
    %v2457 = vpop.f32.mrb[0].mxu0
    %v2458 = vadd.f32 %v2098, %v2457
    %v2459 = vpop.f32.mrb[0].mxu0
    %v2460 = vpop.f32.mrb[0].mxu0
    %2461 = vdwg.mxu0
    %2462 = vmatprep.subr.bf16.mxu0 %v2296
    %2463 = vmatpush1.bf16.msra.mxu0 %v2295
    %2464 = vmatprep.subr.bf16.mxu0 %v2300
    %2465 = vmatpush1.bf16.msra.mxu0 %v2299
    %2466 = vmatprep.subr.bf16.mxu0 %v2304
    %2467 = vmatpush1.bf16.msra.mxu0 %v2303
    %2468 = vmatprep.subr.bf16.mxu0 %v2308
    %2469 = vmatpush1.bf16.msra.mxu0 %v2307
    %2470 = vmatprep.subr.bf16.mxu0 %v2312
    %2471 = vmatpush1.bf16.msra.mxu0 %v2311
    %2472 = vmatprep.subr.bf16.mxu0 %v2316
    %2473 = vmatpush1.bf16.msra.mxu0 %v2315
    %2474 = vmatprep.subr.bf16.mxu0 %v2320
    %2475 = vmatpush1.bf16.msra.mxu0 %v2319
    %2476 = vmatprep.subr.bf16.mxu0 %v2324
    %2477 = vmatpush1.bf16.msra.mxu0 %v2323
    %2478 = vmatprep.subr.bf16.mxu0 %v2328
    %2479 = vmatpush1.bf16.msra.mxu0 %v2327
    %2480 = vmatprep.subr.bf16.mxu0 %v2332
    %2481 = vmatpush1.bf16.msra.mxu0 %v2331
    %2482 = vmatprep.subr.bf16.mxu0 %v2336
    %2483 = vmatpush1.bf16.msra.mxu0 %v2335
    %2484 = vmatprep.subr.bf16.mxu0 %v2340
    %2485 = vmatpush1.bf16.msra.mxu0 %v2339
    %2486 = vmatprep.subr.bf16.mxu0 %v2344
    %2487 = vmatpush1.bf16.msra.mxu0 %v2343
    %2488 = vmatprep.subr.bf16.mxu0 %v2348
    %2489 = vmatpush1.bf16.msra.mxu0 %v2347
    %2490 = vmatprep.subr.bf16.mxu0 %v2352
    %2491 = vmatpush1.bf16.msra.mxu0 %v2351
    %2492 = vmatprep.subr.bf16.mxu0 %v2356
    %2493 = vmatpush1.bf16.msra.mxu0 %v2355
    %2494 = vmatprep.mubr.bf16.mxu0 %v1874
    %2495 = vmatmul.mubr.bf16.gmra.mrb[0].mxu0 %v2022
    %v2496 = vpop.f32.mrb[0].mxu0
    %v2497 = vadd.f32 %v2099, %v2496
    %v2498 = vpop.f32.mrb[0].mxu0
    %v2499 = vadd.f32 %v2100, %v2498
    %v2500 = vpop.f32.mrb[0].mxu0
    %v2501 = vpop.f32.mrb[0].mxu0
    %2502 = vdwg.mxu0
    %v2503 = vxor.u32 %v2456, 2147483648
    %v2504 = vmul.f32 %v2503, 1.442695
    %v2505 = vpow.pop %v2504
    %v2506 = vadd.f32 %v2505, 1.0
    %v2507 = vrcp.pop %v2506
    %v2508 = vmul.f32 1.0, %v2507
    %v2509 = vxor.u32 %v2458, 2147483648
    %v2510 = vmul.f32 %v2509, 1.442695
    %v2511 = vpow.pop %v2510
    %v2512 = vadd.f32 %v2511, 1.0
    %v2513 = vrcp.pop %v2512
    %v2514 = vmul.f32 1.0, %v2513
    %v2515 = vtanh.pop %v2497
    %v2516 = vxor.u32 %v2499, 2147483648
    %v2517 = vmul.f32 %v2516, 1.442695
    %v2518 = vpow.pop %v2517
    %v2519 = vadd.f32 %v2518, 1.0
    %v2520 = vrcp.pop %v2519
    %v2521 = vmul.f32 1.0, %v2520
    %v2522 = vmul.f32 %v2514, %v1871
    %v2523 = vmul.f32 %v2508, %v2515
    %v2524 = vadd.f32 %v2522, %v2523
    %v2525 = vtanh.pop %v2524
    %v2526 = vmul.f32 %v2521, %v2525
    %v2527 = vpack.c.bf16 %v2526, %v2526
    %s2528 = scalar_lea.vmem [#allocation4], 192
    %v2529 = vld [vmem:[%s2528] sm:$0xf]
    %v2530 = vld [vmem:[%s2528 + $0x4] sm:$0xf]
    %v2531 = vld [vmem:[%s2528 + $0x8] sm:$0xf]
    %v2532 = vld [vmem:[%s2528 + $0xc] sm:$0xf]
    %v2533 = vld [vmem:[%s2528 + $0x10] sm:$0xf]
    %v2534 = vld [vmem:[%s2528 + $0x14] sm:$0xf]
    %v2535 = vld [vmem:[%s2528 + $0x18] sm:$0xf]
    %v2536 = vld [vmem:[%s2528 + $0x1c] sm:$0xf]
    %v2537 = vld [vmem:[%s2528 + $0x20] sm:$0xf]
    %v2538 = vld [vmem:[%s2528 + $0x24] sm:$0xf]
    %v2539 = vld [vmem:[%s2528 + $0x28] sm:$0xf]
    %v2540 = vld [vmem:[%s2528 + $0x2c] sm:$0xf]
    %v2541 = vld [vmem:[%s2528 + $0x30] sm:$0xf]
    %v2542 = vld [vmem:[%s2528 + $0x34] sm:$0xf]
    %v2543 = vld [vmem:[%s2528 + $0x38] sm:$0xf]
    %v2544 = vld [vmem:[%s2528 + $0x3c] sm:$0xf]
    %v2561 = vunpack.c.l.b16 %v2529
    %v2562 = vunpack.c.l.b16 %v2530
    %v2563 = vunpack.c.l.b16 %v2531
    %v2564 = vunpack.c.l.b16 %v2532
    %v2565 = vunpack.c.l.b16 %v2533
    %v2566 = vunpack.c.l.b16 %v2534
    %v2567 = vunpack.c.l.b16 %v2535
    %v2568 = vunpack.c.l.b16 %v2536
    %v2569 = vunpack.c.l.b16 %v2537
    %v2570 = vunpack.c.l.b16 %v2538
    %v2571 = vunpack.c.l.b16 %v2539
    %v2572 = vunpack.c.l.b16 %v2540
    %v2573 = vunpack.c.l.b16 %v2541
    %v2574 = vunpack.c.l.b16 %v2542
    %v2575 = vunpack.c.l.b16 %v2543
    %v2576 = vunpack.c.l.b16 %v2544
    %v2577 = vpack.c.b16 %v2562, %v2561
    %v2578 = vpack.c.b16 %v2564, %v2563
    %v2579 = vpack.c.b16 %v2566, %v2565
    %v2580 = vpack.c.b16 %v2568, %v2567
    %v2581 = vpack.c.b16 %v2570, %v2569
    %v2582 = vpack.c.b16 %v2572, %v2571
    %v2583 = vpack.c.b16 %v2574, %v2573
    %v2584 = vpack.c.b16 %v2576, %v2575
    %2593 = vmatprep.subr.bf16.mxu0 0
    %2594 = vmatpush1.bf16.msra.mxu0 %v2577
    %2595 = vmatprep.subr.bf16.mxu0 0
    %2596 = vmatpush1.bf16.msra.mxu0 %v2578
    %2597 = vmatprep.subr.bf16.mxu0 0
    %2598 = vmatpush1.bf16.msra.mxu0 %v2579
    %2599 = vmatprep.subr.bf16.mxu0 0
    %2600 = vmatpush1.bf16.msra.mxu0 %v2580
    %2601 = vmatprep.subr.bf16.mxu0 0
    %2602 = vmatpush1.bf16.msra.mxu0 %v2581
    %2603 = vmatprep.subr.bf16.mxu0 0
    %2604 = vmatpush1.bf16.msra.mxu0 %v2582
    %2605 = vmatprep.subr.bf16.mxu0 0
    %2606 = vmatpush1.bf16.msra.mxu0 %v2583
    %2607 = vmatprep.subr.bf16.mxu0 0
    %2608 = vmatpush1.bf16.msra.mxu0 %v2584
    %2609 = vmatprep.subr.bf16.mxu0 0
    %2610 = vmatpush1.bf16.msra.mxu0 0
    %2611 = vmatprep.subr.bf16.mxu0 0
    %2612 = vmatpush1.bf16.msra.mxu0 0
    %2613 = vmatprep.subr.bf16.mxu0 0
    %2614 = vmatpush1.bf16.msra.mxu0 0
    %2615 = vmatprep.subr.bf16.mxu0 0
    %2616 = vmatpush1.bf16.msra.mxu0 0
    %2617 = vmatprep.subr.bf16.mxu0 0
    %2618 = vmatpush1.bf16.msra.mxu0 0
    %2619 = vmatprep.subr.bf16.mxu0 0
    %2620 = vmatpush1.bf16.msra.mxu0 0
    %2621 = vmatprep.subr.bf16.mxu0 0
    %2622 = vmatpush1.bf16.msra.mxu0 0
    %2623 = vmatprep.subr.bf16.mxu0 0
    %2624 = vmatpush1.bf16.msra.mxu0 0
    %2625 = vmatprep.mubr.bf16.mxu0 0
    %2626 = vmatmul.mubr.bf16.gmra.mrb[0].mxu0 %v2527
    %v2627 = vpop.f32.mrb[0].mxu0
    %v2628 = vadd.f32 0.0, %v2627
    %v2629 = vpop.f32.mrb[0].mxu0
    %v2630 = vpop.f32.mrb[0].mxu0
    %v2631 = vpop.f32.mrb[0].mxu0
    %2632 = vdwg.mxu0
    %vm2633 = vcmp.lt.s32.totalorder %v75, 2
    %v2634 = vsel %vm2633, %v2628, -1e+30
    %2635 = vmax.xlane.f32.xlu0 %v2634
    %v2636 = vpop.xlane.xlu0 %2635
    %v2637 = vsub.f32 %v2634, %v2636
    %v2638 = vmul.f32 %v2637, 1.442695
    %v2639 = vpow.pop %v2638
    %2640 = vadd.xlane.f32.xlu0 %v2639
    %v2641 = vpop.xlane.xlu0 %2640
    %v2642 = vlog2.pop %v2641
    %v2643 = vmul.f32 %v2642, 0.6931472
    %v2644 = vsub.f32 %v2637, %v2643
    %v2645 = vrcp.pop %v2641
    %v2646 = vmul.f32 %v2639, %v2645
    %v2647 = vmul.f32 %v2646, %v2644
    %v2648 = vsel %vm2633, %v2647, 0.0
    %2649 = vadd.xlane.f32.xlu0 %v2648
    %v2650 = vpop.xlane.xlu0 %2649
    %v2651 = vsub.f32 0.0, %v2650
    %s2652 = scalar_lea.vmem [#allocation7], 24
    %v2653 = vld [vmem:[%s2652] sm:$0xff]
    %v2654 = vadd.f32 %v2634, %v2653
    %2655 = vmax.xlane.f32.xlu0 %v2654
    %v2656 = vpop.xlane.xlu0 %2655
    %vm2657 = vcmp.eq.f32.partialorder %v2654, %v2656
    %v2658 = vsel %vm2657, %v75, 128
    %v2659 = vand.u32 %v2658, 65535
    %v2660 = vshra.s32 %v2658, 16
    %v2661 = vcvt.s32.f32 %v2659
    %v2662 = vcvt.s32.f32 %v2660
    %2663 = vmin.xlane.f32.xlu0 %v2662
    %v2664 = vpop.xlane.xlu0 %2663
    %vm2665 = vcmp.eq.f32.partialorder %v2662, %v2664
    %v2666 = vsel %vm2665, %v2661, inf
    %2667 = vmin.xlane.f32.xlu0 %v2666
    %v2668 = vpop.xlane.xlu0 %2667
    %v2669 = vcvt.f32.s32 %v2668
    %v2670 = vcvt.f32.s32 %v2664
    %v2671 = vshll.u32 %v2670, 16
    %v2672 = vadd.s32 %v2671, %v2669
    %vm2673 = vcmp.eq.s32.totalorder %v75, %v2672
    %v2674 = vsel %vm2673, 1, 0
    %v2675 = vcvt.s32.f32 %v2674
    %v2676 = vpack.c.bf16 %v2675, %v2675
    %v2677 = vsel %vm2673, %v2644, 0.0
    %2678 = vadd.xlane.f32.xlu0 %v2677
    %v2679 = vpop.xlane.xlu0 %2678
    %s2680 = scalar_lea.vmem %s4, 24
    %2681 = vst.msk [vmem:[%s2680] sm:$0xff] %vm721, %v2672
    %s2682 = scalar_lea.vmem %s5, 24
    %2683 = vst.msk [vmem:[%s2682] sm:$0xff] %vm721, %v2679
    %s2684 = scalar_lea.vmem %s6, 24
    %2685 = vst.msk [vmem:[%s2684] sm:$0xff] %vm721, %v2651
    %s2686 = scalar_lea.vmem [#allocation2], 2048
    %v2687 = vld [vmem:[%s2686] sm:$0xff]
    %v2688 = vld [vmem:[%s2686 + $0x8] sm:$0xff]
    %v2689 = vld [vmem:[%s2686 + $0x10] sm:$0xff]
    %v2690 = vld [vmem:[%s2686 + $0x18] sm:$0xff]
    %v2691 = vld [vmem:[%s2686 + $0x20] sm:$0xff]
    %v2692 = vld [vmem:[%s2686 + $0x28] sm:$0xff]
    %v2693 = vld [vmem:[%s2686 + $0x30] sm:$0xff]
    %v2694 = vld [vmem:[%s2686 + $0x38] sm:$0xff]
    %v2695 = vld [vmem:[%s2686 + $0x40] sm:$0xff]
    %v2696 = vld [vmem:[%s2686 + $0x48] sm:$0xff]
    %v2697 = vld [vmem:[%s2686 + $0x50] sm:$0xff]
    %v2698 = vld [vmem:[%s2686 + $0x58] sm:$0xff]
    %v2699 = vld [vmem:[%s2686 + $0x60] sm:$0xff]
    %v2700 = vld [vmem:[%s2686 + $0x68] sm:$0xff]
    %v2701 = vld [vmem:[%s2686 + $0x70] sm:$0xff]
    %v2702 = vld [vmem:[%s2686 + $0x78] sm:$0xff]
    %v2703 = vld [vmem:[%s2686 + $0x80] sm:$0xff]
    %v2704 = vld [vmem:[%s2686 + $0x88] sm:$0xff]
    %v2705 = vld [vmem:[%s2686 + $0x90] sm:$0xff]
    %v2706 = vld [vmem:[%s2686 + $0x98] sm:$0xff]
    %v2707 = vld [vmem:[%s2686 + $0xa0] sm:$0xff]
    %v2708 = vld [vmem:[%s2686 + $0xa8] sm:$0xff]
    %v2709 = vld [vmem:[%s2686 + $0xb0] sm:$0xff]
    %v2710 = vld [vmem:[%s2686 + $0xb8] sm:$0xff]
    %v2711 = vld [vmem:[%s2686 + $0xc0] sm:$0xff]
    %v2712 = vld [vmem:[%s2686 + $0xc8] sm:$0xff]
    %v2713 = vld [vmem:[%s2686 + $0xd0] sm:$0xff]
    %v2714 = vld [vmem:[%s2686 + $0xd8] sm:$0xff]
    %v2715 = vld [vmem:[%s2686 + $0xe0] sm:$0xff]
    %v2716 = vld [vmem:[%s2686 + $0xe8] sm:$0xff]
    %v2717 = vld [vmem:[%s2686 + $0xf0] sm:$0xff]
    %v2718 = vld [vmem:[%s2686 + $0xf8] sm:$0xff]
    %v2719 = vld [vmem:[%s2686 + $0x100] sm:$0xff]
    %v2720 = vld [vmem:[%s2686 + $0x108] sm:$0xff]
    %v2721 = vld [vmem:[%s2686 + $0x110] sm:$0xff]
    %v2722 = vld [vmem:[%s2686 + $0x118] sm:$0xff]
    %v2723 = vld [vmem:[%s2686 + $0x120] sm:$0xff]
    %v2724 = vld [vmem:[%s2686 + $0x128] sm:$0xff]
    %v2725 = vld [vmem:[%s2686 + $0x130] sm:$0xff]
    %v2726 = vld [vmem:[%s2686 + $0x138] sm:$0xff]
    %v2727 = vld [vmem:[%s2686 + $0x140] sm:$0xff]
    %v2728 = vld [vmem:[%s2686 + $0x148] sm:$0xff]
    %v2729 = vld [vmem:[%s2686 + $0x150] sm:$0xff]
    %v2730 = vld [vmem:[%s2686 + $0x158] sm:$0xff]
    %v2731 = vld [vmem:[%s2686 + $0x160] sm:$0xff]
    %v2732 = vld [vmem:[%s2686 + $0x168] sm:$0xff]
    %v2733 = vld [vmem:[%s2686 + $0x170] sm:$0xff]
    %v2734 = vld [vmem:[%s2686 + $0x178] sm:$0xff]
    %v2735 = vld [vmem:[%s2686 + $0x180] sm:$0xff]
    %v2736 = vld [vmem:[%s2686 + $0x188] sm:$0xff]
    %v2737 = vld [vmem:[%s2686 + $0x190] sm:$0xff]
    %v2738 = vld [vmem:[%s2686 + $0x198] sm:$0xff]
    %v2739 = vld [vmem:[%s2686 + $0x1a0] sm:$0xff]
    %v2740 = vld [vmem:[%s2686 + $0x1a8] sm:$0xff]
    %v2741 = vld [vmem:[%s2686 + $0x1b0] sm:$0xff]
    %v2742 = vld [vmem:[%s2686 + $0x1b8] sm:$0xff]
    %v2743 = vld [vmem:[%s2686 + $0x1c0] sm:$0xff]
    %v2744 = vld [vmem:[%s2686 + $0x1c8] sm:$0xff]
    %v2745 = vld [vmem:[%s2686 + $0x1d0] sm:$0xff]
    %v2746 = vld [vmem:[%s2686 + $0x1d8] sm:$0xff]
    %v2747 = vld [vmem:[%s2686 + $0x1e0] sm:$0xff]
    %v2748 = vld [vmem:[%s2686 + $0x1e8] sm:$0xff]
    %v2749 = vld [vmem:[%s2686 + $0x1f0] sm:$0xff]
    %v2750 = vld [vmem:[%s2686 + $0x1f8] sm:$0xff]
    %v2751 = vld [vmem:[#allocation6] sm:$0xff]
    %v2752 = vld [vmem:[#allocation6 + $0x8] sm:$0xff]
    %v2753 = vld [vmem:[#allocation6 + $0x10] sm:$0xff]
    %v2754 = vld [vmem:[#allocation6 + $0x18] sm:$0xff]
    %v2819 = vunpack.c.l.b16 %v2687
    %v2820 = vunpack.c.h.b16 %v2687
    %v2821 = vunpack.c.l.b16 %v2688
    %v2822 = vunpack.c.h.b16 %v2688
    %v2823 = vunpack.c.l.b16 %v2689
    %v2824 = vunpack.c.h.b16 %v2689
    %v2825 = vunpack.c.l.b16 %v2690
    %v2826 = vunpack.c.h.b16 %v2690
    %v2827 = vunpack.c.l.b16 %v2691
    %v2828 = vunpack.c.h.b16 %v2691
    %v2829 = vunpack.c.l.b16 %v2692
    %v2830 = vunpack.c.h.b16 %v2692
    %v2831 = vunpack.c.l.b16 %v2693
    %v2832 = vunpack.c.h.b16 %v2693
    %v2833 = vunpack.c.l.b16 %v2694
    %v2834 = vunpack.c.h.b16 %v2694
    %v2835 = vunpack.c.l.b16 %v2695
    %v2836 = vunpack.c.h.b16 %v2695
    %v2837 = vunpack.c.l.b16 %v2696
    %v2838 = vunpack.c.h.b16 %v2696
    %v2839 = vunpack.c.l.b16 %v2697
    %v2840 = vunpack.c.h.b16 %v2697
    %v2841 = vunpack.c.l.b16 %v2698
    %v2842 = vunpack.c.h.b16 %v2698
    %v2843 = vunpack.c.l.b16 %v2699
    %v2844 = vunpack.c.h.b16 %v2699
    %v2845 = vunpack.c.l.b16 %v2700
    %v2846 = vunpack.c.h.b16 %v2700
    %v2847 = vunpack.c.l.b16 %v2701
    %v2848 = vunpack.c.h.b16 %v2701
    %v2849 = vunpack.c.l.b16 %v2702
    %v2850 = vunpack.c.h.b16 %v2702
    %v2851 = vunpack.c.l.b16 %v2703
    %v2852 = vunpack.c.h.b16 %v2703
    %v2853 = vunpack.c.l.b16 %v2704
    %v2854 = vunpack.c.h.b16 %v2704
    %v2855 = vunpack.c.l.b16 %v2705
    %v2856 = vunpack.c.h.b16 %v2705
    %v2857 = vunpack.c.l.b16 %v2706
    %v2858 = vunpack.c.h.b16 %v2706
    %v2859 = vunpack.c.l.b16 %v2707
    %v2860 = vunpack.c.h.b16 %v2707
    %v2861 = vunpack.c.l.b16 %v2708
    %v2862 = vunpack.c.h.b16 %v2708
    %v2863 = vunpack.c.l.b16 %v2709
    %v2864 = vunpack.c.h.b16 %v2709
    %v2865 = vunpack.c.l.b16 %v2710
    %v2866 = vunpack.c.h.b16 %v2710
    %v2867 = vunpack.c.l.b16 %v2711
    %v2868 = vunpack.c.h.b16 %v2711
    %v2869 = vunpack.c.l.b16 %v2712
    %v2870 = vunpack.c.h.b16 %v2712
    %v2871 = vunpack.c.l.b16 %v2713
    %v2872 = vunpack.c.h.b16 %v2713
    %v2873 = vunpack.c.l.b16 %v2714
    %v2874 = vunpack.c.h.b16 %v2714
    %v2875 = vunpack.c.l.b16 %v2715
    %v2876 = vunpack.c.h.b16 %v2715
    %v2877 = vunpack.c.l.b16 %v2716
    %v2878 = vunpack.c.h.b16 %v2716
    %v2879 = vunpack.c.l.b16 %v2717
    %v2880 = vunpack.c.h.b16 %v2717
    %v2881 = vunpack.c.l.b16 %v2718
    %v2882 = vunpack.c.h.b16 %v2718
    %v2883 = vunpack.c.l.b16 %v2719
    %v2884 = vunpack.c.h.b16 %v2719
    %v2885 = vunpack.c.l.b16 %v2720
    %v2886 = vunpack.c.h.b16 %v2720
    %v2887 = vunpack.c.l.b16 %v2721
    %v2888 = vunpack.c.h.b16 %v2721
    %v2889 = vunpack.c.l.b16 %v2722
    %v2890 = vunpack.c.h.b16 %v2722
    %v2891 = vunpack.c.l.b16 %v2723
    %v2892 = vunpack.c.h.b16 %v2723
    %v2893 = vunpack.c.l.b16 %v2724
    %v2894 = vunpack.c.h.b16 %v2724
    %v2895 = vunpack.c.l.b16 %v2725
    %v2896 = vunpack.c.h.b16 %v2725
    %v2897 = vunpack.c.l.b16 %v2726
    %v2898 = vunpack.c.h.b16 %v2726
    %v2899 = vunpack.c.l.b16 %v2727
    %v2900 = vunpack.c.h.b16 %v2727
    %v2901 = vunpack.c.l.b16 %v2728
    %v2902 = vunpack.c.h.b16 %v2728
    %v2903 = vunpack.c.l.b16 %v2729
    %v2904 = vunpack.c.h.b16 %v2729
    %v2905 = vunpack.c.l.b16 %v2730
    %v2906 = vunpack.c.h.b16 %v2730
    %v2907 = vunpack.c.l.b16 %v2731
    %v2908 = vunpack.c.h.b16 %v2731
    %v2909 = vunpack.c.l.b16 %v2732
    %v2910 = vunpack.c.h.b16 %v2732
    %v2911 = vunpack.c.l.b16 %v2733
    %v2912 = vunpack.c.h.b16 %v2733
    %v2913 = vunpack.c.l.b16 %v2734
    %v2914 = vunpack.c.h.b16 %v2734
    %v2915 = vunpack.c.l.b16 %v2735
    %v2916 = vunpack.c.h.b16 %v2735
    %v2917 = vunpack.c.l.b16 %v2736
    %v2918 = vunpack.c.h.b16 %v2736
    %v2919 = vunpack.c.l.b16 %v2737
    %v2920 = vunpack.c.h.b16 %v2737
    %v2921 = vunpack.c.l.b16 %v2738
    %v2922 = vunpack.c.h.b16 %v2738
    %v2923 = vunpack.c.l.b16 %v2739
    %v2924 = vunpack.c.h.b16 %v2739
    %v2925 = vunpack.c.l.b16 %v2740
    %v2926 = vunpack.c.h.b16 %v2740
    %v2927 = vunpack.c.l.b16 %v2741
    %v2928 = vunpack.c.h.b16 %v2741
    %v2929 = vunpack.c.l.b16 %v2742
    %v2930 = vunpack.c.h.b16 %v2742
    %v2931 = vunpack.c.l.b16 %v2743
    %v2932 = vunpack.c.h.b16 %v2743
    %v2933 = vunpack.c.l.b16 %v2744
    %v2934 = vunpack.c.h.b16 %v2744
    %v2935 = vunpack.c.l.b16 %v2745
    %v2936 = vunpack.c.h.b16 %v2745
    %v2937 = vunpack.c.l.b16 %v2746
    %v2938 = vunpack.c.h.b16 %v2746
    %v2939 = vunpack.c.l.b16 %v2747
    %v2940 = vunpack.c.h.b16 %v2747
    %v2941 = vunpack.c.l.b16 %v2748
    %v2942 = vunpack.c.h.b16 %v2748
    %v2943 = vunpack.c.l.b16 %v2749
    %v2944 = vunpack.c.h.b16 %v2749
    %v2945 = vunpack.c.l.b16 %v2750
    %v2946 = vunpack.c.h.b16 %v2750
    %v2947 = vpack.c.b16 %v2823, %v2819
    %v2948 = vpack.c.b16 %v2824, %v2820
    %v2949 = vpack.c.b16 %v2825, %v2821
    %v2950 = vpack.c.b16 %v2826, %v2822
    %v2951 = vpack.c.b16 %v2831, %v2827
    %v2952 = vpack.c.b16 %v2832, %v2828
    %v2953 = vpack.c.b16 %v2833, %v2829
    %v2954 = vpack.c.b16 %v2834, %v2830
    %v2955 = vpack.c.b16 %v2839, %v2835
    %v2956 = vpack.c.b16 %v2840, %v2836
    %v2957 = vpack.c.b16 %v2841, %v2837
    %v2958 = vpack.c.b16 %v2842, %v2838
    %v2959 = vpack.c.b16 %v2847, %v2843
    %v2960 = vpack.c.b16 %v2848, %v2844
    %v2961 = vpack.c.b16 %v2849, %v2845
    %v2962 = vpack.c.b16 %v2850, %v2846
    %v2963 = vpack.c.b16 %v2855, %v2851
    %v2964 = vpack.c.b16 %v2856, %v2852
    %v2965 = vpack.c.b16 %v2857, %v2853
    %v2966 = vpack.c.b16 %v2858, %v2854
    %v2967 = vpack.c.b16 %v2863, %v2859
    %v2968 = vpack.c.b16 %v2864, %v2860
    %v2969 = vpack.c.b16 %v2865, %v2861
    %v2970 = vpack.c.b16 %v2866, %v2862
    %v2971 = vpack.c.b16 %v2871, %v2867
    %v2972 = vpack.c.b16 %v2872, %v2868
    %v2973 = vpack.c.b16 %v2873, %v2869
    %v2974 = vpack.c.b16 %v2874, %v2870
    %v2975 = vpack.c.b16 %v2879, %v2875
    %v2976 = vpack.c.b16 %v2880, %v2876
    %v2977 = vpack.c.b16 %v2881, %v2877
    %v2978 = vpack.c.b16 %v2882, %v2878
    %v2979 = vpack.c.b16 %v2887, %v2883
    %v2980 = vpack.c.b16 %v2888, %v2884
    %v2981 = vpack.c.b16 %v2889, %v2885
    %v2982 = vpack.c.b16 %v2890, %v2886
    %v2983 = vpack.c.b16 %v2895, %v2891
    %v2984 = vpack.c.b16 %v2896, %v2892
    %v2985 = vpack.c.b16 %v2897, %v2893
    %v2986 = vpack.c.b16 %v2898, %v2894
    %v2987 = vpack.c.b16 %v2903, %v2899
    %v2988 = vpack.c.b16 %v2904, %v2900
    %v2989 = vpack.c.b16 %v2905, %v2901
    %v2990 = vpack.c.b16 %v2906, %v2902
    %v2991 = vpack.c.b16 %v2911, %v2907
    %v2992 = vpack.c.b16 %v2912, %v2908
    %v2993 = vpack.c.b16 %v2913, %v2909
    %v2994 = vpack.c.b16 %v2914, %v2910
    %v2995 = vpack.c.b16 %v2919, %v2915
    %v2996 = vpack.c.b16 %v2920, %v2916
    %v2997 = vpack.c.b16 %v2921, %v2917
    %v2998 = vpack.c.b16 %v2922, %v2918
    %v2999 = vpack.c.b16 %v2927, %v2923
    %v3000 = vpack.c.b16 %v2928, %v2924
    %v3001 = vpack.c.b16 %v2929, %v2925
    %v3002 = vpack.c.b16 %v2930, %v2926
    %v3003 = vpack.c.b16 %v2935, %v2931
    %v3004 = vpack.c.b16 %v2936, %v2932
    %v3005 = vpack.c.b16 %v2937, %v2933
    %v3006 = vpack.c.b16 %v2938, %v2934
    %v3007 = vpack.c.b16 %v2943, %v2939
    %v3008 = vpack.c.b16 %v2944, %v2940
    %v3009 = vpack.c.b16 %v2945, %v2941
    %v3010 = vpack.c.b16 %v2946, %v2942
    %3075 = vmatprep.subr.bf16.mxu0 %v2948
    %3076 = vmatpush1.bf16.msra.mxu0 %v2947
    %3077 = vmatprep.subr.bf16.mxu0 %v2952
    %3078 = vmatpush1.bf16.msra.mxu0 %v2951
    %3079 = vmatprep.subr.bf16.mxu0 %v2956
    %3080 = vmatpush1.bf16.msra.mxu0 %v2955
    %3081 = vmatprep.subr.bf16.mxu0 %v2960
    %3082 = vmatpush1.bf16.msra.mxu0 %v2959
    %3083 = vmatprep.subr.bf16.mxu0 %v2964
    %3084 = vmatpush1.bf16.msra.mxu0 %v2963
    %3085 = vmatprep.subr.bf16.mxu0 %v2968
    %3086 = vmatpush1.bf16.msra.mxu0 %v2967
    %3087 = vmatprep.subr.bf16.mxu0 %v2972
    %3088 = vmatpush1.bf16.msra.mxu0 %v2971
    %3089 = vmatprep.subr.bf16.mxu0 %v2976
    %3090 = vmatpush1.bf16.msra.mxu0 %v2975
    %3091 = vmatprep.subr.bf16.mxu0 %v2980
    %3092 = vmatpush1.bf16.msra.mxu0 %v2979
    %3093 = vmatprep.subr.bf16.mxu0 %v2984
    %3094 = vmatpush1.bf16.msra.mxu0 %v2983
    %3095 = vmatprep.subr.bf16.mxu0 %v2988
    %3096 = vmatpush1.bf16.msra.mxu0 %v2987
    %3097 = vmatprep.subr.bf16.mxu0 %v2992
    %3098 = vmatpush1.bf16.msra.mxu0 %v2991
    %3099 = vmatprep.subr.bf16.mxu0 %v2996
    %3100 = vmatpush1.bf16.msra.mxu0 %v2995
    %3101 = vmatprep.subr.bf16.mxu0 %v3000
    %3102 = vmatpush1.bf16.msra.mxu0 %v2999
    %3103 = vmatprep.subr.bf16.mxu0 %v3004
    %3104 = vmatpush1.bf16.msra.mxu0 %v3003
    %3105 = vmatprep.subr.bf16.mxu0 %v3008
    %3106 = vmatpush1.bf16.msra.mxu0 %v3007
    %3107 = vmatprep.mubr.bf16.mxu0 %v2527
    %3108 = vmatmul.mubr.bf16.gmra.mrb[0].mxu0 %v2676
    %v3109 = vpop.f32.mrb[0].mxu0
    %v3110 = vadd.f32 %v2751, %v3109
    %v3111 = vpop.f32.mrb[0].mxu0
    %v3112 = vadd.f32 %v2752, %v3111
    %v3113 = vpop.f32.mrb[0].mxu0
    %v3114 = vpop.f32.mrb[0].mxu0
    %3115 = vdwg.mxu0
    %3116 = vmatprep.subr.bf16.mxu0 %v2950
    %3117 = vmatpush1.bf16.msra.mxu0 %v2949
    %3118 = vmatprep.subr.bf16.mxu0 %v2954
    %3119 = vmatpush1.bf16.msra.mxu0 %v2953
    %3120 = vmatprep.subr.bf16.mxu0 %v2958
    %3121 = vmatpush1.bf16.msra.mxu0 %v2957
    %3122 = vmatprep.subr.bf16.mxu0 %v2962
    %3123 = vmatpush1.bf16.msra.mxu0 %v2961
    %3124 = vmatprep.subr.bf16.mxu0 %v2966
    %3125 = vmatpush1.bf16.msra.mxu0 %v2965
    %3126 = vmatprep.subr.bf16.mxu0 %v2970
    %3127 = vmatpush1.bf16.msra.mxu0 %v2969
    %3128 = vmatprep.subr.bf16.mxu0 %v2974
    %3129 = vmatpush1.bf16.msra.mxu0 %v2973
    %3130 = vmatprep.subr.bf16.mxu0 %v2978
    %3131 = vmatpush1.bf16.msra.mxu0 %v2977
    %3132 = vmatprep.subr.bf16.mxu0 %v2982
    %3133 = vmatpush1.bf16.msra.mxu0 %v2981
    %3134 = vmatprep.subr.bf16.mxu0 %v2986
    %3135 = vmatpush1.bf16.msra.mxu0 %v2985
    %3136 = vmatprep.subr.bf16.mxu0 %v2990
    %3137 = vmatpush1.bf16.msra.mxu0 %v2989
    %3138 = vmatprep.subr.bf16.mxu0 %v2994
    %3139 = vmatpush1.bf16.msra.mxu0 %v2993
    %3140 = vmatprep.subr.bf16.mxu0 %v2998
    %3141 = vmatpush1.bf16.msra.mxu0 %v2997
    %3142 = vmatprep.subr.bf16.mxu0 %v3002
    %3143 = vmatpush1.bf16.msra.mxu0 %v3001
    %3144 = vmatprep.subr.bf16.mxu0 %v3006
    %3145 = vmatpush1.bf16.msra.mxu0 %v3005
    %3146 = vmatprep.subr.bf16.mxu0 %v3010
    %3147 = vmatpush1.bf16.msra.mxu0 %v3009
    %3148 = vmatprep.mubr.bf16.mxu0 %v2527
    %3149 = vmatmul.mubr.bf16.gmra.mrb[0].mxu0 %v2676
    %v3150 = vpop.f32.mrb[0].mxu0
    %v3151 = vadd.f32 %v2753, %v3150
    %v3152 = vpop.f32.mrb[0].mxu0
    %v3153 = vadd.f32 %v2754, %v3152
    %v3154 = vpop.f32.mrb[0].mxu0
    %v3155 = vpop.f32.mrb[0].mxu0
    %3156 = vdwg.mxu0
    %v3157 = vxor.u32 %v3110, 2147483648
    %v3158 = vmul.f32 %v3157, 1.442695
    %v3159 = vpow.pop %v3158
    %v3160 = vadd.f32 %v3159, 1.0
    %v3161 = vrcp.pop %v3160
    %v3162 = vmul.f32 1.0, %v3161
    %v3163 = vxor.u32 %v3112, 2147483648
    %v3164 = vmul.f32 %v3163, 1.442695
    %v3165 = vpow.pop %v3164
    %v3166 = vadd.f32 %v3165, 1.0
    %v3167 = vrcp.pop %v3166
    %v3168 = vmul.f32 1.0, %v3167
    %v3169 = vtanh.pop %v3151
    %v3170 = vxor.u32 %v3153, 2147483648
    %v3171 = vmul.f32 %v3170, 1.442695
    %v3172 = vpow.pop %v3171
    %v3173 = vadd.f32 %v3172, 1.0
    %v3174 = vrcp.pop %v3173
    %v3175 = vmul.f32 1.0, %v3174
    %v3176 = vmul.f32 %v3168, %v2524
    %v3177 = vmul.f32 %v3162, %v3169
    %v3178 = vadd.f32 %v3176, %v3177
    %v3179 = vtanh.pop %v3178
    %v3180 = vmul.f32 %v3175, %v3179
    %v3181 = vpack.c.bf16 %v3180, %v3180
    %s3182 = scalar_lea.vmem [#allocation4], 256
    %v3183 = vld [vmem:[%s3182] sm:$0xf]
    %v3184 = vld [vmem:[%s3182 + $0x4] sm:$0xf]
    %v3185 = vld [vmem:[%s3182 + $0x8] sm:$0xf]
    %v3186 = vld [vmem:[%s3182 + $0xc] sm:$0xf]
    %v3187 = vld [vmem:[%s3182 + $0x10] sm:$0xf]
    %v3188 = vld [vmem:[%s3182 + $0x14] sm:$0xf]
    %v3189 = vld [vmem:[%s3182 + $0x18] sm:$0xf]
    %v3190 = vld [vmem:[%s3182 + $0x1c] sm:$0xf]
    %v3191 = vld [vmem:[%s3182 + $0x20] sm:$0xf]
    %v3192 = vld [vmem:[%s3182 + $0x24] sm:$0xf]
    %v3193 = vld [vmem:[%s3182 + $0x28] sm:$0xf]
    %v3194 = vld [vmem:[%s3182 + $0x2c] sm:$0xf]
    %v3195 = vld [vmem:[%s3182 + $0x30] sm:$0xf]
    %v3196 = vld [vmem:[%s3182 + $0x34] sm:$0xf]
    %v3197 = vld [vmem:[%s3182 + $0x38] sm:$0xf]
    %v3198 = vld [vmem:[%s3182 + $0x3c] sm:$0xf]
    %v3215 = vunpack.c.l.b16 %v3183
    %v3216 = vunpack.c.l.b16 %v3184
    %v3217 = vunpack.c.l.b16 %v3185
    %v3218 = vunpack.c.l.b16 %v3186
    %v3219 = vunpack.c.l.b16 %v3187
    %v3220 = vunpack.c.l.b16 %v3188
    %v3221 = vunpack.c.l.b16 %v3189
    %v3222 = vunpack.c.l.b16 %v3190
    %v3223 = vunpack.c.l.b16 %v3191
    %v3224 = vunpack.c.l.b16 %v3192
    %v3225 = vunpack.c.l.b16 %v3193
    %v3226 = vunpack.c.l.b16 %v3194
    %v3227 = vunpack.c.l.b16 %v3195
    %v3228 = vunpack.c.l.b16 %v3196
    %v3229 = vunpack.c.l.b16 %v3197
    %v3230 = vunpack.c.l.b16 %v3198
    %v3231 = vpack.c.b16 %v3216, %v3215
    %v3232 = vpack.c.b16 %v3218, %v3217
    %v3233 = vpack.c.b16 %v3220, %v3219
    %v3234 = vpack.c.b16 %v3222, %v3221
    %v3235 = vpack.c.b16 %v3224, %v3223
    %v3236 = vpack.c.b16 %v3226, %v3225
    %v3237 = vpack.c.b16 %v3228, %v3227
    %v3238 = vpack.c.b16 %v3230, %v3229
    %3247 = vmatprep.subr.bf16.mxu0 0
    %3248 = vmatpush1.bf16.msra.mxu0 %v3231
    %3249 = vmatprep.subr.bf16.mxu0 0
    %3250 = vmatpush1.bf16.msra.mxu0 %v3232
    %3251 = vmatprep.subr.bf16.mxu0 0
    %3252 = vmatpush1.bf16.msra.mxu0 %v3233
    %3253 = vmatprep.subr.bf16.mxu0 0
    %3254 = vmatpush1.bf16.msra.mxu0 %v3234
    %3255 = vmatprep.subr.bf16.mxu0 0
    %3256 = vmatpush1.bf16.msra.mxu0 %v3235
    %3257 = vmatprep.subr.bf16.mxu0 0
    %3258 = vmatpush1.bf16.msra.mxu0 %v3236
    %3259 = vmatprep.subr.bf16.mxu0 0
    %3260 = vmatpush1.bf16.msra.mxu0 %v3237
    %3261 = vmatprep.subr.bf16.mxu0 0
    %3262 = vmatpush1.bf16.msra.mxu0 %v3238
    %3263 = vmatprep.subr.bf16.mxu0 0
    %3264 = vmatpush1.bf16.msra.mxu0 0
    %3265 = vmatprep.subr.bf16.mxu0 0
    %3266 = vmatpush1.bf16.msra.mxu0 0
    %3267 = vmatprep.subr.bf16.mxu0 0
    %3268 = vmatpush1.bf16.msra.mxu0 0
    %3269 = vmatprep.subr.bf16.mxu0 0
    %3270 = vmatpush1.bf16.msra.mxu0 0
    %3271 = vmatprep.subr.bf16.mxu0 0
    %3272 = vmatpush1.bf16.msra.mxu0 0
    %3273 = vmatprep.subr.bf16.mxu0 0
    %3274 = vmatpush1.bf16.msra.mxu0 0
    %3275 = vmatprep.subr.bf16.mxu0 0
    %3276 = vmatpush1.bf16.msra.mxu0 0
    %3277 = vmatprep.subr.bf16.mxu0 0
    %3278 = vmatpush1.bf16.msra.mxu0 0
    %3279 = vmatprep.mubr.bf16.mxu0 0
    %3280 = vmatmul.mubr.bf16.gmra.mrb[0].mxu0 %v3181
    %v3281 = vpop.f32.mrb[0].mxu0
    %v3282 = vadd.f32 0.0, %v3281
    %v3283 = vpop.f32.mrb[0].mxu0
    %v3284 = vpop.f32.mrb[0].mxu0
    %v3285 = vpop.f32.mrb[0].mxu0
    %3286 = vdwg.mxu0
    %v3287 = vsel %vm675, %v3282, -1e+30
    %3288 = vmax.xlane.f32.xlu0 %v3287
    %v3289 = vpop.xlane.xlu0 %3288
    %v3290 = vsub.f32 %v3287, %v3289
    %v3291 = vmul.f32 %v3290, 1.442695
    %v3292 = vpow.pop %v3291
    %3293 = vadd.xlane.f32.xlu0 %v3292
    %v3294 = vpop.xlane.xlu0 %3293
    %v3295 = vlog2.pop %v3294
    %v3296 = vmul.f32 %v3295, 0.6931472
    %v3297 = vsub.f32 %v3290, %v3296
    %v3298 = vrcp.pop %v3294
    %v3299 = vmul.f32 %v3292, %v3298
    %v3300 = vmul.f32 %v3299, %v3297
    %v3301 = vsel %vm675, %v3300, 0.0
    %3302 = vadd.xlane.f32.xlu0 %v3301
    %v3303 = vpop.xlane.xlu0 %3302
    %v3304 = vsub.f32 0.0, %v3303
    %s3305 = scalar_lea.vmem [#allocation7], 32
    %v3306 = vld [vmem:[%s3305] sm:$0xff]
    %v3307 = vadd.f32 %v3287, %v3306
    %3308 = vmax.xlane.f32.xlu0 %v3307
    %v3309 = vpop.xlane.xlu0 %3308
    %vm3310 = vcmp.eq.f32.partialorder %v3307, %v3309
    %v3311 = vsel %vm3310, %v75, 128
    %v3312 = vand.u32 %v3311, 65535
    %v3313 = vshra.s32 %v3311, 16
    %v3314 = vcvt.s32.f32 %v3312
    %v3315 = vcvt.s32.f32 %v3313
    %3316 = vmin.xlane.f32.xlu0 %v3315
    %v3317 = vpop.xlane.xlu0 %3316
    %vm3318 = vcmp.eq.f32.partialorder %v3315, %v3317
    %v3319 = vsel %vm3318, %v3314, inf
    %3320 = vmin.xlane.f32.xlu0 %v3319
    %v3321 = vpop.xlane.xlu0 %3320
    %v3322 = vcvt.f32.s32 %v3321
    %v3323 = vcvt.f32.s32 %v3317
    %v3324 = vshll.u32 %v3323, 16
    %v3325 = vadd.s32 %v3324, %v3322
    %vm3326 = vcmp.eq.s32.totalorder %v75, %v3325
    %v3327 = vsel %vm3326, %v3297, 0.0
    %3328 = vadd.xlane.f32.xlu0 %v3327
    %v3329 = vpop.xlane.xlu0 %3328
    %s3330 = scalar_lea.vmem %s4, 32
    %3331 = vst.msk [vmem:[%s3330] sm:$0xff] %vm721, %v3325
    %s3332 = scalar_lea.vmem %s5, 32
    %3333 = vst.msk [vmem:[%s3332] sm:$0xff] %vm721, %v3329
    %s3334 = scalar_lea.vmem %s6, 32
    %3335 = vst.msk [vmem:[%s3334] sm:$0xff] %vm721, %v3304
    // Predicated region
    $region34: #{_forward_impl.1} parent=1 // pred_check
      _
    $region35: #{_forward_impl.1} parent=1 // pred_check_branch
      %3337 = sbr.rel (0) target = $region37
    $region36: #{_forward_impl.1} parent=1 // pred_region
      _
    $region37: #{_forward_impl.1} parent=1 // pred_fallthru
      _
    // Predicated region
    $region38: #{_forward_impl.1} parent=1 // pred_check
      _
    $region39: #{_forward_impl.1} parent=1 // pred_check_branch
      %3339 = sbr.rel (0) target = $region41
    $region40: #{_forward_impl.1} parent=1 // pred_region
      _
    $region41: #{_forward_impl.1} parent=1 // pred_fallthru
      _
    // Predicated region
    $region42: #{_forward_impl.1} parent=1 // pred_check
      _
    $region43: #{_forward_impl.1} parent=1 // pred_check_branch
      %3341 = sbr.rel (0) target = $region45
    $region44: #{_forward_impl.1} parent=1 // pred_region
      _
    $region45: #{_forward_impl.1} parent=1 // pred_fallthru
      _
    // Predicated region
    $region46: #{_forward_impl.1} parent=1 // pred_check
      _
    $region47: #{_forward_impl.1} parent=1 // pred_check_branch
      %3343 = sbr.rel (0) target = $region49
    $region48: #{_forward_impl.1} parent=1 // pred_region
      _
    $region49: #{_forward_impl.1} parent=1 // pred_fallthru
      _
    // Predicated region
    $region50: #{_forward_impl.1} parent=1 // pred_check
      _
    $region51: #{_forward_impl.1} parent=1 // pred_check_branch
      %3345 = sbr.rel (0) target = $region53
    $region52: #{_forward_impl.1} parent=1 // pred_region
      _
    $region53: #{_forward_impl.1} parent=1 // pred_fallthru
      _
    // Predicated region
    $region54: #{_forward_impl.1} parent=1 // pred_check
      _
    $region55: #{_forward_impl.1} parent=1 // pred_check_branch
      %3347 = sbr.rel (0) target = $region57
    $region56: #{_forward_impl.1} parent=1 // pred_region
      _
    $region57: #{_forward_impl.1} parent=1 // pred_fallthru
      _
    %3348 = vsyncpa [#allocation3], 1
    %3349 = vsyncpa [#allocation5], 1
    %3350 = vsyncpa [#allocation8], 1

</llo_original>
